<compile_context>
chip_gen: v7x
topology: tpu7x:2x2x1
jax: 0.10.0
libtpu: 0.0.40
codegen_flags: <defaults>
</compile_context>

<pallas_src>
import functools

import jax
import jax.numpy as jnp
from jax.experimental import pallas as pl
from jax.experimental.pallas import tpu as pltpu


# ----------------------------------------------------------------------------
# Pallas kernel: K folded into the block -> per lane sub-chunk: K back-to-back
# matmul pairs, running max over neighbours, folded bias+BN, ReLU.
# ----------------------------------------------------------------------------
def _conv_kernel(f_ref, r_ref, wf_ref, wp_ref, scale_ref, shift_ref, out_ref,
                 *, lane_chunk):
    # f_ref : (K, I, TN) bf16   gathered neighbour features
    # r_ref : (K, D, TN) bf16   gathered relative coords (p_k - support), f32-formed
    # wf_ref: (O, I) bf16, wp_ref: (O, D) bf16   split weight matrix
    # scale_ref / shift_ref: (O, 1) f32   folded conv-bias + BatchNorm (eval)
    # out_ref: (O, TN)
    K = f_ref.shape[0]
    TN = out_ref.shape[-1]
    wf = wf_ref[...]
    wp = wp_ref[...]
    scale = scale_ref[...]
    shift = shift_ref[...]

    # Static sub-chunking over lanes bounds the running max + incoming matmul
    # result to a handful of f32 vregs each -> no spills for wide O.
    for c0 in range(0, TN, lane_chunk):            # static Python loop
        cw = min(lane_chunk, TN - c0)
        cols = pl.ds(c0, cw)                       # static slice -> free view

        def neighbour(k):
            # Two small dots (feat part + rel part): a packed single dot would
            # require an extra HBM concat of the gathered tensor (costs more
            # than the merged weight push saves on this HBM-bound kernel).
            return (jnp.dot(wf, f_ref[k, :, cols],
                            preferred_element_type=jnp.float32)
                    + jnp.dot(wp, r_ref[k, :, cols],
                              preferred_element_type=jnp.float32))

        m = neighbour(0)
        for k in range(1, K):                      # K is small & static
            m = jnp.maximum(m, neighbour(k))

        z = m * scale + shift                      # bias + BatchNorm (eval)
        out_ref[:, cols] = jnp.maximum(z, 0.0).astype(out_ref.dtype)   # ReLU


# ----------------------------------------------------------------------------
# Tiling helpers
# ----------------------------------------------------------------------------
def _round_up(x, m):
    return -(-x // m) * m


def _vmem_capacity_bytes():
    try:
        return int(pltpu.get_tpu_info().vmem_capacity_bytes)
    except Exception:
        return 64 * 1024 * 1024        # conservative fallback: v7x per-TC VMEM


def _pick_tile_n(n, batch, k, ci, cd, co, out_itemsize, vmem_bytes,
                 max_tile=1024):
    """Lane-dense, VMEM-budget / megacore aware point tile (multiple of 128)."""
    tile = min(max_tile, _round_up(n, 128))
    # v7x has 2 TensorCores per chip: a B == 1 call must still yield >= 2
    # parallel grid tiles (no effect on single-TC v5e/v6e).
    if batch == 1 and tile >= n and n > 128:
        tile = _round_up(pl.cdiv(n, 2), 128)
    # double-buffered per-block footprint, including sublane padding
    i_pad = _round_up(ci, 16)          # bf16 sublane tile = 16
    d_pad = _round_up(cd, 16)
    o_pad = _round_up(co, 8)

    def block_bytes(t):
        return 2 * k * (i_pad + d_pad) * t * 2 + 2 * o_pad * t * out_itemsize

    budget = vmem_bytes // 2           # headroom for weights/params/compiler
    while tile > 128 and block_bytes(tile) > budget:
        tile -= 128
    return tile


def point_conv_pallas(feats_g, rel_g, wf, wp, scale, shift, *,
                      tile_n=None, out_dtype=jnp.float32):
    """feats_g:(B,K,I,N) bf16, rel_g:(B,K,D,N) bf16, wf:(O,I) bf16,
       wp:(O,D) bf16, scale/shift:(O,1) f32 -> (B,O,N) out_dtype."""
    B, K, I, N = feats_g.shape
    D = rel_g.shape[2]
    O = wf.shape[0]

    vmem_bytes = _vmem_capacity_bytes()
    out_itemsize = jnp.dtype(out_dtype).itemsize
    if tile_n is None:
        tile_n = _pick_tile_n(N, B, K, I, D, O, out_itemsize, vmem_bytes)
    tile_n = max(128, min(_round_up(tile_n, 128), _round_up(N, 128)))

    # lane sub-chunk keeping the running max at <= ~8K f32 elements
    lane_chunk = min(tile_n, max(128, (8192 // max(O, 1)) // 128 * 128))

    # Partial last tile is fine: every output column depends only on its own
    # input columns, so the padded region is garbage-in/garbage-out and the
    # write-back is masked.
    grid = (B, pl.cdiv(N, tile_n))
    param_spec = pl.BlockSpec((O, 1), lambda b, n: (0, 0))

    return pl.pallas_call(
        functools.partial(_conv_kernel, lane_chunk=lane_chunk),
        out_shape=jax.ShapeDtypeStruct((B, O, N), out_dtype),
        grid_spec=pltpu.PrefetchScalarGridSpec(
            num_scalar_prefetch=0,
            grid=grid,
            in_specs=[
                pl.BlockSpec((None, K, I, tile_n), lambda b, n: (b, 0, 0, n)),
                pl.BlockSpec((None, K, D, tile_n), lambda b, n: (b, 0, 0, n)),
                pl.BlockSpec((O, I), lambda b, n: (0, 0)),     # wf
                pl.BlockSpec((O, D), lambda b, n: (0, 0)),     # wp
                param_spec,                                    # scale
                param_spec,                                    # shift
            ],
            out_specs=pl.BlockSpec((None, O, tile_n), lambda b, n: (b, 0, n)),
        ),
        compiler_params=pltpu.CompilerParams(
            dimension_semantics=("parallel", "parallel"),
            vmem_limit_bytes=int(0.9 * vmem_bytes)),
    )(feats_g, rel_g, wf, wp, scale, shift)


# ----------------------------------------------------------------------------
# Plain-JAX glue: search (blocked kNN) and neighbour gather (kernel layout)
# ----------------------------------------------------------------------------
def knn_search(points, k, *, query_block=1024):
    """support_points = points; indices (B, N, K) of k nearest neighbours.

    Matmul-form distances, processed in query blocks, so the full (B, N, N)
    score matrix (let alone the old (B, D, N, N) broadcast) is never
    materialised for large N.
    """
    # TODO(synk): replace with a fully fused Pallas kNN (blocked distances +
    # in-kernel running top-k); for N >= 4k the search, not the conv kernel,
    # dominates end-to-end HBM traffic.
    support = points                                      # (B, D, N)
    src_sq = jnp.sum(points * points, axis=1)             # (B, N)

    def one_block(q_blk):                                 # (B, D, QB)
        # score = -||q - s||^2 + ||q||^2 = 2 q.s - ||s||^2  (same ordering)
        scores = (2.0 * jnp.einsum("bdq,bdn->bqn", q_blk, points)
                  - src_sq[:, None, :])
        _, idx = jax.lax.top_k(scores, k)                 # (B, QB, k)
        return idx.astype(jnp.int32)

    B, D, N = points.shape
    if N <= query_block:
        return one_block(points), support

    nb = pl.cdiv(N, query_block)
    pad = nb * query_block - N
    q = jnp.pad(points, ((0, 0), (0, 0), (0, pad)))
    q = q.reshape(B, D, nb, query_block).transpose(2, 0, 1, 3)    # (nb,B,D,QB)
    idx = jax.lax.map(one_block, q)                               # (nb,B,QB,k)
    idx = idx.transpose(1, 0, 2, 3).reshape(B, nb * query_block, k)[:, :N]
    return idx, support


def gather_neighbors(x, indices):
    """x: (B, C, N), indices: (B, N, K) -> (B, K, C, N) with
       out[b, k, c, n] = x[b, c, indices[b, n, k]] (kernel-native layout,
       no full-size transpose)."""
    idx = jnp.transpose(indices, (0, 2, 1))               # (B, K, N)
    return jnp.take_along_axis(x[:, None, :, :],          # (B, 1, C, N)
                               idx[:, :, None, :],        # (B, K, 1, N)
                               axis=3)                    # (B, K, C, N)


def conv_forward(inp, points, params, support_points=None, indices=None,
                 k=16, tile_n=None, out_dtype=None):
    """Forward pass of the meta Conv layer (bn_activation_order='bn_act').
    NOTE: assumes `indices` always holds K valid neighbour ids (true for this
    kNN search); padded/invalid neighbours would need masking before the max."""
    if indices is None:
        indices, support_points = knn_search(points, k)
    if inp is None:
        return None, support_points, indices

    I = inp.shape[1]
    out_dtype = inp.dtype if out_dtype is None else out_dtype

    # Gathered neighbour features in bf16: halves the dominant HBM stream of
    # this memory-bound kernel; accumulation & epilogue stay f32 in-kernel.
    feats_g = gather_neighbors(inp.astype(jnp.bfloat16), indices)     # (B,K,I,N)

    # Relative coordinates are formed in f32 (kNN neighbours are spatially
    # close to the support point, so rounding the *absolute* coordinates to
    # bf16 first would destroy most of the small difference), then cast to
    # bf16 for the MXU.  This also removes the support input and the per-k
    # subtract from the kernel.
    pts_g = gather_neighbors(points.astype(jnp.float32), indices)     # (B,K,D,N)
    rel_g = (pts_g - support_points[:, None, :, :].astype(jnp.float32)
             ).astype(jnp.bfloat16)                                   # (B,K,D,N)
    # TODO(synk): for wide layers (C >= ~256) gather neighbour rows by DMA
    # inside the kernel instead of materialising (B, K, C, N) in HBM; with
    # C ~ 16 the rows are too small for efficient DMA and TPUs have no
    # vector-indexed VMEM loads, so the XLA gather is kept here.

    # Fold conv bias + BatchNorm1d (eval mode) into a single scale/shift pair
    # applied AFTER the max over K (folding scale into w would be invalid).
    eps = 1e-5
    scale = params["gamma"] * jax.lax.rsqrt(params["var"] + eps)      # (O, 1)
    shift = (params["b"] - params["mean"]) * scale + params["beta"]   # (O, 1)

    wf = params["w"][:, :I].astype(jnp.bfloat16)                      # (O, I)
    wp = params["w"][:, I:].astype(jnp.bfloat16)                      # (O, D)
    # TODO(synk): on v7x the feature stream could additionally be cast to fp8
    # (e4m3, per-channel scales folded into wf); v5e/v6e MXUs have no fp8.

    features = point_conv_pallas(
        feats_g, rel_g, wf, wp,
        scale.astype(jnp.float32), shift.astype(jnp.float32),
        tile_n=tile_n, out_dtype=out_dtype)
    return features, support_points, indices


# ----------------------------------------------------------------------------
# Pure-JAX reference (torch-style gather order) for a silent correctness check
# ----------------------------------------------------------------------------
def _reference_forward(feats_in, points, support, indices, params,
                       out_dtype=jnp.float32):
    I = feats_in.shape[1]

    def gather_cnk(x, idx):                    # mirrors torch batched_index_select
        B, C, N = x.shape
        _, Ns, K = idx.shape
        flat = jnp.broadcast_to(idx.reshape(B, 1, Ns * K), (B, C, Ns * K))
        return jnp.take_along_axis(x, flat, axis=2).reshape(B, C, Ns, K)

    fg = gather_cnk(feats_in.astype(jnp.bfloat16), indices)           # (B,I,N,K)
    pg = gather_cnk(points.astype(jnp.float32), indices)              # (B,D,N,K)
    rel = (pg - support.astype(jnp.float32)[:, :, :, None]).astype(jnp.bfloat16)
    wf = params["w"][:, :I].astype(jnp.bfloat16)
    wp = params["w"][:, I:].astype(jnp.bfloat16)
    y = (jnp.einsum("oi,bink->bonk", wf, fg, preferred_element_type=jnp.float32)
         + jnp.einsum("od,bdnk->bonk", wp, rel,
                      preferred_element_type=jnp.float32))
    y = jnp.max(y, axis=-1)                    # (B, O, N)
    scale = params["gamma"] * jax.lax.rsqrt(params["var"] + 1e-5)
    shift = (params["b"] - params["mean"]) * scale + params["beta"]
    return jnp.maximum(y * scale[None] + shift[None], 0.0).astype(out_dtype)


if __name__ == "__main__":
    B, D, I, O, N, K = 2, 3, 13, 16, 1200, 8
    C = I + D

    key = jax.random.PRNGKey(0)
    k1, k2, k3, k4, k5, k6, k7 = jax.random.split(key, 7)

    points = jax.random.normal(k1, (B, D, N), dtype=jnp.float32)
    feats_in = jax.random.normal(k2, (B, I, N), dtype=jnp.float32)

    params = {
        "w": 0.1 * jax.random.normal(k3, (O, C), dtype=jnp.float32),
        "b": 0.05 * jax.random.normal(k4, (O, 1), dtype=jnp.float32),
        "gamma": 1.0 + 0.1 * jax.random.normal(k5, (O, 1), dtype=jnp.float32),
        "beta": 0.1 * jax.random.normal(k6, (O, 1), dtype=jnp.float32),
        "mean": 0.1 * jax.random.normal(k7, (O, 1), dtype=jnp.float32),
        "var": 0.9 * jnp.ones((O, 1), dtype=jnp.float32),
    }

    # N = 1200 exercises: blocked kNN (2 query blocks), pl.cdiv grid with a
    # partial last point tile (auto tile_n = 1024), and the in-kernel 512-lane
    # sub-chunked K-max loop.
    fwd = jax.jit(functools.partial(conv_forward, k=K))
    features, support_points, indices = fwd(feats_in, points, params)
    features = jax.block_until_ready(features)

    assert features.shape == (B, O, N), features.shape
    assert support_points.shape == (B, D, N), support_points.shape
    assert indices.shape == (B, N, K), indices.shape
    assert bool(jnp.all(jnp.isfinite(features)))

    # silent numerical check against a pure-JAX reference (same bf16 rounding)
    ref = _reference_forward(feats_in, points, support_points, indices, params)
    err = float(jnp.max(jnp.abs(features - ref)))
    assert jnp.allclose(features, ref, atol=1e-2, rtol=1e-2), err

    print("KERNEL_OK")
</pallas_src>

<mosaic_0001>
module attributes {stable_mosaic.version = 11 : i64} {
  func.func @_conv_kernel(%arg0: i32, %arg1: i32, %arg2: memref<1x8x13x1024xbf16, #tpu.memory_space<vmem>>, %arg3: memref<1x8x3x1024xbf16, #tpu.memory_space<vmem>>, %arg4: memref<16x13xbf16, #tpu.memory_space<vmem>>, %arg5: memref<16x3xbf16, #tpu.memory_space<vmem>>, %arg6: memref<16x1xf32, #tpu.memory_space<vmem>>, %arg7: memref<16x1xf32, #tpu.memory_space<vmem>>, %arg8: memref<1x16x1024xf32, #tpu.memory_space<vmem>>) attributes {dimension_semantics = [#tpu.dimension_semantics<parallel>, #tpu.dimension_semantics<parallel>], iteration_bounds = array<i64: 2, 2>, scalar_prefetch = 0 : i64, scratch_operands = 0 : i64, tpu.core_type = #tpu.core_type<tc>, window_params = [{transform_indices = @transform_0, window_bounds = array<i64: 1, 8, 13, 1024>}, {transform_indices = @transform_1, window_bounds = array<i64: 1, 8, 3, 1024>}, {pipeline_mode = #tpu.pipeline_mode<synchronous>, transform_indices = @transform_2, window_bounds = array<i64: 16, 13>}, {pipeline_mode = #tpu.pipeline_mode<synchronous>, transform_indices = @transform_3, window_bounds = array<i64: 16, 3>}, {pipeline_mode = #tpu.pipeline_mode<synchronous>, transform_indices = @transform_4, window_bounds = array<i64: 16, 1>}, {pipeline_mode = #tpu.pipeline_mode<synchronous>, transform_indices = @transform_5, window_bounds = array<i64: 16, 1>}, {transform_indices = @transform_6, window_bounds = array<i64: 1, 16, 1024>}]} {
    %c0 = arith.constant 0 : index
    %c0_0 = arith.constant 0 : index
    %0 = vector.load %arg4[%c0, %c0_0] : memref<16x13xbf16, #tpu.memory_space<vmem>>, vector<16x13xbf16>
    %c0_1 = arith.constant 0 : index
    %c0_2 = arith.constant 0 : index
    %1 = vector.load %arg5[%c0_1, %c0_2] : memref<16x3xbf16, #tpu.memory_space<vmem>>, vector<16x3xbf16>
    %c0_3 = arith.constant 0 : index
    %c0_4 = arith.constant 0 : index
    %2 = vector.load %arg6[%c0_3, %c0_4] : memref<16x1xf32, #tpu.memory_space<vmem>>, vector<16x1xf32>
    %c0_5 = arith.constant 0 : index
    %c0_6 = arith.constant 0 : index
    %3 = vector.load %arg7[%c0_5, %c0_6] : memref<16x1xf32, #tpu.memory_space<vmem>>, vector<16x1xf32>
    %c0_7 = arith.constant 0 : index
    %c0_8 = arith.constant 0 : index
    %c0_9 = arith.constant 0 : index
    %c0_10 = arith.constant 0 : index
    %4 = vector.load %arg2[%c0_7, %c0_8, %c0_9, %c0_10] : memref<1x8x13x1024xbf16, #tpu.memory_space<vmem>>, vector<1x1x13x512xbf16>
    %5 = vector.shape_cast %4 : vector<1x1x13x512xbf16> to vector<13x512xbf16>
    %cst = arith.constant dense<0.000000e+00> : vector<16x512xf32>
    %6 = tpu.matmul %0, %5, %cst {dimension_numbers = #tpu.dot_dimension_numbers<[1], [0], [0], [1], [0, 0, 1, 1], [], []>} : vector<16x13xbf16>, vector<13x512xbf16>, vector<16x512xf32> -> vector<16x512xf32>
    %c0_11 = arith.constant 0 : index
    %c0_12 = arith.constant 0 : index
    %c0_13 = arith.constant 0 : index
    %c0_14 = arith.constant 0 : index
    %7 = vector.load %arg3[%c0_11, %c0_12, %c0_13, %c0_14] : memref<1x8x3x1024xbf16, #tpu.memory_space<vmem>>, vector<1x1x3x512xbf16>
    %8 = vector.shape_cast %7 : vector<1x1x3x512xbf16> to vector<3x512xbf16>
    %cst_15 = arith.constant dense<0.000000e+00> : vector<16x512xf32>
    %9 = tpu.matmul %1, %8, %cst_15 {dimension_numbers = #tpu.dot_dimension_numbers<[1], [0], [0], [1], [0, 0, 1, 1], [], []>} : vector<16x3xbf16>, vector<3x512xbf16>, vector<16x512xf32> -> vector<16x512xf32>
    %10 = arith.addf %6, %9 : vector<16x512xf32>
    %c0_16 = arith.constant 0 : index
    %c1 = arith.constant 1 : index
    %c0_17 = arith.constant 0 : index
    %c0_18 = arith.constant 0 : index
    %11 = vector.load %arg2[%c0_16, %c1, %c0_17, %c0_18] : memref<1x8x13x1024xbf16, #tpu.memory_space<vmem>>, vector<1x1x13x512xbf16>
    %12 = vector.shape_cast %11 : vector<1x1x13x512xbf16> to vector<13x512xbf16>
    %cst_19 = arith.constant dense<0.000000e+00> : vector<16x512xf32>
    %13 = tpu.matmul %0, %12, %cst_19 {dimension_numbers = #tpu.dot_dimension_numbers<[1], [0], [0], [1], [0, 0, 1, 1], [], []>} : vector<16x13xbf16>, vector<13x512xbf16>, vector<16x512xf32> -> vector<16x512xf32>
    %c0_20 = arith.constant 0 : index
    %c1_21 = arith.constant 1 : index
    %c0_22 = arith.constant 0 : index
    %c0_23 = arith.constant 0 : index
    %14 = vector.load %arg3[%c0_20, %c1_21, %c0_22, %c0_23] : memref<1x8x3x1024xbf16, #tpu.memory_space<vmem>>, vector<1x1x3x512xbf16>
    %15 = vector.shape_cast %14 : vector<1x1x3x512xbf16> to vector<3x512xbf16>
    %cst_24 = arith.constant dense<0.000000e+00> : vector<16x512xf32>
    %16 = tpu.matmul %1, %15, %cst_24 {dimension_numbers = #tpu.dot_dimension_numbers<[1], [0], [0], [1], [0, 0, 1, 1], [], []>} : vector<16x3xbf16>, vector<3x512xbf16>, vector<16x512xf32> -> vector<16x512xf32>
    %17 = arith.addf %13, %16 : vector<16x512xf32>
    %18 = arith.maximumf %10, %17 : vector<16x512xf32>
    %c0_25 = arith.constant 0 : index
    %c2 = arith.constant 2 : index
    %c0_26 = arith.constant 0 : index
    %c0_27 = arith.constant 0 : index
    %19 = vector.load %arg2[%c0_25, %c2, %c0_26, %c0_27] : memref<1x8x13x1024xbf16, #tpu.memory_space<vmem>>, vector<1x1x13x512xbf16>
    %20 = vector.shape_cast %19 : vector<1x1x13x512xbf16> to vector<13x512xbf16>
    %cst_28 = arith.constant dense<0.000000e+00> : vector<16x512xf32>
    %21 = tpu.matmul %0, %20, %cst_28 {dimension_numbers = #tpu.dot_dimension_numbers<[1], [0], [0], [1], [0, 0, 1, 1], [], []>} : vector<16x13xbf16>, vector<13x512xbf16>, vector<16x512xf32> -> vector<16x512xf32>
    %c0_29 = arith.constant 0 : index
    %c2_30 = arith.constant 2 : index
    %c0_31 = arith.constant 0 : index
    %c0_32 = arith.constant 0 : index
    %22 = vector.load %arg3[%c0_29, %c2_30, %c0_31, %c0_32] : memref<1x8x3x1024xbf16, #tpu.memory_space<vmem>>, vector<1x1x3x512xbf16>
    %23 = vector.shape_cast %22 : vector<1x1x3x512xbf16> to vector<3x512xbf16>
    %cst_33 = arith.constant dense<0.000000e+00> : vector<16x512xf32>
    %24 = tpu.matmul %1, %23, %cst_33 {dimension_numbers = #tpu.dot_dimension_numbers<[1], [0], [0], [1], [0, 0, 1, 1], [], []>} : vector<16x3xbf16>, vector<3x512xbf16>, vector<16x512xf32> -> vector<16x512xf32>
    %25 = arith.addf %21, %24 : vector<16x512xf32>
    %26 = arith.maximumf %18, %25 : vector<16x512xf32>
    %c0_34 = arith.constant 0 : index
    %c3 = arith.constant 3 : index
    %c0_35 = arith.constant 0 : index
    %c0_36 = arith.constant 0 : index
    %27 = vector.load %arg2[%c0_34, %c3, %c0_35, %c0_36] : memref<1x8x13x1024xbf16, #tpu.memory_space<vmem>>, vector<1x1x13x512xbf16>
    %28 = vector.shape_cast %27 : vector<1x1x13x512xbf16> to vector<13x512xbf16>
    %cst_37 = arith.constant dense<0.000000e+00> : vector<16x512xf32>
    %29 = tpu.matmul %0, %28, %cst_37 {dimension_numbers = #tpu.dot_dimension_numbers<[1], [0], [0], [1], [0, 0, 1, 1], [], []>} : vector<16x13xbf16>, vector<13x512xbf16>, vector<16x512xf32> -> vector<16x512xf32>
    %c0_38 = arith.constant 0 : index
    %c3_39 = arith.constant 3 : index
    %c0_40 = arith.constant 0 : index
    %c0_41 = arith.constant 0 : index
    %30 = vector.load %arg3[%c0_38, %c3_39, %c0_40, %c0_41] : memref<1x8x3x1024xbf16, #tpu.memory_space<vmem>>, vector<1x1x3x512xbf16>
    %31 = vector.shape_cast %30 : vector<1x1x3x512xbf16> to vector<3x512xbf16>
    %cst_42 = arith.constant dense<0.000000e+00> : vector<16x512xf32>
    %32 = tpu.matmul %1, %31, %cst_42 {dimension_numbers = #tpu.dot_dimension_numbers<[1], [0], [0], [1], [0, 0, 1, 1], [], []>} : vector<16x3xbf16>, vector<3x512xbf16>, vector<16x512xf32> -> vector<16x512xf32>
    %33 = arith.addf %29, %32 : vector<16x512xf32>
    %34 = arith.maximumf %26, %33 : vector<16x512xf32>
    %c0_43 = arith.constant 0 : index
    %c4 = arith.constant 4 : index
    %c0_44 = arith.constant 0 : index
    %c0_45 = arith.constant 0 : index
    %35 = vector.load %arg2[%c0_43, %c4, %c0_44, %c0_45] : memref<1x8x13x1024xbf16, #tpu.memory_space<vmem>>, vector<1x1x13x512xbf16>
    %36 = vector.shape_cast %35 : vector<1x1x13x512xbf16> to vector<13x512xbf16>
    %cst_46 = arith.constant dense<0.000000e+00> : vector<16x512xf32>
    %37 = tpu.matmul %0, %36, %cst_46 {dimension_numbers = #tpu.dot_dimension_numbers<[1], [0], [0], [1], [0, 0, 1, 1], [], []>} : vector<16x13xbf16>, vector<13x512xbf16>, vector<16x512xf32> -> vector<16x512xf32>
    %c0_47 = arith.constant 0 : index
    %c4_48 = arith.constant 4 : index
    %c0_49 = arith.constant 0 : index
    %c0_50 = arith.constant 0 : index
    %38 = vector.load %arg3[%c0_47, %c4_48, %c0_49, %c0_50] : memref<1x8x3x1024xbf16, #tpu.memory_space<vmem>>, vector<1x1x3x512xbf16>
    %39 = vector.shape_cast %38 : vector<1x1x3x512xbf16> to vector<3x512xbf16>
    %cst_51 = arith.constant dense<0.000000e+00> : vector<16x512xf32>
    %40 = tpu.matmul %1, %39, %cst_51 {dimension_numbers = #tpu.dot_dimension_numbers<[1], [0], [0], [1], [0, 0, 1, 1], [], []>} : vector<16x3xbf16>, vector<3x512xbf16>, vector<16x512xf32> -> vector<16x512xf32>
    %41 = arith.addf %37, %40 : vector<16x512xf32>
    %42 = arith.maximumf %34, %41 : vector<16x512xf32>
    %c0_52 = arith.constant 0 : index
    %c5 = arith.constant 5 : index
    %c0_53 = arith.constant 0 : index
    %c0_54 = arith.constant 0 : index
    %43 = vector.load %arg2[%c0_52, %c5, %c0_53, %c0_54] : memref<1x8x13x1024xbf16, #tpu.memory_space<vmem>>, vector<1x1x13x512xbf16>
    %44 = vector.shape_cast %43 : vector<1x1x13x512xbf16> to vector<13x512xbf16>
    %cst_55 = arith.constant dense<0.000000e+00> : vector<16x512xf32>
    %45 = tpu.matmul %0, %44, %cst_55 {dimension_numbers = #tpu.dot_dimension_numbers<[1], [0], [0], [1], [0, 0, 1, 1], [], []>} : vector<16x13xbf16>, vector<13x512xbf16>, vector<16x512xf32> -> vector<16x512xf32>
    %c0_56 = arith.constant 0 : index
    %c5_57 = arith.constant 5 : index
    %c0_58 = arith.constant 0 : index
    %c0_59 = arith.constant 0 : index
    %46 = vector.load %arg3[%c0_56, %c5_57, %c0_58, %c0_59] : memref<1x8x3x1024xbf16, #tpu.memory_space<vmem>>, vector<1x1x3x512xbf16>
    %47 = vector.shape_cast %46 : vector<1x1x3x512xbf16> to vector<3x512xbf16>
    %cst_60 = arith.constant dense<0.000000e+00> : vector<16x512xf32>
    %48 = tpu.matmul %1, %47, %cst_60 {dimension_numbers = #tpu.dot_dimension_numbers<[1], [0], [0], [1], [0, 0, 1, 1], [], []>} : vector<16x3xbf16>, vector<3x512xbf16>, vector<16x512xf32> -> vector<16x512xf32>
    %49 = arith.addf %45, %48 : vector<16x512xf32>
    %50 = arith.maximumf %42, %49 : vector<16x512xf32>
    %c0_61 = arith.constant 0 : index
    %c6 = arith.constant 6 : index
    %c0_62 = arith.constant 0 : index
    %c0_63 = arith.constant 0 : index
    %51 = vector.load %arg2[%c0_61, %c6, %c0_62, %c0_63] : memref<1x8x13x1024xbf16, #tpu.memory_space<vmem>>, vector<1x1x13x512xbf16>
    %52 = vector.shape_cast %51 : vector<1x1x13x512xbf16> to vector<13x512xbf16>
    %cst_64 = arith.constant dense<0.000000e+00> : vector<16x512xf32>
    %53 = tpu.matmul %0, %52, %cst_64 {dimension_numbers = #tpu.dot_dimension_numbers<[1], [0], [0], [1], [0, 0, 1, 1], [], []>} : vector<16x13xbf16>, vector<13x512xbf16>, vector<16x512xf32> -> vector<16x512xf32>
    %c0_65 = arith.constant 0 : index
    %c6_66 = arith.constant 6 : index
    %c0_67 = arith.constant 0 : index
    %c0_68 = arith.constant 0 : index
    %54 = vector.load %arg3[%c0_65, %c6_66, %c0_67, %c0_68] : memref<1x8x3x1024xbf16, #tpu.memory_space<vmem>>, vector<1x1x3x512xbf16>
    %55 = vector.shape_cast %54 : vector<1x1x3x512xbf16> to vector<3x512xbf16>
    %cst_69 = arith.constant dense<0.000000e+00> : vector<16x512xf32>
    %56 = tpu.matmul %1, %55, %cst_69 {dimension_numbers = #tpu.dot_dimension_numbers<[1], [0], [0], [1], [0, 0, 1, 1], [], []>} : vector<16x3xbf16>, vector<3x512xbf16>, vector<16x512xf32> -> vector<16x512xf32>
    %57 = arith.addf %53, %56 : vector<16x512xf32>
    %58 = arith.maximumf %50, %57 : vector<16x512xf32>
    %c0_70 = arith.constant 0 : index
    %c7 = arith.constant 7 : index
    %c0_71 = arith.constant 0 : index
    %c0_72 = arith.constant 0 : index
    %59 = vector.load %arg2[%c0_70, %c7, %c0_71, %c0_72] : memref<1x8x13x1024xbf16, #tpu.memory_space<vmem>>, vector<1x1x13x512xbf16>
    %60 = vector.shape_cast %59 : vector<1x1x13x512xbf16> to vector<13x512xbf16>
    %cst_73 = arith.constant dense<0.000000e+00> : vector<16x512xf32>
    %61 = tpu.matmul %0, %60, %cst_73 {dimension_numbers = #tpu.dot_dimension_numbers<[1], [0], [0], [1], [0, 0, 1, 1], [], []>} : vector<16x13xbf16>, vector<13x512xbf16>, vector<16x512xf32> -> vector<16x512xf32>
    %c0_74 = arith.constant 0 : index
    %c7_75 = arith.constant 7 : index
    %c0_76 = arith.constant 0 : index
    %c0_77 = arith.constant 0 : index
    %62 = vector.load %arg3[%c0_74, %c7_75, %c0_76, %c0_77] : memref<1x8x3x1024xbf16, #tpu.memory_space<vmem>>, vector<1x1x3x512xbf16>
    %63 = vector.shape_cast %62 : vector<1x1x3x512xbf16> to vector<3x512xbf16>
    %cst_78 = arith.constant dense<0.000000e+00> : vector<16x512xf32>
    %64 = tpu.matmul %1, %63, %cst_78 {dimension_numbers = #tpu.dot_dimension_numbers<[1], [0], [0], [1], [0, 0, 1, 1], [], []>} : vector<16x3xbf16>, vector<3x512xbf16>, vector<16x512xf32> -> vector<16x512xf32>
    %65 = arith.addf %61, %64 : vector<16x512xf32>
    %66 = arith.maximumf %58, %65 : vector<16x512xf32>
    %67 = vector.broadcast %2 : vector<16x1xf32> to vector<16x512xf32>
    %68 = arith.mulf %66, %67 : vector<16x512xf32>
    %69 = vector.broadcast %3 : vector<16x1xf32> to vector<16x512xf32>
    %70 = arith.addf %68, %69 : vector<16x512xf32>
    %cst_79 = arith.constant 0.000000e+00 : f32
    %71 = vector.broadcast %cst_79 : f32 to vector<16x512xf32>
    %72 = arith.maximumf %70, %71 : vector<16x512xf32>
    %c0_80 = arith.constant 0 : index
    %c0_81 = arith.constant 0 : index
    %c0_82 = arith.constant 0 : index
    %73 = vector.load %arg8[%c0_80, %c0_81, %c0_82] : memref<1x16x1024xf32, #tpu.memory_space<vmem>>, vector<1x16x512xf32>
    %74 = vector.shape_cast %73 : vector<1x16x512xf32> to vector<16x512xf32>
    %75 = vector.shape_cast %72 : vector<16x512xf32> to vector<1x16x512xf32>
    tpu.vector_store %arg8[%c0_80, %c0_81, %c0_82], %75 {strides = array<i32>} : memref<1x16x1024xf32, #tpu.memory_space<vmem>>, vector<1x16x512xf32>,
    %c0_83 = arith.constant 0 : index
    %c0_84 = arith.constant 0 : index
    %c0_85 = arith.constant 0 : index
    %c512 = arith.constant 512 : index
    %76 = vector.load %arg2[%c0_83, %c0_84, %c0_85, %c512] : memref<1x8x13x1024xbf16, #tpu.memory_space<vmem>>, vector<1x1x13x512xbf16>
    %77 = vector.shape_cast %76 : vector<1x1x13x512xbf16> to vector<13x512xbf16>
    %cst_86 = arith.constant dense<0.000000e+00> : vector<16x512xf32>
    %78 = tpu.matmul %0, %77, %cst_86 {dimension_numbers = #tpu.dot_dimension_numbers<[1], [0], [0], [1], [0, 0, 1, 1], [], []>} : vector<16x13xbf16>, vector<13x512xbf16>, vector<16x512xf32> -> vector<16x512xf32>
    %c0_87 = arith.constant 0 : index
    %c0_88 = arith.constant 0 : index
    %c0_89 = arith.constant 0 : index
    %c512_90 = arith.constant 512 : index
    %79 = vector.load %arg3[%c0_87, %c0_88, %c0_89, %c512_90] : memref<1x8x3x1024xbf16, #tpu.memory_space<vmem>>, vector<1x1x3x512xbf16>
    %80 = vector.shape_cast %79 : vector<1x1x3x512xbf16> to vector<3x512xbf16>
    %cst_91 = arith.constant dense<0.000000e+00> : vector<16x512xf32>
    %81 = tpu.matmul %1, %80, %cst_91 {dimension_numbers = #tpu.dot_dimension_numbers<[1], [0], [0], [1], [0, 0, 1, 1], [], []>} : vector<16x3xbf16>, vector<3x512xbf16>, vector<16x512xf32> -> vector<16x512xf32>
    %82 = arith.addf %78, %81 : vector<16x512xf32>
    %c0_92 = arith.constant 0 : index
    %c1_93 = arith.constant 1 : index
    %c0_94 = arith.constant 0 : index
    %c512_95 = arith.constant 512 : index
    %83 = vector.load %arg2[%c0_92, %c1_93, %c0_94, %c512_95] : memref<1x8x13x1024xbf16, #tpu.memory_space<vmem>>, vector<1x1x13x512xbf16>
    %84 = vector.shape_cast %83 : vector<1x1x13x512xbf16> to vector<13x512xbf16>
    %cst_96 = arith.constant dense<0.000000e+00> : vector<16x512xf32>
    %85 = tpu.matmul %0, %84, %cst_96 {dimension_numbers = #tpu.dot_dimension_numbers<[1], [0], [0], [1], [0, 0, 1, 1], [], []>} : vector<16x13xbf16>, vector<13x512xbf16>, vector<16x512xf32> -> vector<16x512xf32>
    %c0_97 = arith.constant 0 : index
    %c1_98 = arith.constant 1 : index
    %c0_99 = arith.constant 0 : index
    %c512_100 = arith.constant 512 : index
    %86 = vector.load %arg3[%c0_97, %c1_98, %c0_99, %c512_100] : memref<1x8x3x1024xbf16, #tpu.memory_space<vmem>>, vector<1x1x3x512xbf16>
    %87 = vector.shape_cast %86 : vector<1x1x3x512xbf16> to vector<3x512xbf16>
    %cst_101 = arith.constant dense<0.000000e+00> : vector<16x512xf32>
    %88 = tpu.matmul %1, %87, %cst_101 {dimension_numbers = #tpu.dot_dimension_numbers<[1], [0], [0], [1], [0, 0, 1, 1], [], []>} : vector<16x3xbf16>, vector<3x512xbf16>, vector<16x512xf32> -> vector<16x512xf32>
    %89 = arith.addf %85, %88 : vector<16x512xf32>
    %90 = arith.maximumf %82, %89 : vector<16x512xf32>
    %c0_102 = arith.constant 0 : index
    %c2_103 = arith.constant 2 : index
    %c0_104 = arith.constant 0 : index
    %c512_105 = arith.constant 512 : index
    %91 = vector.load %arg2[%c0_102, %c2_103, %c0_104, %c512_105] : memref<1x8x13x1024xbf16, #tpu.memory_space<vmem>>, vector<1x1x13x512xbf16>
    %92 = vector.shape_cast %91 : vector<1x1x13x512xbf16> to vector<13x512xbf16>
    %cst_106 = arith.constant dense<0.000000e+00> : vector<16x512xf32>
    %93 = tpu.matmul %0, %92, %cst_106 {dimension_numbers = #tpu.dot_dimension_numbers<[1], [0], [0], [1], [0, 0, 1, 1], [], []>} : vector<16x13xbf16>, vector<13x512xbf16>, vector<16x512xf32> -> vector<16x512xf32>
    %c0_107 = arith.constant 0 : index
    %c2_108 = arith.constant 2 : index
    %c0_109 = arith.constant 0 : index
    %c512_110 = arith.constant 512 : index
    %94 = vector.load %arg3[%c0_107, %c2_108, %c0_109, %c512_110] : memref<1x8x3x1024xbf16, #tpu.memory_space<vmem>>, vector<1x1x3x512xbf16>
    %95 = vector.shape_cast %94 : vector<1x1x3x512xbf16> to vector<3x512xbf16>
    %cst_111 = arith.constant dense<0.000000e+00> : vector<16x512xf32>
    %96 = tpu.matmul %1, %95, %cst_111 {dimension_numbers = #tpu.dot_dimension_numbers<[1], [0], [0], [1], [0, 0, 1, 1], [], []>} : vector<16x3xbf16>, vector<3x512xbf16>, vector<16x512xf32> -> vector<16x512xf32>
    %97 = arith.addf %93, %96 : vector<16x512xf32>
    %98 = arith.maximumf %90, %97 : vector<16x512xf32>
    %c0_112 = arith.constant 0 : index
    %c3_113 = arith.constant 3 : index
    %c0_114 = arith.constant 0 : index
    %c512_115 = arith.constant 512 : index
    %99 = vector.load %arg2[%c0_112, %c3_113, %c0_114, %c512_115] : memref<1x8x13x1024xbf16, #tpu.memory_space<vmem>>, vector<1x1x13x512xbf16>
    %100 = vector.shape_cast %99 : vector<1x1x13x512xbf16> to vector<13x512xbf16>
    %cst_116 = arith.constant dense<0.000000e+00> : vector<16x512xf32>
    %101 = tpu.matmul %0, %100, %cst_116 {dimension_numbers = #tpu.dot_dimension_numbers<[1], [0], [0], [1], [0, 0, 1, 1], [], []>} : vector<16x13xbf16>, vector<13x512xbf16>, vector<16x512xf32> -> vector<16x512xf32>
    %c0_117 = arith.constant 0 : index
    %c3_118 = arith.constant 3 : index
    %c0_119 = arith.constant 0 : index
    %c512_120 = arith.constant 512 : index
    %102 = vector.load %arg3[%c0_117, %c3_118, %c0_119, %c512_120] : memref<1x8x3x1024xbf16, #tpu.memory_space<vmem>>, vector<1x1x3x512xbf16>
    %103 = vector.shape_cast %102 : vector<1x1x3x512xbf16> to vector<3x512xbf16>
    %cst_121 = arith.constant dense<0.000000e+00> : vector<16x512xf32>
    %104 = tpu.matmul %1, %103, %cst_121 {dimension_numbers = #tpu.dot_dimension_numbers<[1], [0], [0], [1], [0, 0, 1, 1], [], []>} : vector<16x3xbf16>, vector<3x512xbf16>, vector<16x512xf32> -> vector<16x512xf32>
    %105 = arith.addf %101, %104 : vector<16x512xf32>
    %106 = arith.maximumf %98, %105 : vector<16x512xf32>
    %c0_122 = arith.constant 0 : index
    %c4_123 = arith.constant 4 : index
    %c0_124 = arith.constant 0 : index
    %c512_125 = arith.constant 512 : index
    %107 = vector.load %arg2[%c0_122, %c4_123, %c0_124, %c512_125] : memref<1x8x13x1024xbf16, #tpu.memory_space<vmem>>, vector<1x1x13x512xbf16>
    %108 = vector.shape_cast %107 : vector<1x1x13x512xbf16> to vector<13x512xbf16>
    %cst_126 = arith.constant dense<0.000000e+00> : vector<16x512xf32>
    %109 = tpu.matmul %0, %108, %cst_126 {dimension_numbers = #tpu.dot_dimension_numbers<[1], [0], [0], [1], [0, 0, 1, 1], [], []>} : vector<16x13xbf16>, vector<13x512xbf16>, vector<16x512xf32> -> vector<16x512xf32>
    %c0_127 = arith.constant 0 : index
    %c4_128 = arith.constant 4 : index
    %c0_129 = arith.constant 0 : index
    %c512_130 = arith.constant 512 : index
    %110 = vector.load %arg3[%c0_127, %c4_128, %c0_129, %c512_130] : memref<1x8x3x1024xbf16, #tpu.memory_space<vmem>>, vector<1x1x3x512xbf16>
    %111 = vector.shape_cast %110 : vector<1x1x3x512xbf16> to vector<3x512xbf16>
    %cst_131 = arith.constant dense<0.000000e+00> : vector<16x512xf32>
    %112 = tpu.matmul %1, %111, %cst_131 {dimension_numbers = #tpu.dot_dimension_numbers<[1], [0], [0], [1], [0, 0, 1, 1], [], []>} : vector<16x3xbf16>, vector<3x512xbf16>, vector<16x512xf32> -> vector<16x512xf32>
    %113 = arith.addf %109, %112 : vector<16x512xf32>
    %114 = arith.maximumf %106, %113 : vector<16x512xf32>
    %c0_132 = arith.constant 0 : index
    %c5_133 = arith.constant 5 : index
    %c0_134 = arith.constant 0 : index
    %c512_135 = arith.constant 512 : index
    %115 = vector.load %arg2[%c0_132, %c5_133, %c0_134, %c512_135] : memref<1x8x13x1024xbf16, #tpu.memory_space<vmem>>, vector<1x1x13x512xbf16>
    %116 = vector.shape_cast %115 : vector<1x1x13x512xbf16> to vector<13x512xbf16>
    %cst_136 = arith.constant dense<0.000000e+00> : vector<16x512xf32>
    %117 = tpu.matmul %0, %116, %cst_136 {dimension_numbers = #tpu.dot_dimension_numbers<[1], [0], [0], [1], [0, 0, 1, 1], [], []>} : vector<16x13xbf16>, vector<13x512xbf16>, vector<16x512xf32> -> vector<16x512xf32>
    %c0_137 = arith.constant 0 : index
    %c5_138 = arith.constant 5 : index
    %c0_139 = arith.constant 0 : index
    %c512_140 = arith.constant 512 : index
    %118 = vector.load %arg3[%c0_137, %c5_138, %c0_139, %c512_140] : memref<1x8x3x1024xbf16, #tpu.memory_space<vmem>>, vector<1x1x3x512xbf16>
    %119 = vector.shape_cast %118 : vector<1x1x3x512xbf16> to vector<3x512xbf16>
    %cst_141 = arith.constant dense<0.000000e+00> : vector<16x512xf32>
    %120 = tpu.matmul %1, %119, %cst_141 {dimension_numbers = #tpu.dot_dimension_numbers<[1], [0], [0], [1], [0, 0, 1, 1], [], []>} : vector<16x3xbf16>, vector<3x512xbf16>, vector<16x512xf32> -> vector<16x512xf32>
    %121 = arith.addf %117, %120 : vector<16x512xf32>
    %122 = arith.maximumf %114, %121 : vector<16x512xf32>
    %c0_142 = arith.constant 0 : index
    %c6_143 = arith.constant 6 : index
    %c0_144 = arith.constant 0 : index
    %c512_145 = arith.constant 512 : index
    %123 = vector.load %arg2[%c0_142, %c6_143, %c0_144, %c512_145] : memref<1x8x13x1024xbf16, #tpu.memory_space<vmem>>, vector<1x1x13x512xbf16>
    %124 = vector.shape_cast %123 : vector<1x1x13x512xbf16> to vector<13x512xbf16>
    %cst_146 = arith.constant dense<0.000000e+00> : vector<16x512xf32>
    %125 = tpu.matmul %0, %124, %cst_146 {dimension_numbers = #tpu.dot_dimension_numbers<[1], [0], [0], [1], [0, 0, 1, 1], [], []>} : vector<16x13xbf16>, vector<13x512xbf16>, vector<16x512xf32> -> vector<16x512xf32>
    %c0_147 = arith.constant 0 : index
    %c6_148 = arith.constant 6 : index
    %c0_149 = arith.constant 0 : index
    %c512_150 = arith.constant 512 : index
    %126 = vector.load %arg3[%c0_147, %c6_148, %c0_149, %c512_150] : memref<1x8x3x1024xbf16, #tpu.memory_space<vmem>>, vector<1x1x3x512xbf16>
    %127 = vector.shape_cast %126 : vector<1x1x3x512xbf16> to vector<3x512xbf16>
    %cst_151 = arith.constant dense<0.000000e+00> : vector<16x512xf32>
    %128 = tpu.matmul %1, %127, %cst_151 {dimension_numbers = #tpu.dot_dimension_numbers<[1], [0], [0], [1], [0, 0, 1, 1], [], []>} : vector<16x3xbf16>, vector<3x512xbf16>, vector<16x512xf32> -> vector<16x512xf32>
    %129 = arith.addf %125, %128 : vector<16x512xf32>
    %130 = arith.maximumf %122, %129 : vector<16x512xf32>
    %c0_152 = arith.constant 0 : index
    %c7_153 = arith.constant 7 : index
    %c0_154 = arith.constant 0 : index
    %c512_155 = arith.constant 512 : index
    %131 = vector.load %arg2[%c0_152, %c7_153, %c0_154, %c512_155] : memref<1x8x13x1024xbf16, #tpu.memory_space<vmem>>, vector<1x1x13x512xbf16>
    %132 = vector.shape_cast %131 : vector<1x1x13x512xbf16> to vector<13x512xbf16>
    %cst_156 = arith.constant dense<0.000000e+00> : vector<16x512xf32>
    %133 = tpu.matmul %0, %132, %cst_156 {dimension_numbers = #tpu.dot_dimension_numbers<[1], [0], [0], [1], [0, 0, 1, 1], [], []>} : vector<16x13xbf16>, vector<13x512xbf16>, vector<16x512xf32> -> vector<16x512xf32>
    %c0_157 = arith.constant 0 : index
    %c7_158 = arith.constant 7 : index
    %c0_159 = arith.constant 0 : index
    %c512_160 = arith.constant 512 : index
    %134 = vector.load %arg3[%c0_157, %c7_158, %c0_159, %c512_160] : memref<1x8x3x1024xbf16, #tpu.memory_space<vmem>>, vector<1x1x3x512xbf16>
    %135 = vector.shape_cast %134 : vector<1x1x3x512xbf16> to vector<3x512xbf16>
    %cst_161 = arith.constant dense<0.000000e+00> : vector<16x512xf32>
    %136 = tpu.matmul %1, %135, %cst_161 {dimension_numbers = #tpu.dot_dimension_numbers<[1], [0], [0], [1], [0, 0, 1, 1], [], []>} : vector<16x3xbf16>, vector<3x512xbf16>, vector<16x512xf32> -> vector<16x512xf32>
    %137 = arith.addf %133, %136 : vector<16x512xf32>
    %138 = arith.maximumf %130, %137 : vector<16x512xf32>
    %139 = vector.broadcast %2 : vector<16x1xf32> to vector<16x512xf32>
    %140 = arith.mulf %138, %139 : vector<16x512xf32>
    %141 = vector.broadcast %3 : vector<16x1xf32> to vector<16x512xf32>
    %142 = arith.addf %140, %141 : vector<16x512xf32>
    %cst_162 = arith.constant 0.000000e+00 : f32
    %143 = vector.broadcast %cst_162 : f32 to vector<16x512xf32>
    %144 = arith.maximumf %142, %143 : vector<16x512xf32>
    %c0_163 = arith.constant 0 : index
    %c0_164 = arith.constant 0 : index
    %c512_165 = arith.constant 512 : index
    %145 = vector.load %arg8[%c0_163, %c0_164, %c512_165] : memref<1x16x1024xf32, #tpu.memory_space<vmem>>, vector<1x16x512xf32>
    %146 = vector.shape_cast %145 : vector<1x16x512xf32> to vector<16x512xf32>
    %147 = vector.shape_cast %144 : vector<16x512xf32> to vector<1x16x512xf32>
    tpu.vector_store %arg8[%c0_163, %c0_164, %c512_165], %147 {strides = array<i32>} : memref<1x16x1024xf32, #tpu.memory_space<vmem>>, vector<1x16x512xf32>,
    return
  }
  func.func @transform_0(%arg0: i32, %arg1: i32) -> (i32, i32, i32, i32) {
    %c0_i32 = arith.constant 0 : i32
    %c0_i32_0 = arith.constant 0 : i32
    %c0_i32_1 = arith.constant 0 : i32
    return %arg0, %c0_i32, %c0_i32_0, %arg1 : i32, i32, i32, i32
  }
  func.func @transform_1(%arg0: i32, %arg1: i32) -> (i32, i32, i32, i32) {
    %c0_i32 = arith.constant 0 : i32
    %c0_i32_0 = arith.constant 0 : i32
    %c0_i32_1 = arith.constant 0 : i32
    return %arg0, %c0_i32, %c0_i32_0, %arg1 : i32, i32, i32, i32
  }
  func.func @transform_2(%arg0: i32, %arg1: i32) -> (i32, i32) {
    %c0_i32 = arith.constant 0 : i32
    %c0_i32_0 = arith.constant 0 : i32
    %c0_i32_1 = arith.constant 0 : i32
    return %c0_i32, %c0_i32_0 : i32, i32
  }
  func.func @transform_3(%arg0: i32, %arg1: i32) -> (i32, i32) {
    %c0_i32 = arith.constant 0 : i32
    %c0_i32_0 = arith.constant 0 : i32
    %c0_i32_1 = arith.constant 0 : i32
    return %c0_i32, %c0_i32_0 : i32, i32
  }
  func.func @transform_4(%arg0: i32, %arg1: i32) -> (i32, i32) {
    %c0_i32 = arith.constant 0 : i32
    %c0_i32_0 = arith.constant 0 : i32
    %c0_i32_1 = arith.constant 0 : i32
    return %c0_i32, %c0_i32_0 : i32, i32
  }
  func.func @transform_5(%arg0: i32, %arg1: i32) -> (i32, i32) {
    %c0_i32 = arith.constant 0 : i32
    %c0_i32_0 = arith.constant 0 : i32
    %c0_i32_1 = arith.constant 0 : i32
    return %c0_i32, %c0_i32_0 : i32, i32
  }
  func.func @transform_6(%arg0: i32, %arg1: i32) -> (i32, i32, i32) {
    %c0_i32 = arith.constant 0 : i32
    %c0_i32_0 = arith.constant 0 : i32
    return %arg0, %c0_i32, %arg1 : i32, i32, i32
  }
}

</mosaic_0001>

<llo_original>
// kernel: custom-call.4
$region0: #{custom-call.4}
  %s0 = inlined_call_operand.vmem [shape: s32[2,2,1024,8], index: 0, kind: output, shape index: {}]

// kernel: conv_forward.1
$region0: #{conv_forward.1}
  #allocation0 [shape = 'u32[]', space=smem, size = 0x4, offset = 0x4, fixed_abs, tag = 'smem constant byte address 0x4 - core index']
  #allocation1 [shape = 'u32[144,128]{1,0:T(1,128)}', space=vmem, size = 0x12000, scoped, tag = 'internal scratch']
  %s0 = inlined_call_operand.vmem [shape: bf16[2,8,13,1200], index: 0, kind: input, shape index: {}]
  %s1 = inlined_call_operand.vmem [shape: bf16[2,8,3,1200], index: 1, kind: input, shape index: {}]
  %s2 = inlined_call_operand.vmem [shape: bf16[16,13], index: 2, kind: input, shape index: {}]
  %s3 = inlined_call_operand.vmem [shape: bf16[16,3], index: 3, kind: input, shape index: {}]
  %s4 = inlined_call_operand.vmem [shape: f32[16,1], index: 4, kind: input, shape index: {}]
  %s5 = inlined_call_operand.vmem [shape: f32[16,1], index: 5, kind: input, shape index: {}]
  %s6 = inlined_call_operand.hbm [shape: f32[2,16,1200], index: 6, kind: output, shape index: {}]
  %s7 = sld [smem:[#allocation0]]
  $region189: #{conv_forward.1} parent=0
    _
  %s9 = ssub.s32 1, %s7
  %s10 = scalar_select 0, %s9, %s7
  $region1: #{conv_forward.1} parent=0
    #allocation2 [shape = 'u8[524288]{0}', space=vmem, size = 0x80000, scoped, tag = 'input window, operand 0']
    #allocation3 [shape = 'u8[131072]{0}', space=vmem, size = 0x20000, scoped, tag = 'input window, operand 1']
    #allocation4 [shape = 'u8[131072]{0}', space=vmem, size = 0x20000, scoped, tag = 'output window, operand 0']
    #allocation5 [shape = 's32[2]{0}', space=sflag, size = 0x8, scoped, tag = 'scoped memory for conv_forward.1']
    %11 = vsyncpa [#allocation5], 0
    %s12 = scalar_lea.sflag [#allocation5], 1
    %13 = vsyncpa %s12, 0
    loop: start=0, step=1, limit=6
    $region2: #{conv_forward.1} parent=1 // loop_pre_header
      _
    $region3: #{conv_forward.1} parent=1 // loop_header
      %s15 = sphi 0, %s19
      %p16 = scmp.ge.s32.totalorder %s15, 6
      %s22 = sphi 0, %s34
      %s23 = sphi 0, %s30
      %s24 = sphi 0, %s22
      %s25 = sphi 0, %s23
      %s26 = sphi 0, %s24
      %s27 = sphi 0, %s25
      %s39 = sphi 0, %s41
      %s42 = sphi 0, %s39
      %s43 = sphi 0, %s42
      %s59 = sphi 0, %s43
      %s67 = sphi 0, %s69
      %s70 = sphi 0, %s67
      %s71 = sphi 0, %s70
      %s87 = sphi 0, %s71
      %s91 = sphi 0, %s91
      %s93 = sphi 0, %s91
      %s94 = sphi 0, %s93
      %s108 = sphi 0, %s94
      %s112 = sphi 0, %s112
      %s114 = sphi 0, %s112
      %s115 = sphi 0, %s114
      %s129 = sphi 0, %s115
      %s133 = sphi 0, %s133
      %s135 = sphi 0, %s133
      %s136 = sphi 0, %s135
      %s150 = sphi 0, %s136
      %s154 = sphi 0, %s154
      %s156 = sphi 0, %s154
      %s157 = sphi 0, %s156
      %s171 = sphi 0, %s157
      %s179 = sphi 0, %s181
      %s182 = sphi 0, %s179
      %s183 = sphi 0, %s182
      %s199 = sphi 0, %s183
    $region4: #{conv_forward.1} parent=1 // loop_header_branch
      %18 = sbr.rel (%p16) target = $region8
    $region5: #{conv_forward.1} parent=1 // loop_body
      %s20 = ssub.s32 %s15, 1
      %s21 = ssub.s32 %s15, 2
      %s28 = sadd.s32 1, %s23
      %p29 = scmp.ge.s32.totalorder %s28, 2
      %s30 = scalar_select %p29, 0, %s28
      %s31 = sadd.s32 1, %s22
      %s32 = scalar_select %p29, %s31, %s22
      %p33 = scmp.ge.s32.totalorder %s32, 2
      %s34 = scalar_select %p33, 0, %s32
      %s35 = ssub.s32 %s22, %s34
      %s36 = ssub.s32 %s23, %s30
      %s37 = sor.u32 %s35, %s36
      %p38 = scmp.eq.s32.totalorder %s37, 0
      %s40 = sadd.s32 %s39, 1
      %s41 = scalar_select %p38, %s39, %s40
      %p44 = pneg %p38
      %p45 = scmp.eq.s32.totalorder %s15, 3
      %p46 = por %p44, %p45
      %p47 = scmp.ne.s32.totalorder %s39, %s42
      %p48 = scmp.eq.s32.totalorder %s15, 0
      %p49 = por %p47, %p48
      %p50 = scmp.ne.s32.totalorder %s39, %s42
      %p51 = scmp.eq.s32.totalorder %s20, 3
      %p52 = por %p50, %p51
      %p53 = scmp.ne.s32.totalorder %s42, %s43
      %p54 = scmp.eq.s32.totalorder %s20, 0
      %p55 = por %p53, %p54
      %p56 = scmp.ne.s32.totalorder %s42, %s43
      %p57 = scmp.eq.s32.totalorder %s21, 3
      %p58 = por %p56, %p57
      %p60 = scmp.ne.s32.totalorder %s43, %s59
      %p61 = scmp.eq.s32.totalorder %s21, 0
      %p62 = por %p60, %p61
      %s63 = ssub.s32 %s22, %s34
      %s64 = ssub.s32 %s23, %s30
      %s65 = sor.u32 %s63, %s64
      %p66 = scmp.eq.s32.totalorder %s65, 0
      %s68 = sadd.s32 %s67, 1
      %s69 = scalar_select %p66, %s67, %s68
      %p72 = pneg %p66
      %p73 = scmp.eq.s32.totalorder %s15, 3
      %p74 = por %p72, %p73
      %p75 = scmp.ne.s32.totalorder %s67, %s70
      %p76 = scmp.eq.s32.totalorder %s15, 0
      %p77 = por %p75, %p76
      %p78 = scmp.ne.s32.totalorder %s67, %s70
      %p79 = scmp.eq.s32.totalorder %s20, 3
      %p80 = por %p78, %p79
      %p81 = scmp.ne.s32.totalorder %s70, %s71
      %p82 = scmp.eq.s32.totalorder %s20, 0
      %p83 = por %p81, %p82
      %p84 = scmp.ne.s32.totalorder %s70, %s71
      %p85 = scmp.eq.s32.totalorder %s21, 3
      %p86 = por %p84, %p85
      %p88 = scmp.ne.s32.totalorder %s71, %s87
      %p89 = scmp.eq.s32.totalorder %s21, 0
      %p90 = por %p88, %p89
      %s92 = sadd.s32 %s91, 1
      %p95 = scmp.eq.s32.totalorder %s15, 3
      %p96 = scmp.ne.s32.totalorder %s91, %s93
      %p97 = scmp.eq.s32.totalorder %s15, 0
      %p98 = por %p96, %p97
      %p99 = scmp.ne.s32.totalorder %s91, %s93
      %p100 = scmp.eq.s32.totalorder %s20, 3
      %p101 = por %p99, %p100
      %p102 = scmp.ne.s32.totalorder %s93, %s94
      %p103 = scmp.eq.s32.totalorder %s20, 0
      %p104 = por %p102, %p103
      %p105 = scmp.ne.s32.totalorder %s93, %s94
      %p106 = scmp.eq.s32.totalorder %s21, 3
      %p107 = por %p105, %p106
      %p109 = scmp.ne.s32.totalorder %s94, %s108
      %p110 = scmp.eq.s32.totalorder %s21, 0
      %p111 = por %p109, %p110
      %s113 = sadd.s32 %s112, 1
      %p116 = scmp.eq.s32.totalorder %s15, 3
      %p117 = scmp.ne.s32.totalorder %s112, %s114
      %p118 = scmp.eq.s32.totalorder %s15, 0
      %p119 = por %p117, %p118
      %p120 = scmp.ne.s32.totalorder %s112, %s114
      %p121 = scmp.eq.s32.totalorder %s20, 3
      %p122 = por %p120, %p121
      %p123 = scmp.ne.s32.totalorder %s114, %s115
      %p124 = scmp.eq.s32.totalorder %s20, 0
      %p125 = por %p123, %p124
      %p126 = scmp.ne.s32.totalorder %s114, %s115
      %p127 = scmp.eq.s32.totalorder %s21, 3
      %p128 = por %p126, %p127
      %p130 = scmp.ne.s32.totalorder %s115, %s129
      %p131 = scmp.eq.s32.totalorder %s21, 0
      %p132 = por %p130, %p131
      %s134 = sadd.s32 %s133, 1
      %p137 = scmp.eq.s32.totalorder %s15, 3
      %p138 = scmp.ne.s32.totalorder %s133, %s135
      %p139 = scmp.eq.s32.totalorder %s15, 0
      %p140 = por %p138, %p139
      %p141 = scmp.ne.s32.totalorder %s133, %s135
      %p142 = scmp.eq.s32.totalorder %s20, 3
      %p143 = por %p141, %p142
      %p144 = scmp.ne.s32.totalorder %s135, %s136
      %p145 = scmp.eq.s32.totalorder %s20, 0
      %p146 = por %p144, %p145
      %p147 = scmp.ne.s32.totalorder %s135, %s136
      %p148 = scmp.eq.s32.totalorder %s21, 3
      %p149 = por %p147, %p148
      %p151 = scmp.ne.s32.totalorder %s136, %s150
      %p152 = scmp.eq.s32.totalorder %s21, 0
      %p153 = por %p151, %p152
      %s155 = sadd.s32 %s154, 1
      %p158 = scmp.eq.s32.totalorder %s15, 3
      %p159 = scmp.ne.s32.totalorder %s154, %s156
      %p160 = scmp.eq.s32.totalorder %s15, 0
      %p161 = por %p159, %p160
      %p162 = scmp.ne.s32.totalorder %s154, %s156
      %p163 = scmp.eq.s32.totalorder %s20, 3
      %p164 = por %p162, %p163
      %p165 = scmp.ne.s32.totalorder %s156, %s157
      %p166 = scmp.eq.s32.totalorder %s20, 0
      %p167 = por %p165, %p166
      %p168 = scmp.ne.s32.totalorder %s156, %s157
      %p169 = scmp.eq.s32.totalorder %s21, 3
      %p170 = por %p168, %p169
      %p172 = scmp.ne.s32.totalorder %s157, %s171
      %p173 = scmp.eq.s32.totalorder %s21, 0
      %p174 = por %p172, %p173
      %s175 = ssub.s32 %s22, %s34
      %s176 = ssub.s32 %s23, %s30
      %s177 = sor.u32 %s175, %s176
      %p178 = scmp.eq.s32.totalorder %s177, 0
      %s180 = sadd.s32 %s179, 1
      %s181 = scalar_select %p178, %s179, %s180
      %p184 = pneg %p178
      %p185 = scmp.eq.s32.totalorder %s15, 3
      %p186 = por %p184, %p185
      %p187 = scmp.ne.s32.totalorder %s179, %s182
      %p188 = scmp.eq.s32.totalorder %s15, 0
      %p189 = por %p187, %p188
      %p190 = scmp.ne.s32.totalorder %s179, %s182
      %p191 = scmp.eq.s32.totalorder %s20, 3
      %p192 = por %p190, %p191
      %p193 = scmp.ne.s32.totalorder %s182, %s183
      %p194 = scmp.eq.s32.totalorder %s20, 0
      %p195 = por %p193, %p194
      %p196 = scmp.ne.s32.totalorder %s182, %s183
      %p197 = scmp.eq.s32.totalorder %s21, 3
      %p198 = por %p196, %p197
      %p200 = scmp.ne.s32.totalorder %s183, %s199
      %p201 = scmp.eq.s32.totalorder %s21, 0
      %p202 = por %p200, %p201
      %p203 = scmp.le.s32.totalorder 1, %s15
      %p204 = scmp.lt.s32.totalorder %s15, 5
      %p205 = pnand %p203, %p204
      %p206 = pneg %p205
      // Predicated region
      $region9: #{conv_forward.1} parent=5 // pred_check
        _
      $region10: #{conv_forward.1} parent=5 // pred_check_branch
        %208 = sbr.rel (%p205) target = $region12
      $region11: #{conv_forward.1} parent=5 // pred_region
        %s209 = ssub.s32 %s15, 1
        // Predicated region
        $region13: #{conv_forward.1} parent=11 // pred_check
          %p210 = pneg %p104
        $region14: #{conv_forward.1} parent=11 // pred_check_branch
          %212 = sbr.rel (%p210) target = $region16
        $region15: #{conv_forward.1} parent=11 // pred_region
          _
        $region16: #{conv_forward.1} parent=11 // pred_fallthru
          _
        // Predicated region
        $region17: #{conv_forward.1} parent=11 // pred_check
          %p213 = pneg %p125
        $region18: #{conv_forward.1} parent=11 // pred_check_branch
          %215 = sbr.rel (%p213) target = $region20
        $region19: #{conv_forward.1} parent=11 // pred_region
          _
        $region20: #{conv_forward.1} parent=11 // pred_fallthru
          _
        // Predicated region
        $region21: #{conv_forward.1} parent=11 // pred_check
          %p216 = pneg %p146
        $region22: #{conv_forward.1} parent=11 // pred_check_branch
          %218 = sbr.rel (%p216) target = $region24
        $region23: #{conv_forward.1} parent=11 // pred_region
          _
        $region24: #{conv_forward.1} parent=11 // pred_fallthru
          _
        // Predicated region
        $region25: #{conv_forward.1} parent=11 // pred_check
          %p219 = pneg %p167
        $region26: #{conv_forward.1} parent=11 // pred_check_branch
          %221 = sbr.rel (%p219) target = $region28
        $region27: #{conv_forward.1} parent=11 // pred_region
          _
        $region28: #{conv_forward.1} parent=11 // pred_fallthru
          _
      $region12: #{conv_forward.1} parent=5 // pred_fallthru
        _
      %p222 = scmp.lt.s32.totalorder %s15, 4
      // Predicated region
      $region29: #{conv_forward.1} parent=5 // pred_check
        %p223 = pneg %p222
      $region30: #{conv_forward.1} parent=5 // pred_check_branch
        %225 = sbr.rel (%p223) target = $region32
      $region31: #{conv_forward.1} parent=5 // pred_region
        // Predicated region
        $region33: #{conv_forward.1} parent=31 // pred_check
          %p226 = pneg %p49
        $region34: #{conv_forward.1} parent=31 // pred_check_branch
          %228 = sbr.rel (%p226) target = $region36
        $region35: #{conv_forward.1} parent=31 // pred_region
          %s229 = sand.u32 %s39, 1
          %s230 = sand.u32 %s39, 1
          %s231 = smul.addr %s230, 512
          %s232 = scalar_lea.vmem [#allocation2], %s231
          %s233 = smul.u32 8, %s23
          %s234 = ssub.s32 10, %s233
          %p235 = scmp.lt.s32.totalorder %s234, 8
          %s236 = scalar_select %p235, %s234, 8
          %s237 = smul.u32 1024, %s236
          %p238 = scmp.ne.s32.totalorder 0, %s237
          %s239 = smul.addr %s22, 160
          %s240 = sadd.s32 %s233, %s239
          %s241 = smul.addr %s240, 4
          %s242 = scalar_lea.vmem %s0, %s241
          %s243 = smul.u32 %s236, 4
          // Predicated region
          $region37: #{conv_forward.1} parent=35 // pred_check
            %p244 = pneg %p238
          $region38: #{conv_forward.1} parent=35 // pred_check_branch
            %246 = sbr.rel (%p244) target = $region40
          $region39: #{conv_forward.1} parent=35 // pred_region
            %p247 = scmp.lt.u32.totalorder %s243, 8
            %p248 = pneg %p247
            // Predicated region
            $region41: #{conv_forward.1} parent=39 // pred_check
              _
            $region42: #{conv_forward.1} parent=39 // pred_check_branch
              %250 = sbr.rel (%p247) target = $region44
            $region43: #{conv_forward.1} parent=39 // pred_region
              %s295 = sand.u32 %s243, 7
              %p296 = scmp.eq.s32.totalorder %s295, 0
              // Predicated region
              $region56: #{conv_forward.1} parent=43 // pred_check
                %p297 = pneg %p296
              $region57: #{conv_forward.1} parent=43 // pred_check_branch
                %299 = sbr.rel (%p297) target = $region59
              $region58: #{conv_forward.1} parent=43 // pred_region
                %s300 = sshrl.u32 %s243, 3
                %s301 = sshrl.u32 %s300, 2
                // While loop
                $region60: #{conv_forward.1} parent=58 // loop_pre_header
                  _
                $region61: #{conv_forward.1} parent=58 // loop_header
                  %s305 = sphi 0, %s307
                  %p306 = scmp.ge.s32.totalorder %s305, %s301
                  %s310 = sphi 0, %s443
                  %s311 = sphi %s242, %s446
                  %s312 = sphi %s232, %s447
                $region62: #{conv_forward.1} parent=58 // loop_header_branch
                  %309 = sbr.rel (%p306) target = $region66
                $region63: #{conv_forward.1} parent=58 // loop_body
                  %v313 = vld [vmem:[%s311] sm:$0xff]
                  %314 = vst [vmem:[%s312] sm:$0xff] %v313
                  %v315 = vld [vmem:[%s311 + $0x8] sm:$0xff]
                  %316 = vst [vmem:[%s312 + $0x8] sm:$0xff] %v315
                  %v317 = vld [vmem:[%s311 + $0x10] sm:$0xff]
                  %318 = vst [vmem:[%s312 + $0x10] sm:$0xff] %v317
                  %v319 = vld [vmem:[%s311 + $0x18] sm:$0xff]
                  %320 = vst [vmem:[%s312 + $0x18] sm:$0xff] %v319
                  %v321 = vld [vmem:[%s311 + $0x28] sm:$0xff]
                  %322 = vst [vmem:[%s312 + $0x20] sm:$0xff] %v321
                  %v323 = vld [vmem:[%s311 + $0x30] sm:$0xff]
                  %324 = vst [vmem:[%s312 + $0x28] sm:$0xff] %v323
                  %v325 = vld [vmem:[%s311 + $0x38] sm:$0xff]
                  %326 = vst [vmem:[%s312 + $0x30] sm:$0xff] %v325
                  %v327 = vld [vmem:[%s311 + $0x40] sm:$0xff]
                  %328 = vst [vmem:[%s312 + $0x38] sm:$0xff] %v327
                  %v329 = vld [vmem:[%s311 + $0x50] sm:$0xff]
                  %330 = vst [vmem:[%s312 + $0x40] sm:$0xff] %v329
                  %v331 = vld [vmem:[%s311 + $0x58] sm:$0xff]
                  %332 = vst [vmem:[%s312 + $0x48] sm:$0xff] %v331
                  %v333 = vld [vmem:[%s311 + $0x60] sm:$0xff]
                  %334 = vst [vmem:[%s312 + $0x50] sm:$0xff] %v333
                  %v335 = vld [vmem:[%s311 + $0x68] sm:$0xff]
                  %336 = vst [vmem:[%s312 + $0x58] sm:$0xff] %v335
                  %v337 = vld [vmem:[%s311 + $0x78] sm:$0xff]
                  %338 = vst [vmem:[%s312 + $0x60] sm:$0xff] %v337
                  %v339 = vld [vmem:[%s311 + $0x80] sm:$0xff]
                  %340 = vst [vmem:[%s312 + $0x68] sm:$0xff] %v339
                  %v341 = vld [vmem:[%s311 + $0x88] sm:$0xff]
                  %342 = vst [vmem:[%s312 + $0x70] sm:$0xff] %v341
                  %v343 = vld [vmem:[%s311 + $0x90] sm:$0xff]
                  %344 = vst [vmem:[%s312 + $0x78] sm:$0xff] %v343
                  %v345 = vld [vmem:[%s311 + $0xa0] sm:$0xff]
                  %346 = vst [vmem:[%s312 + $0x80] sm:$0xff] %v345
                  %v347 = vld [vmem:[%s311 + $0xa8] sm:$0xff]
                  %348 = vst [vmem:[%s312 + $0x88] sm:$0xff] %v347
                  %v349 = vld [vmem:[%s311 + $0xb0] sm:$0xff]
                  %350 = vst [vmem:[%s312 + $0x90] sm:$0xff] %v349
                  %v351 = vld [vmem:[%s311 + $0xb8] sm:$0xff]
                  %352 = vst [vmem:[%s312 + $0x98] sm:$0xff] %v351
                  %v353 = vld [vmem:[%s311 + $0xc8] sm:$0xff]
                  %354 = vst [vmem:[%s312 + $0xa0] sm:$0xff] %v353
                  %v355 = vld [vmem:[%s311 + $0xd0] sm:$0xff]
                  %356 = vst [vmem:[%s312 + $0xa8] sm:$0xff] %v355
                  %v357 = vld [vmem:[%s311 + $0xd8] sm:$0xff]
                  %358 = vst [vmem:[%s312 + $0xb0] sm:$0xff] %v357
                  %v359 = vld [vmem:[%s311 + $0xe0] sm:$0xff]
                  %360 = vst [vmem:[%s312 + $0xb8] sm:$0xff] %v359
                  %v361 = vld [vmem:[%s311 + $0xf0] sm:$0xff]
                  %362 = vst [vmem:[%s312 + $0xc0] sm:$0xff] %v361
                  %v363 = vld [vmem:[%s311 + $0xf8] sm:$0xff]
                  %364 = vst [vmem:[%s312 + $0xc8] sm:$0xff] %v363
                  %v365 = vld [vmem:[%s311 + $0x100] sm:$0xff]
                  %366 = vst [vmem:[%s312 + $0xd0] sm:$0xff] %v365
                  %v367 = vld [vmem:[%s311 + $0x108] sm:$0xff]
                  %368 = vst [vmem:[%s312 + $0xd8] sm:$0xff] %v367
                  %v369 = vld [vmem:[%s311 + $0x118] sm:$0xff]
                  %370 = vst [vmem:[%s312 + $0xe0] sm:$0xff] %v369
                  %v371 = vld [vmem:[%s311 + $0x120] sm:$0xff]
                  %372 = vst [vmem:[%s312 + $0xe8] sm:$0xff] %v371
                  %v373 = vld [vmem:[%s311 + $0x128] sm:$0xff]
                  %374 = vst [vmem:[%s312 + $0xf0] sm:$0xff] %v373
                  %v375 = vld [vmem:[%s311 + $0x130] sm:$0xff]
                  %376 = vst [vmem:[%s312 + $0xf8] sm:$0xff] %v375
                  %v377 = vld [vmem:[%s311 + $0x140] sm:$0xff]
                  %378 = vst [vmem:[%s312 + $0x100] sm:$0xff] %v377
                  %v379 = vld [vmem:[%s311 + $0x148] sm:$0xff]
                  %380 = vst [vmem:[%s312 + $0x108] sm:$0xff] %v379
                  %v381 = vld [vmem:[%s311 + $0x150] sm:$0xff]
                  %382 = vst [vmem:[%s312 + $0x110] sm:$0xff] %v381
                  %v383 = vld [vmem:[%s311 + $0x158] sm:$0xff]
                  %384 = vst [vmem:[%s312 + $0x118] sm:$0xff] %v383
                  %v385 = vld [vmem:[%s311 + $0x168] sm:$0xff]
                  %386 = vst [vmem:[%s312 + $0x120] sm:$0xff] %v385
                  %v387 = vld [vmem:[%s311 + $0x170] sm:$0xff]
                  %388 = vst [vmem:[%s312 + $0x128] sm:$0xff] %v387
                  %v389 = vld [vmem:[%s311 + $0x178] sm:$0xff]
                  %390 = vst [vmem:[%s312 + $0x130] sm:$0xff] %v389
                  %v391 = vld [vmem:[%s311 + $0x180] sm:$0xff]
                  %392 = vst [vmem:[%s312 + $0x138] sm:$0xff] %v391
                  %v393 = vld [vmem:[%s311 + $0x190] sm:$0xff]
                  %394 = vst [vmem:[%s312 + $0x140] sm:$0xff] %v393
                  %v395 = vld [vmem:[%s311 + $0x198] sm:$0xff]
                  %396 = vst [vmem:[%s312 + $0x148] sm:$0xff] %v395
                  %v397 = vld [vmem:[%s311 + $0x1a0] sm:$0xff]
                  %398 = vst [vmem:[%s312 + $0x150] sm:$0xff] %v397
                  %v399 = vld [vmem:[%s311 + $0x1a8] sm:$0xff]
                  %400 = vst [vmem:[%s312 + $0x158] sm:$0xff] %v399
                  %v401 = vld [vmem:[%s311 + $0x1b8] sm:$0xff]
                  %402 = vst [vmem:[%s312 + $0x160] sm:$0xff] %v401
                  %v403 = vld [vmem:[%s311 + $0x1c0] sm:$0xff]
                  %404 = vst [vmem:[%s312 + $0x168] sm:$0xff] %v403
                  %v405 = vld [vmem:[%s311 + $0x1c8] sm:$0xff]
                  %406 = vst [vmem:[%s312 + $0x170] sm:$0xff] %v405
                  %v407 = vld [vmem:[%s311 + $0x1d0] sm:$0xff]
                  %408 = vst [vmem:[%s312 + $0x178] sm:$0xff] %v407
                  %v409 = vld [vmem:[%s311 + $0x1e0] sm:$0xff]
                  %410 = vst [vmem:[%s312 + $0x180] sm:$0xff] %v409
                  %v411 = vld [vmem:[%s311 + $0x1e8] sm:$0xff]
                  %412 = vst [vmem:[%s312 + $0x188] sm:$0xff] %v411
                  %v413 = vld [vmem:[%s311 + $0x1f0] sm:$0xff]
                  %414 = vst [vmem:[%s312 + $0x190] sm:$0xff] %v413
                  %v415 = vld [vmem:[%s311 + $0x1f8] sm:$0xff]
                  %416 = vst [vmem:[%s312 + $0x198] sm:$0xff] %v415
                  %v417 = vld [vmem:[%s311 + $0x208] sm:$0xff]
                  %418 = vst [vmem:[%s312 + $0x1a0] sm:$0xff] %v417
                  %v419 = vld [vmem:[%s311 + $0x210] sm:$0xff]
                  %420 = vst [vmem:[%s312 + $0x1a8] sm:$0xff] %v419
                  %v421 = vld [vmem:[%s311 + $0x218] sm:$0xff]
                  %422 = vst [vmem:[%s312 + $0x1b0] sm:$0xff] %v421
                  %v423 = vld [vmem:[%s311 + $0x220] sm:$0xff]
                  %424 = vst [vmem:[%s312 + $0x1b8] sm:$0xff] %v423
                  %v425 = vld [vmem:[%s311 + $0x230] sm:$0xff]
                  %426 = vst [vmem:[%s312 + $0x1c0] sm:$0xff] %v425
                  %v427 = vld [vmem:[%s311 + $0x238] sm:$0xff]
                  %428 = vst [vmem:[%s312 + $0x1c8] sm:$0xff] %v427
                  %v429 = vld [vmem:[%s311 + $0x240] sm:$0xff]
                  %430 = vst [vmem:[%s312 + $0x1d0] sm:$0xff] %v429
                  %v431 = vld [vmem:[%s311 + $0x248] sm:$0xff]
                  %432 = vst [vmem:[%s312 + $0x1d8] sm:$0xff] %v431
                  %v433 = vld [vmem:[%s311 + $0x258] sm:$0xff]
                  %434 = vst [vmem:[%s312 + $0x1e0] sm:$0xff] %v433
                  %v435 = vld [vmem:[%s311 + $0x260] sm:$0xff]
                  %436 = vst [vmem:[%s312 + $0x1e8] sm:$0xff] %v435
                  %v437 = vld [vmem:[%s311 + $0x268] sm:$0xff]
                  %438 = vst [vmem:[%s312 + $0x1f0] sm:$0xff] %v437
                  %v439 = vld [vmem:[%s311 + $0x270] sm:$0xff]
                  %440 = vst [vmem:[%s312 + $0x1f8] sm:$0xff] %v439
                  %s441 = sadd.s32 1, %s310
                  %p442 = scmp.ge.s32.totalorder %s441, %s301
                  %s443 = scalar_select %p442, 0, %s441
                  %s444 = smul.u32 %s443, 32
                  %s445 = smul.u32 %s443, 32
                  %s446 = scalar_lea.vmem %s242, %s444
                  %s447 = scalar_lea.vmem %s232, %s445 [#allocation2]
                $region64: #{conv_forward.1} parent=58 // loop_footer
                  %s307 = sadd.s32 %s305, 1
                $region65: #{conv_forward.1} parent=58 // loop_footer_branch
                  %304 = sbr.rel target = $region61
                $region66: #{conv_forward.1} parent=58 // loop_exit
                  _
                %s448 = sshrl.u32 %s300, 2
                %s449 = sand.u32 %s300, 3
                %s450 = smul.u32 %s448, 4
                %s451 = smul.u32 128, %s450
                %s452 = sshra.s32 %s451, 4
                %s453 = scalar_lea.vmem %s242, %s452
                %s454 = smul.u32 128, %s450
                %s455 = sshra.s32 %s454, 4
                %s456 = scalar_lea.vmem %s232, %s455 [#allocation2]
                // While loop
                $region67: #{conv_forward.1} parent=58 // loop_pre_header
                  _
                $region68: #{conv_forward.1} parent=58 // loop_header
                  %s460 = sphi 0, %s462
                  %p461 = scmp.ge.s32.totalorder %s460, %s449
                  %s465 = sphi 0, %s502
                  %s466 = sphi %s453, %s505
                  %s467 = sphi %s456, %s506
                $region69: #{conv_forward.1} parent=58 // loop_header_branch
                  %464 = sbr.rel (%p461) target = $region73
                $region70: #{conv_forward.1} parent=58 // loop_body
                  %v468 = vld [vmem:[%s466] sm:$0xff]
                  %469 = vst [vmem:[%s467] sm:$0xff] %v468
                  %v470 = vld [vmem:[%s466 + $0x28] sm:$0xff]
                  %471 = vst [vmem:[%s467 + $0x20] sm:$0xff] %v470
                  %v472 = vld [vmem:[%s466 + $0x50] sm:$0xff]
                  %473 = vst [vmem:[%s467 + $0x40] sm:$0xff] %v472
                  %v474 = vld [vmem:[%s466 + $0x78] sm:$0xff]
                  %475 = vst [vmem:[%s467 + $0x60] sm:$0xff] %v474
                  %v476 = vld [vmem:[%s466 + $0xa0] sm:$0xff]
                  %477 = vst [vmem:[%s467 + $0x80] sm:$0xff] %v476
                  %v478 = vld [vmem:[%s466 + $0xc8] sm:$0xff]
                  %479 = vst [vmem:[%s467 + $0xa0] sm:$0xff] %v478
                  %v480 = vld [vmem:[%s466 + $0xf0] sm:$0xff]
                  %481 = vst [vmem:[%s467 + $0xc0] sm:$0xff] %v480
                  %v482 = vld [vmem:[%s466 + $0x118] sm:$0xff]
                  %483 = vst [vmem:[%s467 + $0xe0] sm:$0xff] %v482
                  %v484 = vld [vmem:[%s466 + $0x140] sm:$0xff]
                  %485 = vst [vmem:[%s467 + $0x100] sm:$0xff] %v484
                  %v486 = vld [vmem:[%s466 + $0x168] sm:$0xff]
                  %487 = vst [vmem:[%s467 + $0x120] sm:$0xff] %v486
                  %v488 = vld [vmem:[%s466 + $0x190] sm:$0xff]
                  %489 = vst [vmem:[%s467 + $0x140] sm:$0xff] %v488
                  %v490 = vld [vmem:[%s466 + $0x1b8] sm:$0xff]
                  %491 = vst [vmem:[%s467 + $0x160] sm:$0xff] %v490
                  %v492 = vld [vmem:[%s466 + $0x1e0] sm:$0xff]
                  %493 = vst [vmem:[%s467 + $0x180] sm:$0xff] %v492
                  %v494 = vld [vmem:[%s466 + $0x208] sm:$0xff]
                  %495 = vst [vmem:[%s467 + $0x1a0] sm:$0xff] %v494
                  %v496 = vld [vmem:[%s466 + $0x230] sm:$0xff]
                  %497 = vst [vmem:[%s467 + $0x1c0] sm:$0xff] %v496
                  %v498 = vld [vmem:[%s466 + $0x258] sm:$0xff]
                  %499 = vst [vmem:[%s467 + $0x1e0] sm:$0xff] %v498
                  %s500 = sadd.s32 1, %s465
                  %p501 = scmp.ge.s32.totalorder %s500, %s449
                  %s502 = scalar_select %p501, 0, %s500
                  %s503 = smul.u32 %s502, 8
                  %s504 = smul.u32 %s502, 8
                  %s505 = scalar_lea.vmem %s453, %s503
                  %s506 = scalar_lea.vmem %s456, %s504 [#allocation2]
                $region71: #{conv_forward.1} parent=58 // loop_footer
                  %s462 = sadd.s32 %s460, 1
                $region72: #{conv_forward.1} parent=58 // loop_footer_branch
                  %459 = sbr.rel target = $region68
                $region73: #{conv_forward.1} parent=58 // loop_exit
                  _
              $region59: #{conv_forward.1} parent=43 // pred_fallthru
                _
              %p507 = pneg %p296
              // Predicated region
              $region74: #{conv_forward.1} parent=43 // pred_check
                _
              $region75: #{conv_forward.1} parent=43 // pred_check_branch
                %509 = sbr.rel (%p296) target = $region77
              $region76: #{conv_forward.1} parent=43 // pred_region
                %s510 = sand.u32 %s243, 7
                %s511 = ssub.s32 %s243, %s510
                %s512 = scalar_lea.vmem %s242, %s511
                %s513 = ssub.s32 %s243, %s510
                %s514 = scalar_lea.vmem %s232, %s513 [#allocation2]
                %s515 = sshrl.u32 %s243, 3
                %s516 = sshrl.u32 %s515, 2
                // While loop
                $region78: #{conv_forward.1} parent=76 // loop_pre_header
                  _
                $region79: #{conv_forward.1} parent=76 // loop_header
                  %s520 = sphi 0, %s522
                  %p521 = scmp.ge.s32.totalorder %s520, %s516
                  %s525 = sphi 0, %s658
                  %s526 = sphi %s242, %s661
                  %s527 = sphi %s232, %s662
                $region80: #{conv_forward.1} parent=76 // loop_header_branch
                  %524 = sbr.rel (%p521) target = $region84
                $region81: #{conv_forward.1} parent=76 // loop_body
                  %v528 = vld [vmem:[%s526] sm:$0xff]
                  %529 = vst [vmem:[%s527] sm:$0xff] %v528
                  %v530 = vld [vmem:[%s526 + $0x8] sm:$0xff]
                  %531 = vst [vmem:[%s527 + $0x8] sm:$0xff] %v530
                  %v532 = vld [vmem:[%s526 + $0x10] sm:$0xff]
                  %533 = vst [vmem:[%s527 + $0x10] sm:$0xff] %v532
                  %v534 = vld [vmem:[%s526 + $0x18] sm:$0xff]
                  %535 = vst [vmem:[%s527 + $0x18] sm:$0xff] %v534
                  %v536 = vld [vmem:[%s526 + $0x28] sm:$0xff]
                  %537 = vst [vmem:[%s527 + $0x20] sm:$0xff] %v536
                  %v538 = vld [vmem:[%s526 + $0x30] sm:$0xff]
                  %539 = vst [vmem:[%s527 + $0x28] sm:$0xff] %v538
                  %v540 = vld [vmem:[%s526 + $0x38] sm:$0xff]
                  %541 = vst [vmem:[%s527 + $0x30] sm:$0xff] %v540
                  %v542 = vld [vmem:[%s526 + $0x40] sm:$0xff]
                  %543 = vst [vmem:[%s527 + $0x38] sm:$0xff] %v542
                  %v544 = vld [vmem:[%s526 + $0x50] sm:$0xff]
                  %545 = vst [vmem:[%s527 + $0x40] sm:$0xff] %v544
                  %v546 = vld [vmem:[%s526 + $0x58] sm:$0xff]
                  %547 = vst [vmem:[%s527 + $0x48] sm:$0xff] %v546
                  %v548 = vld [vmem:[%s526 + $0x60] sm:$0xff]
                  %549 = vst [vmem:[%s527 + $0x50] sm:$0xff] %v548
                  %v550 = vld [vmem:[%s526 + $0x68] sm:$0xff]
                  %551 = vst [vmem:[%s527 + $0x58] sm:$0xff] %v550
                  %v552 = vld [vmem:[%s526 + $0x78] sm:$0xff]
                  %553 = vst [vmem:[%s527 + $0x60] sm:$0xff] %v552
                  %v554 = vld [vmem:[%s526 + $0x80] sm:$0xff]
                  %555 = vst [vmem:[%s527 + $0x68] sm:$0xff] %v554
                  %v556 = vld [vmem:[%s526 + $0x88] sm:$0xff]
                  %557 = vst [vmem:[%s527 + $0x70] sm:$0xff] %v556
                  %v558 = vld [vmem:[%s526 + $0x90] sm:$0xff]
                  %559 = vst [vmem:[%s527 + $0x78] sm:$0xff] %v558
                  %v560 = vld [vmem:[%s526 + $0xa0] sm:$0xff]
                  %561 = vst [vmem:[%s527 + $0x80] sm:$0xff] %v560
                  %v562 = vld [vmem:[%s526 + $0xa8] sm:$0xff]
                  %563 = vst [vmem:[%s527 + $0x88] sm:$0xff] %v562
                  %v564 = vld [vmem:[%s526 + $0xb0] sm:$0xff]
                  %565 = vst [vmem:[%s527 + $0x90] sm:$0xff] %v564
                  %v566 = vld [vmem:[%s526 + $0xb8] sm:$0xff]
                  %567 = vst [vmem:[%s527 + $0x98] sm:$0xff] %v566
                  %v568 = vld [vmem:[%s526 + $0xc8] sm:$0xff]
                  %569 = vst [vmem:[%s527 + $0xa0] sm:$0xff] %v568
                  %v570 = vld [vmem:[%s526 + $0xd0] sm:$0xff]
                  %571 = vst [vmem:[%s527 + $0xa8] sm:$0xff] %v570
                  %v572 = vld [vmem:[%s526 + $0xd8] sm:$0xff]
                  %573 = vst [vmem:[%s527 + $0xb0] sm:$0xff] %v572
                  %v574 = vld [vmem:[%s526 + $0xe0] sm:$0xff]
                  %575 = vst [vmem:[%s527 + $0xb8] sm:$0xff] %v574
                  %v576 = vld [vmem:[%s526 + $0xf0] sm:$0xff]
                  %577 = vst [vmem:[%s527 + $0xc0] sm:$0xff] %v576
                  %v578 = vld [vmem:[%s526 + $0xf8] sm:$0xff]
                  %579 = vst [vmem:[%s527 + $0xc8] sm:$0xff] %v578
                  %v580 = vld [vmem:[%s526 + $0x100] sm:$0xff]
                  %581 = vst [vmem:[%s527 + $0xd0] sm:$0xff] %v580
                  %v582 = vld [vmem:[%s526 + $0x108] sm:$0xff]
                  %583 = vst [vmem:[%s527 + $0xd8] sm:$0xff] %v582
                  %v584 = vld [vmem:[%s526 + $0x118] sm:$0xff]
                  %585 = vst [vmem:[%s527 + $0xe0] sm:$0xff] %v584
                  %v586 = vld [vmem:[%s526 + $0x120] sm:$0xff]
                  %587 = vst [vmem:[%s527 + $0xe8] sm:$0xff] %v586
                  %v588 = vld [vmem:[%s526 + $0x128] sm:$0xff]
                  %589 = vst [vmem:[%s527 + $0xf0] sm:$0xff] %v588
                  %v590 = vld [vmem:[%s526 + $0x130] sm:$0xff]
                  %591 = vst [vmem:[%s527 + $0xf8] sm:$0xff] %v590
                  %v592 = vld [vmem:[%s526 + $0x140] sm:$0xff]
                  %593 = vst [vmem:[%s527 + $0x100] sm:$0xff] %v592
                  %v594 = vld [vmem:[%s526 + $0x148] sm:$0xff]
                  %595 = vst [vmem:[%s527 + $0x108] sm:$0xff] %v594
                  %v596 = vld [vmem:[%s526 + $0x150] sm:$0xff]
                  %597 = vst [vmem:[%s527 + $0x110] sm:$0xff] %v596
                  %v598 = vld [vmem:[%s526 + $0x158] sm:$0xff]
                  %599 = vst [vmem:[%s527 + $0x118] sm:$0xff] %v598
                  %v600 = vld [vmem:[%s526 + $0x168] sm:$0xff]
                  %601 = vst [vmem:[%s527 + $0x120] sm:$0xff] %v600
                  %v602 = vld [vmem:[%s526 + $0x170] sm:$0xff]
                  %603 = vst [vmem:[%s527 + $0x128] sm:$0xff] %v602
                  %v604 = vld [vmem:[%s526 + $0x178] sm:$0xff]
                  %605 = vst [vmem:[%s527 + $0x130] sm:$0xff] %v604
                  %v606 = vld [vmem:[%s526 + $0x180] sm:$0xff]
                  %607 = vst [vmem:[%s527 + $0x138] sm:$0xff] %v606
                  %v608 = vld [vmem:[%s526 + $0x190] sm:$0xff]
                  %609 = vst [vmem:[%s527 + $0x140] sm:$0xff] %v608
                  %v610 = vld [vmem:[%s526 + $0x198] sm:$0xff]
                  %611 = vst [vmem:[%s527 + $0x148] sm:$0xff] %v610
                  %v612 = vld [vmem:[%s526 + $0x1a0] sm:$0xff]
                  %613 = vst [vmem:[%s527 + $0x150] sm:$0xff] %v612
                  %v614 = vld [vmem:[%s526 + $0x1a8] sm:$0xff]
                  %615 = vst [vmem:[%s527 + $0x158] sm:$0xff] %v614
                  %v616 = vld [vmem:[%s526 + $0x1b8] sm:$0xff]
                  %617 = vst [vmem:[%s527 + $0x160] sm:$0xff] %v616
                  %v618 = vld [vmem:[%s526 + $0x1c0] sm:$0xff]
                  %619 = vst [vmem:[%s527 + $0x168] sm:$0xff] %v618
                  %v620 = vld [vmem:[%s526 + $0x1c8] sm:$0xff]
                  %621 = vst [vmem:[%s527 + $0x170] sm:$0xff] %v620
                  %v622 = vld [vmem:[%s526 + $0x1d0] sm:$0xff]
                  %623 = vst [vmem:[%s527 + $0x178] sm:$0xff] %v622
                  %v624 = vld [vmem:[%s526 + $0x1e0] sm:$0xff]
                  %625 = vst [vmem:[%s527 + $0x180] sm:$0xff] %v624
                  %v626 = vld [vmem:[%s526 + $0x1e8] sm:$0xff]
                  %627 = vst [vmem:[%s527 + $0x188] sm:$0xff] %v626
                  %v628 = vld [vmem:[%s526 + $0x1f0] sm:$0xff]
                  %629 = vst [vmem:[%s527 + $0x190] sm:$0xff] %v628
                  %v630 = vld [vmem:[%s526 + $0x1f8] sm:$0xff]
                  %631 = vst [vmem:[%s527 + $0x198] sm:$0xff] %v630
                  %v632 = vld [vmem:[%s526 + $0x208] sm:$0xff]
                  %633 = vst [vmem:[%s527 + $0x1a0] sm:$0xff] %v632
                  %v634 = vld [vmem:[%s526 + $0x210] sm:$0xff]
                  %635 = vst [vmem:[%s527 + $0x1a8] sm:$0xff] %v634
                  %v636 = vld [vmem:[%s526 + $0x218] sm:$0xff]
                  %637 = vst [vmem:[%s527 + $0x1b0] sm:$0xff] %v636
                  %v638 = vld [vmem:[%s526 + $0x220] sm:$0xff]
                  %639 = vst [vmem:[%s527 + $0x1b8] sm:$0xff] %v638
                  %v640 = vld [vmem:[%s526 + $0x230] sm:$0xff]
                  %641 = vst [vmem:[%s527 + $0x1c0] sm:$0xff] %v640
                  %v642 = vld [vmem:[%s526 + $0x238] sm:$0xff]
                  %643 = vst [vmem:[%s527 + $0x1c8] sm:$0xff] %v642
                  %v644 = vld [vmem:[%s526 + $0x240] sm:$0xff]
                  %645 = vst [vmem:[%s527 + $0x1d0] sm:$0xff] %v644
                  %v646 = vld [vmem:[%s526 + $0x248] sm:$0xff]
                  %647 = vst [vmem:[%s527 + $0x1d8] sm:$0xff] %v646
                  %v648 = vld [vmem:[%s526 + $0x258] sm:$0xff]
                  %649 = vst [vmem:[%s527 + $0x1e0] sm:$0xff] %v648
                  %v650 = vld [vmem:[%s526 + $0x260] sm:$0xff]
                  %651 = vst [vmem:[%s527 + $0x1e8] sm:$0xff] %v650
                  %v652 = vld [vmem:[%s526 + $0x268] sm:$0xff]
                  %653 = vst [vmem:[%s527 + $0x1f0] sm:$0xff] %v652
                  %v654 = vld [vmem:[%s526 + $0x270] sm:$0xff]
                  %655 = vst [vmem:[%s527 + $0x1f8] sm:$0xff] %v654
                  %s656 = sadd.s32 1, %s525
                  %p657 = scmp.ge.s32.totalorder %s656, %s516
                  %s658 = scalar_select %p657, 0, %s656
                  %s659 = smul.u32 %s658, 32
                  %s660 = smul.u32 %s658, 32
                  %s661 = scalar_lea.vmem %s242, %s659
                  %s662 = scalar_lea.vmem %s232, %s660 [#allocation2]
                $region82: #{conv_forward.1} parent=76 // loop_footer
                  %s522 = sadd.s32 %s520, 1
                $region83: #{conv_forward.1} parent=76 // loop_footer_branch
                  %519 = sbr.rel target = $region79
                $region84: #{conv_forward.1} parent=76 // loop_exit
                  _
                %s663 = sshrl.u32 %s515, 2
                %s664 = sand.u32 %s515, 3
                %s665 = smul.u32 %s663, 4
                %s666 = smul.u32 128, %s665
                %s667 = sshra.s32 %s666, 4
                %s668 = scalar_lea.vmem %s242, %s667
                %s669 = smul.u32 128, %s665
                %s670 = sshra.s32 %s669, 4
                %s671 = scalar_lea.vmem %s232, %s670 [#allocation2]
                // While loop
                $region85: #{conv_forward.1} parent=76 // loop_pre_header
                  _
                $region86: #{conv_forward.1} parent=76 // loop_header
                  %s675 = sphi 0, %s677
                  %p676 = scmp.ge.s32.totalorder %s675, %s664
                  %s680 = sphi 0, %s717
                  %s681 = sphi %s668, %s720
                  %s682 = sphi %s671, %s721
                $region87: #{conv_forward.1} parent=76 // loop_header_branch
                  %679 = sbr.rel (%p676) target = $region91
                $region88: #{conv_forward.1} parent=76 // loop_body
                  %v683 = vld [vmem:[%s681] sm:$0xff]
                  %684 = vst [vmem:[%s682] sm:$0xff] %v683
                  %v685 = vld [vmem:[%s681 + $0x28] sm:$0xff]
                  %686 = vst [vmem:[%s682 + $0x20] sm:$0xff] %v685
                  %v687 = vld [vmem:[%s681 + $0x50] sm:$0xff]
                  %688 = vst [vmem:[%s682 + $0x40] sm:$0xff] %v687
                  %v689 = vld [vmem:[%s681 + $0x78] sm:$0xff]
                  %690 = vst [vmem:[%s682 + $0x60] sm:$0xff] %v689
                  %v691 = vld [vmem:[%s681 + $0xa0] sm:$0xff]
                  %692 = vst [vmem:[%s682 + $0x80] sm:$0xff] %v691
                  %v693 = vld [vmem:[%s681 + $0xc8] sm:$0xff]
                  %694 = vst [vmem:[%s682 + $0xa0] sm:$0xff] %v693
                  %v695 = vld [vmem:[%s681 + $0xf0] sm:$0xff]
                  %696 = vst [vmem:[%s682 + $0xc0] sm:$0xff] %v695
                  %v697 = vld [vmem:[%s681 + $0x118] sm:$0xff]
                  %698 = vst [vmem:[%s682 + $0xe0] sm:$0xff] %v697
                  %v699 = vld [vmem:[%s681 + $0x140] sm:$0xff]
                  %700 = vst [vmem:[%s682 + $0x100] sm:$0xff] %v699
                  %v701 = vld [vmem:[%s681 + $0x168] sm:$0xff]
                  %702 = vst [vmem:[%s682 + $0x120] sm:$0xff] %v701
                  %v703 = vld [vmem:[%s681 + $0x190] sm:$0xff]
                  %704 = vst [vmem:[%s682 + $0x140] sm:$0xff] %v703
                  %v705 = vld [vmem:[%s681 + $0x1b8] sm:$0xff]
                  %706 = vst [vmem:[%s682 + $0x160] sm:$0xff] %v705
                  %v707 = vld [vmem:[%s681 + $0x1e0] sm:$0xff]
                  %708 = vst [vmem:[%s682 + $0x180] sm:$0xff] %v707
                  %v709 = vld [vmem:[%s681 + $0x208] sm:$0xff]
                  %710 = vst [vmem:[%s682 + $0x1a0] sm:$0xff] %v709
                  %v711 = vld [vmem:[%s681 + $0x230] sm:$0xff]
                  %712 = vst [vmem:[%s682 + $0x1c0] sm:$0xff] %v711
                  %v713 = vld [vmem:[%s681 + $0x258] sm:$0xff]
                  %714 = vst [vmem:[%s682 + $0x1e0] sm:$0xff] %v713
                  %s715 = sadd.s32 1, %s680
                  %p716 = scmp.ge.s32.totalorder %s715, %s664
                  %s717 = scalar_select %p716, 0, %s715
                  %s718 = smul.u32 %s717, 8
                  %s719 = smul.u32 %s717, 8
                  %s720 = scalar_lea.vmem %s668, %s718
                  %s721 = scalar_lea.vmem %s671, %s719 [#allocation2]
                $region89: #{conv_forward.1} parent=76 // loop_footer
                  %s677 = sadd.s32 %s675, 1
                $region90: #{conv_forward.1} parent=76 // loop_footer_branch
                  %674 = sbr.rel target = $region86
                $region91: #{conv_forward.1} parent=76 // loop_exit
                  _
                %s722 = sshllo.u32 0, %s510
                loop: start=0, step=1, limit=1
                $region92: #{conv_forward.1} parent=76 // loop_pre_header
                  _
                $region93: #{conv_forward.1} parent=76 // loop_header
                  %s724 = sphi 0, %s728
                  %p725 = scmp.ge.s32.totalorder %s724, 1
                  %s729 = sphi %s512, %s512
                  %s730 = sphi %s514, %s514
                $region94: #{conv_forward.1} parent=76 // loop_header_branch
                  %727 = sbr.rel (%p725) target = $region98
                $region95: #{conv_forward.1} parent=76 // loop_body
                  %v731 = vld [vmem:[%s729] sm:%s722]
                  %732 = vst [vmem:[%s730] sm:%s722] %v731
                  %v733 = vld [vmem:[%s729 + $0x28] sm:%s722]
                  %734 = vst [vmem:[%s730 + $0x20] sm:%s722] %v733
                  %v735 = vld [vmem:[%s729 + $0x50] sm:%s722]
                  %736 = vst [vmem:[%s730 + $0x40] sm:%s722] %v735
                  %v737 = vld [vmem:[%s729 + $0x78] sm:%s722]
                  %738 = vst [vmem:[%s730 + $0x60] sm:%s722] %v737
                  %v739 = vld [vmem:[%s729 + $0xa0] sm:%s722]
                  %740 = vst [vmem:[%s730 + $0x80] sm:%s722] %v739
                  %v741 = vld [vmem:[%s729 + $0xc8] sm:%s722]
                  %742 = vst [vmem:[%s730 + $0xa0] sm:%s722] %v741
                  %v743 = vld [vmem:[%s729 + $0xf0] sm:%s722]
                  %744 = vst [vmem:[%s730 + $0xc0] sm:%s722] %v743
                  %v745 = vld [vmem:[%s729 + $0x118] sm:%s722]
                  %746 = vst [vmem:[%s730 + $0xe0] sm:%s722] %v745
                  %v747 = vld [vmem:[%s729 + $0x140] sm:%s722]
                  %748 = vst [vmem:[%s730 + $0x100] sm:%s722] %v747
                  %v749 = vld [vmem:[%s729 + $0x168] sm:%s722]
                  %750 = vst [vmem:[%s730 + $0x120] sm:%s722] %v749
                  %v751 = vld [vmem:[%s729 + $0x190] sm:%s722]
                  %752 = vst [vmem:[%s730 + $0x140] sm:%s722] %v751
                  %v753 = vld [vmem:[%s729 + $0x1b8] sm:%s722]
                  %754 = vst [vmem:[%s730 + $0x160] sm:%s722] %v753
                  %v755 = vld [vmem:[%s729 + $0x1e0] sm:%s722]
                  %756 = vst [vmem:[%s730 + $0x180] sm:%s722] %v755
                  %v757 = vld [vmem:[%s729 + $0x208] sm:%s722]
                  %758 = vst [vmem:[%s730 + $0x1a0] sm:%s722] %v757
                  %v759 = vld [vmem:[%s729 + $0x230] sm:%s722]
                  %760 = vst [vmem:[%s730 + $0x1c0] sm:%s722] %v759
                  %v761 = vld [vmem:[%s729 + $0x258] sm:%s722]
                  %762 = vst [vmem:[%s730 + $0x1e0] sm:%s722] %v761
                $region96: #{conv_forward.1} parent=76 // loop_footer
                  %s728 = sadd.s32 1, %s724
                $region97: #{conv_forward.1} parent=76 // loop_footer_branch
                  %723 = sbr.rel target = $region93
                $region98: #{conv_forward.1} parent=76 // loop_exit
                  _
              $region77: #{conv_forward.1} parent=43 // pred_fallthru
                _
            $region44: #{conv_forward.1} parent=39 // pred_fallthru
              _
            // Predicated region
            $region45: #{conv_forward.1} parent=39 // pred_check
              %p251 = pneg %p247
            $region46: #{conv_forward.1} parent=39 // pred_check_branch
              %253 = sbr.rel (%p251) target = $region48
            $region47: #{conv_forward.1} parent=39 // pred_region
              %s254 = sshllo.u32 0, %s243
              loop: start=0, step=1, limit=1
              $region49: #{conv_forward.1} parent=47 // loop_pre_header
                _
              $region50: #{conv_forward.1} parent=47 // loop_header
                %s256 = sphi 0, %s260
                %p257 = scmp.ge.s32.totalorder %s256, 1
                %s261 = sphi %s242, %s242
                %s262 = sphi %s232, %s232
              $region51: #{conv_forward.1} parent=47 // loop_header_branch
                %259 = sbr.rel (%p257) target = $region55
              $region52: #{conv_forward.1} parent=47 // loop_body
                %v263 = vld [vmem:[%s261] sm:%s254]
                %264 = vst [vmem:[%s262] sm:%s254] %v263
                %v265 = vld [vmem:[%s261 + $0x28] sm:%s254]
                %266 = vst [vmem:[%s262 + $0x20] sm:%s254] %v265
                %v267 = vld [vmem:[%s261 + $0x50] sm:%s254]
                %268 = vst [vmem:[%s262 + $0x40] sm:%s254] %v267
                %v269 = vld [vmem:[%s261 + $0x78] sm:%s254]
                %270 = vst [vmem:[%s262 + $0x60] sm:%s254] %v269
                %v271 = vld [vmem:[%s261 + $0xa0] sm:%s254]
                %272 = vst [vmem:[%s262 + $0x80] sm:%s254] %v271
                %v273 = vld [vmem:[%s261 + $0xc8] sm:%s254]
                %274 = vst [vmem:[%s262 + $0xa0] sm:%s254] %v273
                %v275 = vld [vmem:[%s261 + $0xf0] sm:%s254]
                %276 = vst [vmem:[%s262 + $0xc0] sm:%s254] %v275
                %v277 = vld [vmem:[%s261 + $0x118] sm:%s254]
                %278 = vst [vmem:[%s262 + $0xe0] sm:%s254] %v277
                %v279 = vld [vmem:[%s261 + $0x140] sm:%s254]
                %280 = vst [vmem:[%s262 + $0x100] sm:%s254] %v279
                %v281 = vld [vmem:[%s261 + $0x168] sm:%s254]
                %282 = vst [vmem:[%s262 + $0x120] sm:%s254] %v281
                %v283 = vld [vmem:[%s261 + $0x190] sm:%s254]
                %284 = vst [vmem:[%s262 + $0x140] sm:%s254] %v283
                %v285 = vld [vmem:[%s261 + $0x1b8] sm:%s254]
                %286 = vst [vmem:[%s262 + $0x160] sm:%s254] %v285
                %v287 = vld [vmem:[%s261 + $0x1e0] sm:%s254]
                %288 = vst [vmem:[%s262 + $0x180] sm:%s254] %v287
                %v289 = vld [vmem:[%s261 + $0x208] sm:%s254]
                %290 = vst [vmem:[%s262 + $0x1a0] sm:%s254] %v289
                %v291 = vld [vmem:[%s261 + $0x230] sm:%s254]
                %292 = vst [vmem:[%s262 + $0x1c0] sm:%s254] %v291
                %v293 = vld [vmem:[%s261 + $0x258] sm:%s254]
                %294 = vst [vmem:[%s262 + $0x1e0] sm:%s254] %v293
              $region53: #{conv_forward.1} parent=47 // loop_footer
                %s260 = sadd.s32 1, %s256
              $region54: #{conv_forward.1} parent=47 // loop_footer_branch
                %255 = sbr.rel target = $region50
              $region55: #{conv_forward.1} parent=47 // loop_exit
                _
            $region48: #{conv_forward.1} parent=39 // pred_fallthru
              _
          $region40: #{conv_forward.1} parent=35 // pred_fallthru
            _
          %763 = vnop
        $region36: #{conv_forward.1} parent=31 // pred_fallthru
          _
        // Predicated region
        $region99: #{conv_forward.1} parent=31 // pred_check
          %p764 = pneg %p77
        $region100: #{conv_forward.1} parent=31 // pred_check_branch
          %766 = sbr.rel (%p764) target = $region102
        $region101: #{conv_forward.1} parent=31 // pred_region
          %s767 = sand.u32 %s67, 1
          %s768 = sand.u32 %s67, 1
          %s769 = smul.addr %s768, 128
          %s770 = scalar_lea.vmem [#allocation3], %s769
          %s771 = smul.u32 8, %s23
          %s772 = ssub.s32 10, %s771
          %p773 = scmp.lt.s32.totalorder %s772, 8
          %s774 = scalar_select %p773, %s772, 8
          %s775 = smul.u32 256, %s774
          %p776 = scmp.ne.s32.totalorder 0, %s775
          %s777 = smul.addr %s22, 80
          %s778 = sadd.s32 %s771, %s777
          %s779 = smul.addr %s778, 2
          %s780 = scalar_lea.vmem %s1, %s779
          %s781 = smul.u32 %s774, 2
          // Predicated region
          $region103: #{conv_forward.1} parent=101 // pred_check
            %p782 = pneg %p776
          $region104: #{conv_forward.1} parent=101 // pred_check_branch
            %784 = sbr.rel (%p782) target = $region106
          $region105: #{conv_forward.1} parent=101 // pred_region
            %p785 = scmp.lt.u32.totalorder %s781, 8
            %p786 = pneg %p785
            // Predicated region
            $region107: #{conv_forward.1} parent=105 // pred_check
              _
            $region108: #{conv_forward.1} parent=105 // pred_check_branch
              %788 = sbr.rel (%p785) target = $region110
            $region109: #{conv_forward.1} parent=105 // pred_region
              %s817 = sand.u32 %s781, 7
              %p818 = scmp.eq.s32.totalorder %s817, 0
              // Predicated region
              $region122: #{conv_forward.1} parent=109 // pred_check
                %p819 = pneg %p818
              $region123: #{conv_forward.1} parent=109 // pred_check_branch
                %821 = sbr.rel (%p819) target = $region125
              $region124: #{conv_forward.1} parent=109 // pred_region
                %s822 = sshrl.u32 %s781, 3
                %s823 = sshrl.u32 %s822, 3
                // While loop
                $region126: #{conv_forward.1} parent=124 // loop_pre_header
                  _
                $region127: #{conv_forward.1} parent=124 // loop_header
                  %s827 = sphi 0, %s829
                  %p828 = scmp.ge.s32.totalorder %s827, %s823
                  %s832 = sphi 0, %s965
                  %s833 = sphi %s780, %s968
                  %s834 = sphi %s770, %s969
                $region128: #{conv_forward.1} parent=124 // loop_header_branch
                  %831 = sbr.rel (%p828) target = $region132
                $region129: #{conv_forward.1} parent=124 // loop_body
                  %v835 = vld [vmem:[%s833] sm:$0xff]
                  %836 = vst [vmem:[%s834] sm:$0xff] %v835
                  %v837 = vld [vmem:[%s833 + $0x8] sm:$0xff]
                  %838 = vst [vmem:[%s834 + $0x8] sm:$0xff] %v837
                  %v839 = vld [vmem:[%s833 + $0x10] sm:$0xff]
                  %840 = vst [vmem:[%s834 + $0x10] sm:$0xff] %v839
                  %v841 = vld [vmem:[%s833 + $0x18] sm:$0xff]
                  %842 = vst [vmem:[%s834 + $0x18] sm:$0xff] %v841
                  %v843 = vld [vmem:[%s833 + $0x20] sm:$0xff]
                  %844 = vst [vmem:[%s834 + $0x20] sm:$0xff] %v843
                  %v845 = vld [vmem:[%s833 + $0x28] sm:$0xff]
                  %846 = vst [vmem:[%s834 + $0x28] sm:$0xff] %v845
                  %v847 = vld [vmem:[%s833 + $0x30] sm:$0xff]
                  %848 = vst [vmem:[%s834 + $0x30] sm:$0xff] %v847
                  %v849 = vld [vmem:[%s833 + $0x38] sm:$0xff]
                  %850 = vst [vmem:[%s834 + $0x38] sm:$0xff] %v849
                  %v851 = vld [vmem:[%s833 + $0x14] sm:$0xff]
                  %852 = vst [vmem:[%s834 + $0x10] sm:$0xff] %v851
                  %v853 = vld [vmem:[%s833 + $0x1c] sm:$0xff]
                  %854 = vst [vmem:[%s834 + $0x18] sm:$0xff] %v853
                  %v855 = vld [vmem:[%s833 + $0x24] sm:$0xff]
                  %856 = vst [vmem:[%s834 + $0x20] sm:$0xff] %v855
                  %v857 = vld [vmem:[%s833 + $0x2c] sm:$0xff]
                  %858 = vst [vmem:[%s834 + $0x28] sm:$0xff] %v857
                  %v859 = vld [vmem:[%s833 + $0x34] sm:$0xff]
                  %860 = vst [vmem:[%s834 + $0x30] sm:$0xff] %v859
                  %v861 = vld [vmem:[%s833 + $0x3c] sm:$0xff]
                  %862 = vst [vmem:[%s834 + $0x38] sm:$0xff] %v861
                  %v863 = vld [vmem:[%s833 + $0x44] sm:$0xff]
                  %864 = vst [vmem:[%s834 + $0x40] sm:$0xff] %v863
                  %v865 = vld [vmem:[%s833 + $0x4c] sm:$0xff]
                  %866 = vst [vmem:[%s834 + $0x48] sm:$0xff] %v865
                  %v867 = vld [vmem:[%s833 + $0x28] sm:$0xff]
                  %868 = vst [vmem:[%s834 + $0x20] sm:$0xff] %v867
                  %v869 = vld [vmem:[%s833 + $0x30] sm:$0xff]
                  %870 = vst [vmem:[%s834 + $0x28] sm:$0xff] %v869
                  %v871 = vld [vmem:[%s833 + $0x38] sm:$0xff]
                  %872 = vst [vmem:[%s834 + $0x30] sm:$0xff] %v871
                  %v873 = vld [vmem:[%s833 + $0x40] sm:$0xff]
                  %874 = vst [vmem:[%s834 + $0x38] sm:$0xff] %v873
                  %v875 = vld [vmem:[%s833 + $0x48] sm:$0xff]
                  %876 = vst [vmem:[%s834 + $0x40] sm:$0xff] %v875
                  %v877 = vld [vmem:[%s833 + $0x50] sm:$0xff]
                  %878 = vst [vmem:[%s834 + $0x48] sm:$0xff] %v877
                  %v879 = vld [vmem:[%s833 + $0x58] sm:$0xff]
                  %880 = vst [vmem:[%s834 + $0x50] sm:$0xff] %v879
                  %v881 = vld [vmem:[%s833 + $0x60] sm:$0xff]
                  %882 = vst [vmem:[%s834 + $0x58] sm:$0xff] %v881
                  %v883 = vld [vmem:[%s833 + $0x3c] sm:$0xff]
                  %884 = vst [vmem:[%s834 + $0x30] sm:$0xff] %v883
                  %v885 = vld [vmem:[%s833 + $0x44] sm:$0xff]
                  %886 = vst [vmem:[%s834 + $0x38] sm:$0xff] %v885
                  %v887 = vld [vmem:[%s833 + $0x4c] sm:$0xff]
                  %888 = vst [vmem:[%s834 + $0x40] sm:$0xff] %v887
                  %v889 = vld [vmem:[%s833 + $0x54] sm:$0xff]
                  %890 = vst [vmem:[%s834 + $0x48] sm:$0xff] %v889
                  %v891 = vld [vmem:[%s833 + $0x5c] sm:$0xff]
                  %892 = vst [vmem:[%s834 + $0x50] sm:$0xff] %v891
                  %v893 = vld [vmem:[%s833 + $0x64] sm:$0xff]
                  %894 = vst [vmem:[%s834 + $0x58] sm:$0xff] %v893
                  %v895 = vld [vmem:[%s833 + $0x6c] sm:$0xff]
                  %896 = vst [vmem:[%s834 + $0x60] sm:$0xff] %v895
                  %v897 = vld [vmem:[%s833 + $0x74] sm:$0xff]
                  %898 = vst [vmem:[%s834 + $0x68] sm:$0xff] %v897
                  %v899 = vld [vmem:[%s833 + $0x50] sm:$0xff]
                  %900 = vst [vmem:[%s834 + $0x40] sm:$0xff] %v899
                  %v901 = vld [vmem:[%s833 + $0x58] sm:$0xff]
                  %902 = vst [vmem:[%s834 + $0x48] sm:$0xff] %v901
                  %v903 = vld [vmem:[%s833 + $0x60] sm:$0xff]
                  %904 = vst [vmem:[%s834 + $0x50] sm:$0xff] %v903
                  %v905 = vld [vmem:[%s833 + $0x68] sm:$0xff]
                  %906 = vst [vmem:[%s834 + $0x58] sm:$0xff] %v905
                  %v907 = vld [vmem:[%s833 + $0x70] sm:$0xff]
                  %908 = vst [vmem:[%s834 + $0x60] sm:$0xff] %v907
                  %v909 = vld [vmem:[%s833 + $0x78] sm:$0xff]
                  %910 = vst [vmem:[%s834 + $0x68] sm:$0xff] %v909
                  %v911 = vld [vmem:[%s833 + $0x80] sm:$0xff]
                  %912 = vst [vmem:[%s834 + $0x70] sm:$0xff] %v911
                  %v913 = vld [vmem:[%s833 + $0x88] sm:$0xff]
                  %914 = vst [vmem:[%s834 + $0x78] sm:$0xff] %v913
                  %v915 = vld [vmem:[%s833 + $0x64] sm:$0xff]
                  %916 = vst [vmem:[%s834 + $0x50] sm:$0xff] %v915
                  %v917 = vld [vmem:[%s833 + $0x6c] sm:$0xff]
                  %918 = vst [vmem:[%s834 + $0x58] sm:$0xff] %v917
                  %v919 = vld [vmem:[%s833 + $0x74] sm:$0xff]
                  %920 = vst [vmem:[%s834 + $0x60] sm:$0xff] %v919
                  %v921 = vld [vmem:[%s833 + $0x7c] sm:$0xff]
                  %922 = vst [vmem:[%s834 + $0x68] sm:$0xff] %v921
                  %v923 = vld [vmem:[%s833 + $0x84] sm:$0xff]
                  %924 = vst [vmem:[%s834 + $0x70] sm:$0xff] %v923
                  %v925 = vld [vmem:[%s833 + $0x8c] sm:$0xff]
                  %926 = vst [vmem:[%s834 + $0x78] sm:$0xff] %v925
                  %v927 = vld [vmem:[%s833 + $0x94] sm:$0xff]
                  %928 = vst [vmem:[%s834 + $0x80] sm:$0xff] %v927
                  %v929 = vld [vmem:[%s833 + $0x9c] sm:$0xff]
                  %930 = vst [vmem:[%s834 + $0x88] sm:$0xff] %v929
                  %v931 = vld [vmem:[%s833 + $0x78] sm:$0xff]
                  %932 = vst [vmem:[%s834 + $0x60] sm:$0xff] %v931
                  %v933 = vld [vmem:[%s833 + $0x80] sm:$0xff]
                  %934 = vst [vmem:[%s834 + $0x68] sm:$0xff] %v933
                  %v935 = vld [vmem:[%s833 + $0x88] sm:$0xff]
                  %936 = vst [vmem:[%s834 + $0x70] sm:$0xff] %v935
                  %v937 = vld [vmem:[%s833 + $0x90] sm:$0xff]
                  %938 = vst [vmem:[%s834 + $0x78] sm:$0xff] %v937
                  %v939 = vld [vmem:[%s833 + $0x98] sm:$0xff]
                  %940 = vst [vmem:[%s834 + $0x80] sm:$0xff] %v939
                  %v941 = vld [vmem:[%s833 + $0xa0] sm:$0xff]
                  %942 = vst [vmem:[%s834 + $0x88] sm:$0xff] %v941
                  %v943 = vld [vmem:[%s833 + $0xa8] sm:$0xff]
                  %944 = vst [vmem:[%s834 + $0x90] sm:$0xff] %v943
                  %v945 = vld [vmem:[%s833 + $0xb0] sm:$0xff]
                  %946 = vst [vmem:[%s834 + $0x98] sm:$0xff] %v945
                  %v947 = vld [vmem:[%s833 + $0x8c] sm:$0xff]
                  %948 = vst [vmem:[%s834 + $0x70] sm:$0xff] %v947
                  %v949 = vld [vmem:[%s833 + $0x94] sm:$0xff]
                  %950 = vst [vmem:[%s834 + $0x78] sm:$0xff] %v949
                  %v951 = vld [vmem:[%s833 + $0x9c] sm:$0xff]
                  %952 = vst [vmem:[%s834 + $0x80] sm:$0xff] %v951
                  %v953 = vld [vmem:[%s833 + $0xa4] sm:$0xff]
                  %954 = vst [vmem:[%s834 + $0x88] sm:$0xff] %v953
                  %v955 = vld [vmem:[%s833 + $0xac] sm:$0xff]
                  %956 = vst [vmem:[%s834 + $0x90] sm:$0xff] %v955
                  %v957 = vld [vmem:[%s833 + $0xb4] sm:$0xff]
                  %958 = vst [vmem:[%s834 + $0x98] sm:$0xff] %v957
                  %v959 = vld [vmem:[%s833 + $0xbc] sm:$0xff]
                  %960 = vst [vmem:[%s834 + $0xa0] sm:$0xff] %v959
                  %v961 = vld [vmem:[%s833 + $0xc4] sm:$0xff]
                  %962 = vst [vmem:[%s834 + $0xa8] sm:$0xff] %v961
                  %s963 = sadd.s32 1, %s832
                  %p964 = scmp.ge.s32.totalorder %s963, %s823
                  %s965 = scalar_select %p964, 0, %s963
                  %s966 = smul.u32 %s965, 64
                  %s967 = smul.u32 %s965, 64
                  %s968 = scalar_lea.vmem %s780, %s966
                  %s969 = scalar_lea.vmem %s770, %s967 [#allocation3]
                $region130: #{conv_forward.1} parent=124 // loop_footer
                  %s829 = sadd.s32 %s827, 1
                $region131: #{conv_forward.1} parent=124 // loop_footer_branch
                  %826 = sbr.rel target = $region127
                $region132: #{conv_forward.1} parent=124 // loop_exit
                  _
                %s970 = sshrl.u32 %s822, 3
                %s971 = sand.u32 %s822, 7
                %s972 = smul.u32 %s970, 8
                %s973 = smul.u32 128, %s972
                %s974 = sshra.s32 %s973, 4
                %s975 = scalar_lea.vmem %s780, %s974
                %s976 = smul.u32 128, %s972
                %s977 = sshra.s32 %s976, 4
                %s978 = scalar_lea.vmem %s770, %s977 [#allocation3]
                // While loop
                $region133: #{conv_forward.1} parent=124 // loop_pre_header
                  _
                $region134: #{conv_forward.1} parent=124 // loop_header
                  %s982 = sphi 0, %s984
                  %p983 = scmp.ge.s32.totalorder %s982, %s971
                  %s987 = sphi 0, %s1008
                  %s988 = sphi %s975, %s1011
                  %s989 = sphi %s978, %s1012
                $region135: #{conv_forward.1} parent=124 // loop_header_branch
                  %986 = sbr.rel (%p983) target = $region139
                $region136: #{conv_forward.1} parent=124 // loop_body
                  %v990 = vld [vmem:[%s988] sm:$0xff]
                  %991 = vst [vmem:[%s989] sm:$0xff] %v990
                  %v992 = vld [vmem:[%s988 + $0x14] sm:$0xff]
                  %993 = vst [vmem:[%s989 + $0x10] sm:$0xff] %v992
                  %v994 = vld [vmem:[%s988 + $0x28] sm:$0xff]
                  %995 = vst [vmem:[%s989 + $0x20] sm:$0xff] %v994
                  %v996 = vld [vmem:[%s988 + $0x3c] sm:$0xff]
                  %997 = vst [vmem:[%s989 + $0x30] sm:$0xff] %v996
                  %v998 = vld [vmem:[%s988 + $0x50] sm:$0xff]
                  %999 = vst [vmem:[%s989 + $0x40] sm:$0xff] %v998
                  %v1000 = vld [vmem:[%s988 + $0x64] sm:$0xff]
                  %1001 = vst [vmem:[%s989 + $0x50] sm:$0xff] %v1000
                  %v1002 = vld [vmem:[%s988 + $0x78] sm:$0xff]
                  %1003 = vst [vmem:[%s989 + $0x60] sm:$0xff] %v1002
                  %v1004 = vld [vmem:[%s988 + $0x8c] sm:$0xff]
                  %1005 = vst [vmem:[%s989 + $0x70] sm:$0xff] %v1004
                  %s1006 = sadd.s32 1, %s987
                  %p1007 = scmp.ge.s32.totalorder %s1006, %s971
                  %s1008 = scalar_select %p1007, 0, %s1006
                  %s1009 = smul.u32 %s1008, 8
                  %s1010 = smul.u32 %s1008, 8
                  %s1011 = scalar_lea.vmem %s975, %s1009
                  %s1012 = scalar_lea.vmem %s978, %s1010 [#allocation3]
                $region137: #{conv_forward.1} parent=124 // loop_footer
                  %s984 = sadd.s32 %s982, 1
                $region138: #{conv_forward.1} parent=124 // loop_footer_branch
                  %981 = sbr.rel target = $region134
                $region139: #{conv_forward.1} parent=124 // loop_exit
                  _
              $region125: #{conv_forward.1} parent=109 // pred_fallthru
                _
              %p1013 = pneg %p818
              // Predicated region
              $region140: #{conv_forward.1} parent=109 // pred_check
                _
              $region141: #{conv_forward.1} parent=109 // pred_check_branch
                %1015 = sbr.rel (%p818) target = $region143
              $region142: #{conv_forward.1} parent=109 // pred_region
                %s1016 = sand.u32 %s781, 7
                %s1017 = ssub.s32 %s781, %s1016
                %s1018 = scalar_lea.vmem %s780, %s1017
                %s1019 = ssub.s32 %s781, %s1016
                %s1020 = scalar_lea.vmem %s770, %s1019 [#allocation3]
                %s1021 = sshrl.u32 %s781, 3
                %s1022 = sshrl.u32 %s1021, 3
                // While loop
                $region144: #{conv_forward.1} parent=142 // loop_pre_header
                  _
                $region145: #{conv_forward.1} parent=142 // loop_header
                  %s1026 = sphi 0, %s1028
                  %p1027 = scmp.ge.s32.totalorder %s1026, %s1022
                  %s1031 = sphi 0, %s1164
                  %s1032 = sphi %s780, %s1167
                  %s1033 = sphi %s770, %s1168
                $region146: #{conv_forward.1} parent=142 // loop_header_branch
                  %1030 = sbr.rel (%p1027) target = $region150
                $region147: #{conv_forward.1} parent=142 // loop_body
                  %v1034 = vld [vmem:[%s1032] sm:$0xff]
                  %1035 = vst [vmem:[%s1033] sm:$0xff] %v1034
                  %v1036 = vld [vmem:[%s1032 + $0x8] sm:$0xff]
                  %1037 = vst [vmem:[%s1033 + $0x8] sm:$0xff] %v1036
                  %v1038 = vld [vmem:[%s1032 + $0x10] sm:$0xff]
                  %1039 = vst [vmem:[%s1033 + $0x10] sm:$0xff] %v1038
                  %v1040 = vld [vmem:[%s1032 + $0x18] sm:$0xff]
                  %1041 = vst [vmem:[%s1033 + $0x18] sm:$0xff] %v1040
                  %v1042 = vld [vmem:[%s1032 + $0x20] sm:$0xff]
                  %1043 = vst [vmem:[%s1033 + $0x20] sm:$0xff] %v1042
                  %v1044 = vld [vmem:[%s1032 + $0x28] sm:$0xff]
                  %1045 = vst [vmem:[%s1033 + $0x28] sm:$0xff] %v1044
                  %v1046 = vld [vmem:[%s1032 + $0x30] sm:$0xff]
                  %1047 = vst [vmem:[%s1033 + $0x30] sm:$0xff] %v1046
                  %v1048 = vld [vmem:[%s1032 + $0x38] sm:$0xff]
                  %1049 = vst [vmem:[%s1033 + $0x38] sm:$0xff] %v1048
                  %v1050 = vld [vmem:[%s1032 + $0x14] sm:$0xff]
                  %1051 = vst [vmem:[%s1033 + $0x10] sm:$0xff] %v1050
                  %v1052 = vld [vmem:[%s1032 + $0x1c] sm:$0xff]
                  %1053 = vst [vmem:[%s1033 + $0x18] sm:$0xff] %v1052
                  %v1054 = vld [vmem:[%s1032 + $0x24] sm:$0xff]
                  %1055 = vst [vmem:[%s1033 + $0x20] sm:$0xff] %v1054
                  %v1056 = vld [vmem:[%s1032 + $0x2c] sm:$0xff]
                  %1057 = vst [vmem:[%s1033 + $0x28] sm:$0xff] %v1056
                  %v1058 = vld [vmem:[%s1032 + $0x34] sm:$0xff]
                  %1059 = vst [vmem:[%s1033 + $0x30] sm:$0xff] %v1058
                  %v1060 = vld [vmem:[%s1032 + $0x3c] sm:$0xff]
                  %1061 = vst [vmem:[%s1033 + $0x38] sm:$0xff] %v1060
                  %v1062 = vld [vmem:[%s1032 + $0x44] sm:$0xff]
                  %1063 = vst [vmem:[%s1033 + $0x40] sm:$0xff] %v1062
                  %v1064 = vld [vmem:[%s1032 + $0x4c] sm:$0xff]
                  %1065 = vst [vmem:[%s1033 + $0x48] sm:$0xff] %v1064
                  %v1066 = vld [vmem:[%s1032 + $0x28] sm:$0xff]
                  %1067 = vst [vmem:[%s1033 + $0x20] sm:$0xff] %v1066
                  %v1068 = vld [vmem:[%s1032 + $0x30] sm:$0xff]
                  %1069 = vst [vmem:[%s1033 + $0x28] sm:$0xff] %v1068
                  %v1070 = vld [vmem:[%s1032 + $0x38] sm:$0xff]
                  %1071 = vst [vmem:[%s1033 + $0x30] sm:$0xff] %v1070
                  %v1072 = vld [vmem:[%s1032 + $0x40] sm:$0xff]
                  %1073 = vst [vmem:[%s1033 + $0x38] sm:$0xff] %v1072
                  %v1074 = vld [vmem:[%s1032 + $0x48] sm:$0xff]
                  %1075 = vst [vmem:[%s1033 + $0x40] sm:$0xff] %v1074
                  %v1076 = vld [vmem:[%s1032 + $0x50] sm:$0xff]
                  %1077 = vst [vmem:[%s1033 + $0x48] sm:$0xff] %v1076
                  %v1078 = vld [vmem:[%s1032 + $0x58] sm:$0xff]
                  %1079 = vst [vmem:[%s1033 + $0x50] sm:$0xff] %v1078
                  %v1080 = vld [vmem:[%s1032 + $0x60] sm:$0xff]
                  %1081 = vst [vmem:[%s1033 + $0x58] sm:$0xff] %v1080
                  %v1082 = vld [vmem:[%s1032 + $0x3c] sm:$0xff]
                  %1083 = vst [vmem:[%s1033 + $0x30] sm:$0xff] %v1082
                  %v1084 = vld [vmem:[%s1032 + $0x44] sm:$0xff]
                  %1085 = vst [vmem:[%s1033 + $0x38] sm:$0xff] %v1084
                  %v1086 = vld [vmem:[%s1032 + $0x4c] sm:$0xff]
                  %1087 = vst [vmem:[%s1033 + $0x40] sm:$0xff] %v1086
                  %v1088 = vld [vmem:[%s1032 + $0x54] sm:$0xff]
                  %1089 = vst [vmem:[%s1033 + $0x48] sm:$0xff] %v1088
                  %v1090 = vld [vmem:[%s1032 + $0x5c] sm:$0xff]
                  %1091 = vst [vmem:[%s1033 + $0x50] sm:$0xff] %v1090
                  %v1092 = vld [vmem:[%s1032 + $0x64] sm:$0xff]
                  %1093 = vst [vmem:[%s1033 + $0x58] sm:$0xff] %v1092
                  %v1094 = vld [vmem:[%s1032 + $0x6c] sm:$0xff]
                  %1095 = vst [vmem:[%s1033 + $0x60] sm:$0xff] %v1094
                  %v1096 = vld [vmem:[%s1032 + $0x74] sm:$0xff]
                  %1097 = vst [vmem:[%s1033 + $0x68] sm:$0xff] %v1096
                  %v1098 = vld [vmem:[%s1032 + $0x50] sm:$0xff]
                  %1099 = vst [vmem:[%s1033 + $0x40] sm:$0xff] %v1098
                  %v1100 = vld [vmem:[%s1032 + $0x58] sm:$0xff]
                  %1101 = vst [vmem:[%s1033 + $0x48] sm:$0xff] %v1100
                  %v1102 = vld [vmem:[%s1032 + $0x60] sm:$0xff]
                  %1103 = vst [vmem:[%s1033 + $0x50] sm:$0xff] %v1102
                  %v1104 = vld [vmem:[%s1032 + $0x68] sm:$0xff]
                  %1105 = vst [vmem:[%s1033 + $0x58] sm:$0xff] %v1104
                  %v1106 = vld [vmem:[%s1032 + $0x70] sm:$0xff]
                  %1107 = vst [vmem:[%s1033 + $0x60] sm:$0xff] %v1106
                  %v1108 = vld [vmem:[%s1032 + $0x78] sm:$0xff]
                  %1109 = vst [vmem:[%s1033 + $0x68] sm:$0xff] %v1108
                  %v1110 = vld [vmem:[%s1032 + $0x80] sm:$0xff]
                  %1111 = vst [vmem:[%s1033 + $0x70] sm:$0xff] %v1110
                  %v1112 = vld [vmem:[%s1032 + $0x88] sm:$0xff]
                  %1113 = vst [vmem:[%s1033 + $0x78] sm:$0xff] %v1112
                  %v1114 = vld [vmem:[%s1032 + $0x64] sm:$0xff]
                  %1115 = vst [vmem:[%s1033 + $0x50] sm:$0xff] %v1114
                  %v1116 = vld [vmem:[%s1032 + $0x6c] sm:$0xff]
                  %1117 = vst [vmem:[%s1033 + $0x58] sm:$0xff] %v1116
                  %v1118 = vld [vmem:[%s1032 + $0x74] sm:$0xff]
                  %1119 = vst [vmem:[%s1033 + $0x60] sm:$0xff] %v1118
                  %v1120 = vld [vmem:[%s1032 + $0x7c] sm:$0xff]
                  %1121 = vst [vmem:[%s1033 + $0x68] sm:$0xff] %v1120
                  %v1122 = vld [vmem:[%s1032 + $0x84] sm:$0xff]
                  %1123 = vst [vmem:[%s1033 + $0x70] sm:$0xff] %v1122
                  %v1124 = vld [vmem:[%s1032 + $0x8c] sm:$0xff]
                  %1125 = vst [vmem:[%s1033 + $0x78] sm:$0xff] %v1124
                  %v1126 = vld [vmem:[%s1032 + $0x94] sm:$0xff]
                  %1127 = vst [vmem:[%s1033 + $0x80] sm:$0xff] %v1126
                  %v1128 = vld [vmem:[%s1032 + $0x9c] sm:$0xff]
                  %1129 = vst [vmem:[%s1033 + $0x88] sm:$0xff] %v1128
                  %v1130 = vld [vmem:[%s1032 + $0x78] sm:$0xff]
                  %1131 = vst [vmem:[%s1033 + $0x60] sm:$0xff] %v1130
                  %v1132 = vld [vmem:[%s1032 + $0x80] sm:$0xff]
                  %1133 = vst [vmem:[%s1033 + $0x68] sm:$0xff] %v1132
                  %v1134 = vld [vmem:[%s1032 + $0x88] sm:$0xff]
                  %1135 = vst [vmem:[%s1033 + $0x70] sm:$0xff] %v1134
                  %v1136 = vld [vmem:[%s1032 + $0x90] sm:$0xff]
                  %1137 = vst [vmem:[%s1033 + $0x78] sm:$0xff] %v1136
                  %v1138 = vld [vmem:[%s1032 + $0x98] sm:$0xff]
                  %1139 = vst [vmem:[%s1033 + $0x80] sm:$0xff] %v1138
                  %v1140 = vld [vmem:[%s1032 + $0xa0] sm:$0xff]
                  %1141 = vst [vmem:[%s1033 + $0x88] sm:$0xff] %v1140
                  %v1142 = vld [vmem:[%s1032 + $0xa8] sm:$0xff]
                  %1143 = vst [vmem:[%s1033 + $0x90] sm:$0xff] %v1142
                  %v1144 = vld [vmem:[%s1032 + $0xb0] sm:$0xff]
                  %1145 = vst [vmem:[%s1033 + $0x98] sm:$0xff] %v1144
                  %v1146 = vld [vmem:[%s1032 + $0x8c] sm:$0xff]
                  %1147 = vst [vmem:[%s1033 + $0x70] sm:$0xff] %v1146
                  %v1148 = vld [vmem:[%s1032 + $0x94] sm:$0xff]
                  %1149 = vst [vmem:[%s1033 + $0x78] sm:$0xff] %v1148
                  %v1150 = vld [vmem:[%s1032 + $0x9c] sm:$0xff]
                  %1151 = vst [vmem:[%s1033 + $0x80] sm:$0xff] %v1150
                  %v1152 = vld [vmem:[%s1032 + $0xa4] sm:$0xff]
                  %1153 = vst [vmem:[%s1033 + $0x88] sm:$0xff] %v1152
                  %v1154 = vld [vmem:[%s1032 + $0xac] sm:$0xff]
                  %1155 = vst [vmem:[%s1033 + $0x90] sm:$0xff] %v1154
                  %v1156 = vld [vmem:[%s1032 + $0xb4] sm:$0xff]
                  %1157 = vst [vmem:[%s1033 + $0x98] sm:$0xff] %v1156
                  %v1158 = vld [vmem:[%s1032 + $0xbc] sm:$0xff]
                  %1159 = vst [vmem:[%s1033 + $0xa0] sm:$0xff] %v1158
                  %v1160 = vld [vmem:[%s1032 + $0xc4] sm:$0xff]
                  %1161 = vst [vmem:[%s1033 + $0xa8] sm:$0xff] %v1160
                  %s1162 = sadd.s32 1, %s1031
                  %p1163 = scmp.ge.s32.totalorder %s1162, %s1022
                  %s1164 = scalar_select %p1163, 0, %s1162
                  %s1165 = smul.u32 %s1164, 64
                  %s1166 = smul.u32 %s1164, 64
                  %s1167 = scalar_lea.vmem %s780, %s1165
                  %s1168 = scalar_lea.vmem %s770, %s1166 [#allocation3]
                $region148: #{conv_forward.1} parent=142 // loop_footer
                  %s1028 = sadd.s32 %s1026, 1
                $region149: #{conv_forward.1} parent=142 // loop_footer_branch
                  %1025 = sbr.rel target = $region145
                $region150: #{conv_forward.1} parent=142 // loop_exit
                  _
                %s1169 = sshrl.u32 %s1021, 3
                %s1170 = sand.u32 %s1021, 7
                %s1171 = smul.u32 %s1169, 8
                %s1172 = smul.u32 128, %s1171
                %s1173 = sshra.s32 %s1172, 4
                %s1174 = scalar_lea.vmem %s780, %s1173
                %s1175 = smul.u32 128, %s1171
                %s1176 = sshra.s32 %s1175, 4
                %s1177 = scalar_lea.vmem %s770, %s1176 [#allocation3]
                // While loop
                $region151: #{conv_forward.1} parent=142 // loop_pre_header
                  _
                $region152: #{conv_forward.1} parent=142 // loop_header
                  %s1181 = sphi 0, %s1183
                  %p1182 = scmp.ge.s32.totalorder %s1181, %s1170
                  %s1186 = sphi 0, %s1207
                  %s1187 = sphi %s1174, %s1210
                  %s1188 = sphi %s1177, %s1211
                $region153: #{conv_forward.1} parent=142 // loop_header_branch
                  %1185 = sbr.rel (%p1182) target = $region157
                $region154: #{conv_forward.1} parent=142 // loop_body
                  %v1189 = vld [vmem:[%s1187] sm:$0xff]
                  %1190 = vst [vmem:[%s1188] sm:$0xff] %v1189
                  %v1191 = vld [vmem:[%s1187 + $0x14] sm:$0xff]
                  %1192 = vst [vmem:[%s1188 + $0x10] sm:$0xff] %v1191
                  %v1193 = vld [vmem:[%s1187 + $0x28] sm:$0xff]
                  %1194 = vst [vmem:[%s1188 + $0x20] sm:$0xff] %v1193
                  %v1195 = vld [vmem:[%s1187 + $0x3c] sm:$0xff]
                  %1196 = vst [vmem:[%s1188 + $0x30] sm:$0xff] %v1195
                  %v1197 = vld [vmem:[%s1187 + $0x50] sm:$0xff]
                  %1198 = vst [vmem:[%s1188 + $0x40] sm:$0xff] %v1197
                  %v1199 = vld [vmem:[%s1187 + $0x64] sm:$0xff]
                  %1200 = vst [vmem:[%s1188 + $0x50] sm:$0xff] %v1199
                  %v1201 = vld [vmem:[%s1187 + $0x78] sm:$0xff]
                  %1202 = vst [vmem:[%s1188 + $0x60] sm:$0xff] %v1201
                  %v1203 = vld [vmem:[%s1187 + $0x8c] sm:$0xff]
                  %1204 = vst [vmem:[%s1188 + $0x70] sm:$0xff] %v1203
                  %s1205 = sadd.s32 1, %s1186
                  %p1206 = scmp.ge.s32.totalorder %s1205, %s1170
                  %s1207 = scalar_select %p1206, 0, %s1205
                  %s1208 = smul.u32 %s1207, 8
                  %s1209 = smul.u32 %s1207, 8
                  %s1210 = scalar_lea.vmem %s1174, %s1208
                  %s1211 = scalar_lea.vmem %s1177, %s1209 [#allocation3]
                $region155: #{conv_forward.1} parent=142 // loop_footer
                  %s1183 = sadd.s32 %s1181, 1
                $region156: #{conv_forward.1} parent=142 // loop_footer_branch
                  %1180 = sbr.rel target = $region152
                $region157: #{conv_forward.1} parent=142 // loop_exit
                  _
                %s1212 = sshllo.u32 0, %s1016
                loop: start=0, step=1, limit=1
                $region158: #{conv_forward.1} parent=142 // loop_pre_header
                  _
                $region159: #{conv_forward.1} parent=142 // loop_header
                  %s1214 = sphi 0, %s1218
                  %p1215 = scmp.ge.s32.totalorder %s1214, 1
                  %s1219 = sphi %s1018, %s1018
                  %s1220 = sphi %s1020, %s1020
                $region160: #{conv_forward.1} parent=142 // loop_header_branch
                  %1217 = sbr.rel (%p1215) target = $region164
                $region161: #{conv_forward.1} parent=142 // loop_body
                  %v1221 = vld [vmem:[%s1219] sm:%s1212]
                  %1222 = vst [vmem:[%s1220] sm:%s1212] %v1221
                  %v1223 = vld [vmem:[%s1219 + $0x14] sm:%s1212]
                  %1224 = vst [vmem:[%s1220 + $0x10] sm:%s1212] %v1223
                  %v1225 = vld [vmem:[%s1219 + $0x28] sm:%s1212]
                  %1226 = vst [vmem:[%s1220 + $0x20] sm:%s1212] %v1225
                  %v1227 = vld [vmem:[%s1219 + $0x3c] sm:%s1212]
                  %1228 = vst [vmem:[%s1220 + $0x30] sm:%s1212] %v1227
                  %v1229 = vld [vmem:[%s1219 + $0x50] sm:%s1212]
                  %1230 = vst [vmem:[%s1220 + $0x40] sm:%s1212] %v1229
                  %v1231 = vld [vmem:[%s1219 + $0x64] sm:%s1212]
                  %1232 = vst [vmem:[%s1220 + $0x50] sm:%s1212] %v1231
                  %v1233 = vld [vmem:[%s1219 + $0x78] sm:%s1212]
                  %1234 = vst [vmem:[%s1220 + $0x60] sm:%s1212] %v1233
                  %v1235 = vld [vmem:[%s1219 + $0x8c] sm:%s1212]
                  %1236 = vst [vmem:[%s1220 + $0x70] sm:%s1212] %v1235
                $region162: #{conv_forward.1} parent=142 // loop_footer
                  %s1218 = sadd.s32 1, %s1214
                $region163: #{conv_forward.1} parent=142 // loop_footer_branch
                  %1213 = sbr.rel target = $region159
                $region164: #{conv_forward.1} parent=142 // loop_exit
                  _
              $region143: #{conv_forward.1} parent=109 // pred_fallthru
                _
            $region110: #{conv_forward.1} parent=105 // pred_fallthru
              _
            // Predicated region
            $region111: #{conv_forward.1} parent=105 // pred_check
              %p789 = pneg %p785
            $region112: #{conv_forward.1} parent=105 // pred_check_branch
              %791 = sbr.rel (%p789) target = $region114
            $region113: #{conv_forward.1} parent=105 // pred_region
              %s792 = sshllo.u32 0, %s781
              loop: start=0, step=1, limit=1
              $region115: #{conv_forward.1} parent=113 // loop_pre_header
                _
              $region116: #{conv_forward.1} parent=113 // loop_header
                %s794 = sphi 0, %s798
                %p795 = scmp.ge.s32.totalorder %s794, 1
                %s799 = sphi %s780, %s780
                %s800 = sphi %s770, %s770
              $region117: #{conv_forward.1} parent=113 // loop_header_branch
                %797 = sbr.rel (%p795) target = $region121
              $region118: #{conv_forward.1} parent=113 // loop_body
                %v801 = vld [vmem:[%s799] sm:%s792]
                %802 = vst [vmem:[%s800] sm:%s792] %v801
                %v803 = vld [vmem:[%s799 + $0x14] sm:%s792]
                %804 = vst [vmem:[%s800 + $0x10] sm:%s792] %v803
                %v805 = vld [vmem:[%s799 + $0x28] sm:%s792]
                %806 = vst [vmem:[%s800 + $0x20] sm:%s792] %v805
                %v807 = vld [vmem:[%s799 + $0x3c] sm:%s792]
                %808 = vst [vmem:[%s800 + $0x30] sm:%s792] %v807
                %v809 = vld [vmem:[%s799 + $0x50] sm:%s792]
                %810 = vst [vmem:[%s800 + $0x40] sm:%s792] %v809
                %v811 = vld [vmem:[%s799 + $0x64] sm:%s792]
                %812 = vst [vmem:[%s800 + $0x50] sm:%s792] %v811
                %v813 = vld [vmem:[%s799 + $0x78] sm:%s792]
                %814 = vst [vmem:[%s800 + $0x60] sm:%s792] %v813
                %v815 = vld [vmem:[%s799 + $0x8c] sm:%s792]
                %816 = vst [vmem:[%s800 + $0x70] sm:%s792] %v815
              $region119: #{conv_forward.1} parent=113 // loop_footer
                %s798 = sadd.s32 1, %s794
              $region120: #{conv_forward.1} parent=113 // loop_footer_branch
                %793 = sbr.rel target = $region116
              $region121: #{conv_forward.1} parent=113 // loop_exit
                _
            $region114: #{conv_forward.1} parent=105 // pred_fallthru
              _
          $region106: #{conv_forward.1} parent=101 // pred_fallthru
            _
          %1237 = vnop
        $region102: #{conv_forward.1} parent=31 // pred_fallthru
          _
      $region32: #{conv_forward.1} parent=5 // pred_fallthru
        _
      %p1238 = scmp.le.s32.totalorder 1, %s15
      %p1239 = scmp.lt.s32.totalorder %s15, 5
      %p1240 = pnand %p1238, %p1239
      %p1241 = pneg %p1240
      // Predicated region
      $region165: #{conv_forward.1} parent=5 // pred_check
        _
      $region166: #{conv_forward.1} parent=5 // pred_check_branch
        %1243 = sbr.rel (%p1240) target = $region168
      $region167: #{conv_forward.1} parent=5 // pred_region
        %s1244 = ssub.s32 %s15, 1
        %s1245 = sand.u32 %s42, 1
        %s1246 = sand.u32 %s42, 1
        %s1247 = smul.addr %s1246, 512
        %s1248 = scalar_lea.vmem [#allocation2], %s1247
        // Predicated region
        $region169: #{conv_forward.1} parent=167 // pred_check
          %p1249 = pneg %p55
        $region170: #{conv_forward.1} parent=167 // pred_check_branch
          %1251 = sbr.rel (%p1249) target = $region172
        $region171: #{conv_forward.1} parent=167 // pred_region
          _
        $region172: #{conv_forward.1} parent=167 // pred_fallthru
          _
        %s1252 = sand.u32 %s70, 1
        %s1253 = sand.u32 %s70, 1
        %s1254 = smul.addr %s1253, 128
        %s1255 = scalar_lea.vmem [#allocation3], %s1254
        // Predicated region
        $region173: #{conv_forward.1} parent=167 // pred_check
          %p1256 = pneg %p83
        $region174: #{conv_forward.1} parent=167 // pred_check_branch
          %1258 = sbr.rel (%p1256) target = $region176
        $region175: #{conv_forward.1} parent=167 // pred_region
          _
        $region176: #{conv_forward.1} parent=167 // pred_fallthru
          _
        %s1259 = sand.u32 %s42, 1
        %s1260 = sand.u32 %s42, 1
        %s1261 = smul.addr %s1260, 512
        %s1262 = scalar_lea.vmem [#allocation2], %s1261
        %p1263 = pneg %p55
        %p1264 = pneg %p52
        %s1265 = sand.u32 %s70, 1
        %s1266 = sand.u32 %s70, 1
        %s1267 = smul.addr %s1266, 128
        %s1268 = scalar_lea.vmem [#allocation3], %s1267
        %p1269 = pneg %p83
        %p1270 = pneg %p80
        %p1271 = pneg %p104
        %p1272 = pneg %p101
        %p1273 = pneg %p125
        %p1274 = pneg %p122
        %p1275 = pneg %p146
        %p1276 = pneg %p143
        %p1277 = pneg %p167
        %p1278 = pneg %p164
        %p1279 = pneg %p195
        %p1280 = pneg %p192
        %s1281 = sand.u32 %s182, 1
        %s1282 = scalar_lea.sflag [#allocation5], %s1281
        %s1283 = sand.u32 %s182, 1
        %s1284 = smul.addr %s1283, 128
        %s1285 = scalar_lea.vmem [#allocation4], %s1284
        %s1286 = smul.u32 8, %s25
        %s1287 = ssub.s32 10, %s1286
        %p1288 = scmp.lt.s32.totalorder %s1287, 8
        %s1289 = scalar_select %p1288, %s1287, 8
        %s1290 = smul.u32 1024, %s1289
        %s1291 = smul.u32 8, %s25
        %s1292 = ssub.s32 10, %s1291
        %p1293 = scmp.lt.s32.totalorder %s1292, 8
        %s1294 = scalar_select %p1293, %s1292, 8
        %s1295 = smul.u32 256, %s1294
        %s1296 = smul.u32 8, %s25
        %s1297 = ssub.s32 10, %s1296
        %p1298 = scmp.lt.s32.totalorder %s1297, 8
        %s1299 = scalar_select %p1298, %s1297, 8
        %s1300 = smul.u32 256, %s1299
        %v1302 = vld [vmem:[%s2] sm:$0xf]
        %v1303 = vld [vmem:[%s2 + $0x4] sm:$0xf]
        %v1304 = vld [vmem:[%s3] sm:$0xf]
        %v1305 = vld [vmem:[%s3 + $0x4] sm:$0xf]
        %v1306 = vld [vmem:[%s4] sm:$0xff]
        %v1307 = vld [vmem:[%s4 + $0x8] sm:$0xff]
        %v1308 = vld [vmem:[%s5] sm:$0xff]
        %v1309 = vld [vmem:[%s5 + $0x8] sm:$0xff]
        %v1310 = vld [vmem:[%s1248] sm:$0xff]
        %v1311 = vld [vmem:[%s1248 + $0x8] sm:$0xff]
        %v1312 = vld [vmem:[%s1248 + $0x20] sm:$0x77]
        %v1313 = vld [vmem:[%s1248 + $0x28] sm:$0x77]
        %v1314 = vld [vmem:[%s1255] sm:$0xff]
        %v1317 = vunpack.c.l.b16 %v1304
        %v1318 = vunpack.c.l.b16 %v1305
        %v1319 = vpack.c.b16 %v1318, %v1317
        %v1321 = vcombine.high %v1314, %v1314
        %v1323 = vunpack.c.l.s4 1983009808
        %v1324 = vunpack.c.0.s8 %v1323
        %v1325 = vlaneseq
        %v1326 = vshrl.u32 %v1325, 7
        %v1327 = vsub.s32 %v1324, %v1326
        %v1328 = vrot.slane %v1314, %v1327
        %v1330 = vunpack.c.l.s4 1983009808
        %v1331 = vunpack.c.0.s8 %v1330
        %v1332 = vlaneseq
        %v1333 = vshrl.u32 %v1332, 7
        %v1334 = vsub.s32 %v1331, %v1333
        %v1335 = vrot.slane %v1321, %v1334
        %v1336 = vcombine.high %v1328, %v1328
        %v1337 = vcombine.high %v1335, %v1335
        %vm1338 = vcmask 23552
        %v1340 = vsel %vm1338, %v1319, 0
        %vm1342 = vcmask 1040384
        %vm1343 = vcmask 1041408
        %v1344 = vsel %vm1342, 4294967295, 65535
        %v1345 = vsel %vm1343, %v1344, 0
        %v1347 = vand.u32 %v1328, %v1345
        %v1350 = vand.u32 %v1336, %v1345
        %v1353 = vand.u32 %v1335, %v1345
        %v1356 = vand.u32 %v1337, %v1345
        %1358 = vmatprep.subr.bf16.mxu0 %v1350
        %1359 = vmatpush1.bf16.msra.mxu0 %v1347
        %1360 = vmatprep.subr.bf16.mxu0 0
        %1361 = vmatpush1.bf16.msra.mxu0 0
        %1362 = vmatprep.subr.bf16.mxu0 0
        %1363 = vmatpush1.bf16.msra.mxu0 0
        %1364 = vmatprep.subr.bf16.mxu0 0
        %1365 = vmatpush1.bf16.msra.mxu0 0
        %1366 = vmatprep.subr.bf16.mxu0 0
        %1367 = vmatpush1.bf16.msra.mxu0 0
        %1368 = vmatprep.subr.bf16.mxu0 0
        %1369 = vmatpush1.bf16.msra.mxu0 0
        %1370 = vmatprep.subr.bf16.mxu0 0
        %1371 = vmatpush1.bf16.msra.mxu0 0
        %1372 = vmatprep.subr.bf16.mxu0 0
        %1373 = vmatpush1.bf16.msra.mxu0 0
        %1374 = vmatprep.subr.bf16.mxu0 0
        %1375 = vmatpush1.bf16.msra.mxu0 0
        %1376 = vmatprep.subr.bf16.mxu0 0
        %1377 = vmatpush1.bf16.msra.mxu0 0
        %1378 = vmatprep.subr.bf16.mxu0 0
        %1379 = vmatpush1.bf16.msra.mxu0 0
        %1380 = vmatprep.subr.bf16.mxu0 0
        %1381 = vmatpush1.bf16.msra.mxu0 0
        %1382 = vmatprep.subr.bf16.mxu0 0
        %1383 = vmatpush1.bf16.msra.mxu0 0
        %1384 = vmatprep.subr.bf16.mxu0 0
        %1385 = vmatpush1.bf16.msra.mxu0 0
        %1386 = vmatprep.subr.bf16.mxu0 0
        %1387 = vmatpush1.bf16.msra.mxu0 0
        %1388 = vmatprep.subr.bf16.mxu0 0
        %1389 = vmatpush1.bf16.msra.mxu0 0
        %1390 = vmatprep.mubr.bf16.mxu0 0
        %1391 = vmatmul.mubr.bf16.gmra.mrb[0].mxu0 %v1340
        %v1392 = vpop.f32.mrb[0].mxu0
        %v1393 = vadd.f32 0.0, %v1392
        %v1394 = vpop.f32.mrb[0].mxu0
        %v1395 = vadd.f32 0.0, %v1394
        %v1396 = vpop.f32.mrb[0].mxu0
        %v1397 = vadd.f32 0.0, %v1396
        %v1398 = vpop.f32.mrb[0].mxu0
        %v1399 = vadd.f32 0.0, %v1398
        %1400 = vdwg.mxu0
        %1401 = vmatprep.subr.bf16.mxu0 %v1356
        %1402 = vmatpush1.bf16.msra.mxu0 %v1353
        %1403 = vmatprep.subr.bf16.mxu0 0
        %1404 = vmatpush1.bf16.msra.mxu0 0
        %1405 = vmatprep.subr.bf16.mxu0 0
        %1406 = vmatpush1.bf16.msra.mxu0 0
        %1407 = vmatprep.subr.bf16.mxu0 0
        %1408 = vmatpush1.bf16.msra.mxu0 0
        %1409 = vmatprep.subr.bf16.mxu0 0
        %1410 = vmatpush1.bf16.msra.mxu0 0
        %1411 = vmatprep.subr.bf16.mxu0 0
        %1412 = vmatpush1.bf16.msra.mxu0 0
        %1413 = vmatprep.subr.bf16.mxu0 0
        %1414 = vmatpush1.bf16.msra.mxu0 0
        %1415 = vmatprep.subr.bf16.mxu0 0
        %1416 = vmatpush1.bf16.msra.mxu0 0
        %1417 = vmatprep.subr.bf16.mxu0 0
        %1418 = vmatpush1.bf16.msra.mxu0 0
        %1419 = vmatprep.subr.bf16.mxu0 0
        %1420 = vmatpush1.bf16.msra.mxu0 0
        %1421 = vmatprep.subr.bf16.mxu0 0
        %1422 = vmatpush1.bf16.msra.mxu0 0
        %1423 = vmatprep.subr.bf16.mxu0 0
        %1424 = vmatpush1.bf16.msra.mxu0 0
        %1425 = vmatprep.subr.bf16.mxu0 0
        %1426 = vmatpush1.bf16.msra.mxu0 0
        %1427 = vmatprep.subr.bf16.mxu0 0
        %1428 = vmatpush1.bf16.msra.mxu0 0
        %1429 = vmatprep.subr.bf16.mxu0 0
        %1430 = vmatpush1.bf16.msra.mxu0 0
        %1431 = vmatprep.subr.bf16.mxu0 0
        %1432 = vmatpush1.bf16.msra.mxu0 0
        %1433 = vmatprep.mubr.bf16.mxu0 0
        %1434 = vmatmul.mubr.bf16.gmra.mrb[0].mxu0 %v1340
        %v1435 = vpop.f32.mrb[0].mxu0
        %v1436 = vadd.f32 0.0, %v1435
        %v1437 = vpop.f32.mrb[0].mxu0
        %v1438 = vadd.f32 0.0, %v1437
        %v1439 = vpop.f32.mrb[0].mxu0
        %v1440 = vadd.f32 0.0, %v1439
        %v1441 = vpop.f32.mrb[0].mxu0
        %v1442 = vadd.f32 0.0, %v1441
        %1443 = vdwg.mxu0
        %v1446 = vunpack.c.l.b16 %v1302
        %v1447 = vunpack.c.l.b16 %v1303
        %v1448 = vpack.c.b16 %v1447, %v1446
        %v1453 = vunpack.c.l.b16 %v1310
        %v1454 = vunpack.c.h.b16 %v1310
        %v1455 = vunpack.c.l.b16 %v1311
        %v1456 = vunpack.c.h.b16 %v1311
        %v1457 = vunpack.c.l.b16 %v1312
        %v1458 = vunpack.c.h.b16 %v1312
        %v1459 = vunpack.c.l.b16 %v1313
        %v1460 = vunpack.c.h.b16 %v1313
        %v1461 = vpack.c.b16 %v1457, %v1453
        %v1462 = vpack.c.b16 %v1458, %v1454
        %v1463 = vpack.c.b16 %v1459, %v1455
        %v1464 = vpack.c.b16 %v1460, %v1456
        %vm1465 = vcmask 105472
        %v1467 = vsel %vm1465, %v1448, 0
        %vm1469 = vcmask 1045504
        %vm1470 = vcmask 1046528
        %v1471 = vsel %vm1469, 4294967295, 65535
        %v1472 = vsel %vm1470, %v1471, 0
        %v1474 = vand.u32 %v1461, %v1472
        %v1477 = vand.u32 %v1462, %v1472
        %v1480 = vand.u32 %v1463, %v1472
        %v1483 = vand.u32 %v1464, %v1472
        %1485 = vmatprep.subr.bf16.mxu0 %v1477
        %1486 = vmatpush1.bf16.msra.mxu0 %v1474
        %1487 = vmatprep.subr.bf16.mxu0 0
        %1488 = vmatpush1.bf16.msra.mxu0 0
        %1489 = vmatprep.subr.bf16.mxu0 0
        %1490 = vmatpush1.bf16.msra.mxu0 0
        %1491 = vmatprep.subr.bf16.mxu0 0
        %1492 = vmatpush1.bf16.msra.mxu0 0
        %1493 = vmatprep.subr.bf16.mxu0 0
        %1494 = vmatpush1.bf16.msra.mxu0 0
        %1495 = vmatprep.subr.bf16.mxu0 0
        %1496 = vmatpush1.bf16.msra.mxu0 0
        %1497 = vmatprep.subr.bf16.mxu0 0
        %1498 = vmatpush1.bf16.msra.mxu0 0
        %1499 = vmatprep.subr.bf16.mxu0 0
        %1500 = vmatpush1.bf16.msra.mxu0 0
        %1501 = vmatprep.subr.bf16.mxu0 0
        %1502 = vmatpush1.bf16.msra.mxu0 0
        %1503 = vmatprep.subr.bf16.mxu0 0
        %1504 = vmatpush1.bf16.msra.mxu0 0
        %1505 = vmatprep.subr.bf16.mxu0 0
        %1506 = vmatpush1.bf16.msra.mxu0 0
        %1507 = vmatprep.subr.bf16.mxu0 0
        %1508 = vmatpush1.bf16.msra.mxu0 0
        %1509 = vmatprep.subr.bf16.mxu0 0
        %1510 = vmatpush1.bf16.msra.mxu0 0
        %1511 = vmatprep.subr.bf16.mxu0 0
        %1512 = vmatpush1.bf16.msra.mxu0 0
        %1513 = vmatprep.subr.bf16.mxu0 0
        %1514 = vmatpush1.bf16.msra.mxu0 0
        %1515 = vmatprep.subr.bf16.mxu0 0
        %1516 = vmatpush1.bf16.msra.mxu0 0
        %1517 = vmatprep.mubr.bf16.mxu0 0
        %1518 = vmatmul.mubr.bf16.gmra.mrb[0].mxu0 %v1467
        %v1519 = vpop.f32.mrb[0].mxu0
        %v1520 = vadd.f32 %v1393, %v1519
        %v1521 = vpop.f32.mrb[0].mxu0
        %v1522 = vadd.f32 %v1395, %v1521
        %v1523 = vpop.f32.mrb[0].mxu0
        %v1524 = vadd.f32 %v1397, %v1523
        %v1525 = vpop.f32.mrb[0].mxu0
        %v1526 = vadd.f32 %v1399, %v1525
        %1527 = vdwg.mxu0
        %1528 = vmatprep.subr.bf16.mxu0 %v1483
        %1529 = vmatpush1.bf16.msra.mxu0 %v1480
        %1530 = vmatprep.subr.bf16.mxu0 0
        %1531 = vmatpush1.bf16.msra.mxu0 0
        %1532 = vmatprep.subr.bf16.mxu0 0
        %1533 = vmatpush1.bf16.msra.mxu0 0
        %1534 = vmatprep.subr.bf16.mxu0 0
        %1535 = vmatpush1.bf16.msra.mxu0 0
        %1536 = vmatprep.subr.bf16.mxu0 0
        %1537 = vmatpush1.bf16.msra.mxu0 0
        %1538 = vmatprep.subr.bf16.mxu0 0
        %1539 = vmatpush1.bf16.msra.mxu0 0
        %1540 = vmatprep.subr.bf16.mxu0 0
        %1541 = vmatpush1.bf16.msra.mxu0 0
        %1542 = vmatprep.subr.bf16.mxu0 0
        %1543 = vmatpush1.bf16.msra.mxu0 0
        %1544 = vmatprep.subr.bf16.mxu0 0
        %1545 = vmatpush1.bf16.msra.mxu0 0
        %1546 = vmatprep.subr.bf16.mxu0 0
        %1547 = vmatpush1.bf16.msra.mxu0 0
        %1548 = vmatprep.subr.bf16.mxu0 0
        %1549 = vmatpush1.bf16.msra.mxu0 0
        %1550 = vmatprep.subr.bf16.mxu0 0
        %1551 = vmatpush1.bf16.msra.mxu0 0
        %1552 = vmatprep.subr.bf16.mxu0 0
        %1553 = vmatpush1.bf16.msra.mxu0 0
        %1554 = vmatprep.subr.bf16.mxu0 0
        %1555 = vmatpush1.bf16.msra.mxu0 0
        %1556 = vmatprep.subr.bf16.mxu0 0
        %1557 = vmatpush1.bf16.msra.mxu0 0
        %1558 = vmatprep.subr.bf16.mxu0 0
        %1559 = vmatpush1.bf16.msra.mxu0 0
        %1560 = vmatprep.mubr.bf16.mxu0 0
        %1561 = vmatmul.mubr.bf16.gmra.mrb[0].mxu0 %v1467
        %v1562 = vpop.f32.mrb[0].mxu0
        %v1563 = vadd.f32 %v1436, %v1562
        %v1564 = vpop.f32.mrb[0].mxu0
        %v1565 = vadd.f32 %v1438, %v1564
        %v1566 = vpop.f32.mrb[0].mxu0
        %v1567 = vadd.f32 %v1440, %v1566
        %v1568 = vpop.f32.mrb[0].mxu0
        %v1569 = vadd.f32 %v1442, %v1568
        %1570 = vdwg.mxu0
        %s1571 = scalar_lea.vmem %s1248, 64 [#allocation2]
        %v1572 = vld [vmem:[%s1571] sm:$0xff]
        %v1573 = vld [vmem:[%s1571 + $0x8] sm:$0xff]
        %v1574 = vld [vmem:[%s1571 + $0x20] sm:$0x77]
        %v1575 = vld [vmem:[%s1571 + $0x28] sm:$0x77]
        %s1576 = scalar_lea.vmem %s1255, 16 [#allocation3]
        %v1577 = vld [vmem:[%s1576] sm:$0xff]
        %v1579 = vcombine.high %v1577, %v1577
        %v1581 = vunpack.c.l.s4 1983009808
        %v1582 = vunpack.c.0.s8 %v1581
        %v1583 = vlaneseq
        %v1584 = vshrl.u32 %v1583, 7
        %v1585 = vsub.s32 %v1582, %v1584
        %v1586 = vrot.slane %v1577, %v1585
        %v1588 = vunpack.c.l.s4 1983009808
        %v1589 = vunpack.c.0.s8 %v1588
        %v1590 = vlaneseq
        %v1591 = vshrl.u32 %v1590, 7
        %v1592 = vsub.s32 %v1589, %v1591
        %v1593 = vrot.slane %v1579, %v1592
        %v1594 = vcombine.high %v1586, %v1586
        %v1595 = vcombine.high %v1593, %v1593
        %v1597 = vand.u32 %v1586, %v1345
        %v1600 = vand.u32 %v1594, %v1345
        %v1603 = vand.u32 %v1593, %v1345
        %v1606 = vand.u32 %v1595, %v1345
        %1608 = vmatprep.subr.bf16.mxu0 %v1600
        %1609 = vmatpush1.bf16.msra.mxu0 %v1597
        %1610 = vmatprep.subr.bf16.mxu0 0
        %1611 = vmatpush1.bf16.msra.mxu0 0
        %1612 = vmatprep.subr.bf16.mxu0 0
        %1613 = vmatpush1.bf16.msra.mxu0 0
        %1614 = vmatprep.subr.bf16.mxu0 0
        %1615 = vmatpush1.bf16.msra.mxu0 0
        %1616 = vmatprep.subr.bf16.mxu0 0
        %1617 = vmatpush1.bf16.msra.mxu0 0
        %1618 = vmatprep.subr.bf16.mxu0 0
        %1619 = vmatpush1.bf16.msra.mxu0 0
        %1620 = vmatprep.subr.bf16.mxu0 0
        %1621 = vmatpush1.bf16.msra.mxu0 0
        %1622 = vmatprep.subr.bf16.mxu0 0
        %1623 = vmatpush1.bf16.msra.mxu0 0
        %1624 = vmatprep.subr.bf16.mxu0 0
        %1625 = vmatpush1.bf16.msra.mxu0 0
        %1626 = vmatprep.subr.bf16.mxu0 0
        %1627 = vmatpush1.bf16.msra.mxu0 0
        %1628 = vmatprep.subr.bf16.mxu0 0
        %1629 = vmatpush1.bf16.msra.mxu0 0
        %1630 = vmatprep.subr.bf16.mxu0 0
        %1631 = vmatpush1.bf16.msra.mxu0 0
        %1632 = vmatprep.subr.bf16.mxu0 0
        %1633 = vmatpush1.bf16.msra.mxu0 0
        %1634 = vmatprep.subr.bf16.mxu0 0
        %1635 = vmatpush1.bf16.msra.mxu0 0
        %1636 = vmatprep.subr.bf16.mxu0 0
        %1637 = vmatpush1.bf16.msra.mxu0 0
        %1638 = vmatprep.subr.bf16.mxu0 0
        %1639 = vmatpush1.bf16.msra.mxu0 0
        %1640 = vmatprep.mubr.bf16.mxu0 0
        %1641 = vmatmul.mubr.bf16.gmra.mrb[0].mxu0 %v1340
        %v1642 = vpop.f32.mrb[0].mxu0
        %v1643 = vadd.f32 0.0, %v1642
        %v1644 = vpop.f32.mrb[0].mxu0
        %v1645 = vadd.f32 0.0, %v1644
        %v1646 = vpop.f32.mrb[0].mxu0
        %v1647 = vadd.f32 0.0, %v1646
        %v1648 = vpop.f32.mrb[0].mxu0
        %v1649 = vadd.f32 0.0, %v1648
        %1650 = vdwg.mxu0
        %1651 = vmatprep.subr.bf16.mxu0 %v1606
        %1652 = vmatpush1.bf16.msra.mxu0 %v1603
        %1653 = vmatprep.subr.bf16.mxu0 0
        %1654 = vmatpush1.bf16.msra.mxu0 0
        %1655 = vmatprep.subr.bf16.mxu0 0
        %1656 = vmatpush1.bf16.msra.mxu0 0
        %1657 = vmatprep.subr.bf16.mxu0 0
        %1658 = vmatpush1.bf16.msra.mxu0 0
        %1659 = vmatprep.subr.bf16.mxu0 0
        %1660 = vmatpush1.bf16.msra.mxu0 0
        %1661 = vmatprep.subr.bf16.mxu0 0
        %1662 = vmatpush1.bf16.msra.mxu0 0
        %1663 = vmatprep.subr.bf16.mxu0 0
        %1664 = vmatpush1.bf16.msra.mxu0 0
        %1665 = vmatprep.subr.bf16.mxu0 0
        %1666 = vmatpush1.bf16.msra.mxu0 0
        %1667 = vmatprep.subr.bf16.mxu0 0
        %1668 = vmatpush1.bf16.msra.mxu0 0
        %1669 = vmatprep.subr.bf16.mxu0 0
        %1670 = vmatpush1.bf16.msra.mxu0 0
        %1671 = vmatprep.subr.bf16.mxu0 0
        %1672 = vmatpush1.bf16.msra.mxu0 0
        %1673 = vmatprep.subr.bf16.mxu0 0
        %1674 = vmatpush1.bf16.msra.mxu0 0
        %1675 = vmatprep.subr.bf16.mxu0 0
        %1676 = vmatpush1.bf16.msra.mxu0 0
        %1677 = vmatprep.subr.bf16.mxu0 0
        %1678 = vmatpush1.bf16.msra.mxu0 0
        %1679 = vmatprep.subr.bf16.mxu0 0
        %1680 = vmatpush1.bf16.msra.mxu0 0
        %1681 = vmatprep.subr.bf16.mxu0 0
        %1682 = vmatpush1.bf16.msra.mxu0 0
        %1683 = vmatprep.mubr.bf16.mxu0 0
        %1684 = vmatmul.mubr.bf16.gmra.mrb[0].mxu0 %v1340
        %v1685 = vpop.f32.mrb[0].mxu0
        %v1686 = vadd.f32 0.0, %v1685
        %v1687 = vpop.f32.mrb[0].mxu0
        %v1688 = vadd.f32 0.0, %v1687
        %v1689 = vpop.f32.mrb[0].mxu0
        %v1690 = vadd.f32 0.0, %v1689
        %v1691 = vpop.f32.mrb[0].mxu0
        %v1692 = vadd.f32 0.0, %v1691
        %1693 = vdwg.mxu0
        %v1698 = vunpack.c.l.b16 %v1572
        %v1699 = vunpack.c.h.b16 %v1572
        %v1700 = vunpack.c.l.b16 %v1573
        %v1701 = vunpack.c.h.b16 %v1573
        %v1702 = vunpack.c.l.b16 %v1574
        %v1703 = vunpack.c.h.b16 %v1574
        %v1704 = vunpack.c.l.b16 %v1575
        %v1705 = vunpack.c.h.b16 %v1575
        %v1706 = vpack.c.b16 %v1702, %v1698
        %v1707 = vpack.c.b16 %v1703, %v1699
        %v1708 = vpack.c.b16 %v1704, %v1700
        %v1709 = vpack.c.b16 %v1705, %v1701
        %v1711 = vand.u32 %v1706, %v1472
        %v1714 = vand.u32 %v1707, %v1472
        %v1717 = vand.u32 %v1708, %v1472
        %v1720 = vand.u32 %v1709, %v1472
        %1722 = vmatprep.subr.bf16.mxu0 %v1714
        %1723 = vmatpush1.bf16.msra.mxu0 %v1711
        %1724 = vmatprep.subr.bf16.mxu0 0
        %1725 = vmatpush1.bf16.msra.mxu0 0
        %1726 = vmatprep.subr.bf16.mxu0 0
        %1727 = vmatpush1.bf16.msra.mxu0 0
        %1728 = vmatprep.subr.bf16.mxu0 0
        %1729 = vmatpush1.bf16.msra.mxu0 0
        %1730 = vmatprep.subr.bf16.mxu0 0
        %1731 = vmatpush1.bf16.msra.mxu0 0
        %1732 = vmatprep.subr.bf16.mxu0 0
        %1733 = vmatpush1.bf16.msra.mxu0 0
        %1734 = vmatprep.subr.bf16.mxu0 0
        %1735 = vmatpush1.bf16.msra.mxu0 0
        %1736 = vmatprep.subr.bf16.mxu0 0
        %1737 = vmatpush1.bf16.msra.mxu0 0
        %1738 = vmatprep.subr.bf16.mxu0 0
        %1739 = vmatpush1.bf16.msra.mxu0 0
        %1740 = vmatprep.subr.bf16.mxu0 0
        %1741 = vmatpush1.bf16.msra.mxu0 0
        %1742 = vmatprep.subr.bf16.mxu0 0
        %1743 = vmatpush1.bf16.msra.mxu0 0
        %1744 = vmatprep.subr.bf16.mxu0 0
        %1745 = vmatpush1.bf16.msra.mxu0 0
        %1746 = vmatprep.subr.bf16.mxu0 0
        %1747 = vmatpush1.bf16.msra.mxu0 0
        %1748 = vmatprep.subr.bf16.mxu0 0
        %1749 = vmatpush1.bf16.msra.mxu0 0
        %1750 = vmatprep.subr.bf16.mxu0 0
        %1751 = vmatpush1.bf16.msra.mxu0 0
        %1752 = vmatprep.subr.bf16.mxu0 0
        %1753 = vmatpush1.bf16.msra.mxu0 0
        %1754 = vmatprep.mubr.bf16.mxu0 0
        %1755 = vmatmul.mubr.bf16.gmra.mrb[0].mxu0 %v1467
        %v1756 = vpop.f32.mrb[0].mxu0
        %v1757 = vadd.f32 %v1643, %v1756
        %v1758 = vpop.f32.mrb[0].mxu0
        %v1759 = vadd.f32 %v1645, %v1758
        %v1760 = vpop.f32.mrb[0].mxu0
        %v1761 = vadd.f32 %v1647, %v1760
        %v1762 = vpop.f32.mrb[0].mxu0
        %v1763 = vadd.f32 %v1649, %v1762
        %1764 = vdwg.mxu0
        %1765 = vmatprep.subr.bf16.mxu0 %v1720
        %1766 = vmatpush1.bf16.msra.mxu0 %v1717
        %1767 = vmatprep.subr.bf16.mxu0 0
        %1768 = vmatpush1.bf16.msra.mxu0 0
        %1769 = vmatprep.subr.bf16.mxu0 0
        %1770 = vmatpush1.bf16.msra.mxu0 0
        %1771 = vmatprep.subr.bf16.mxu0 0
        %1772 = vmatpush1.bf16.msra.mxu0 0
        %1773 = vmatprep.subr.bf16.mxu0 0
        %1774 = vmatpush1.bf16.msra.mxu0 0
        %1775 = vmatprep.subr.bf16.mxu0 0
        %1776 = vmatpush1.bf16.msra.mxu0 0
        %1777 = vmatprep.subr.bf16.mxu0 0
        %1778 = vmatpush1.bf16.msra.mxu0 0
        %1779 = vmatprep.subr.bf16.mxu0 0
        %1780 = vmatpush1.bf16.msra.mxu0 0
        %1781 = vmatprep.subr.bf16.mxu0 0
        %1782 = vmatpush1.bf16.msra.mxu0 0
        %1783 = vmatprep.subr.bf16.mxu0 0
        %1784 = vmatpush1.bf16.msra.mxu0 0
        %1785 = vmatprep.subr.bf16.mxu0 0
        %1786 = vmatpush1.bf16.msra.mxu0 0
        %1787 = vmatprep.subr.bf16.mxu0 0
        %1788 = vmatpush1.bf16.msra.mxu0 0
        %1789 = vmatprep.subr.bf16.mxu0 0
        %1790 = vmatpush1.bf16.msra.mxu0 0
        %1791 = vmatprep.subr.bf16.mxu0 0
        %1792 = vmatpush1.bf16.msra.mxu0 0
        %1793 = vmatprep.subr.bf16.mxu0 0
        %1794 = vmatpush1.bf16.msra.mxu0 0
        %1795 = vmatprep.subr.bf16.mxu0 0
        %1796 = vmatpush1.bf16.msra.mxu0 0
        %1797 = vmatprep.mubr.bf16.mxu0 0
        %1798 = vmatmul.mubr.bf16.gmra.mrb[0].mxu0 %v1467
        %v1799 = vpop.f32.mrb[0].mxu0
        %v1800 = vadd.f32 %v1686, %v1799
        %v1801 = vpop.f32.mrb[0].mxu0
        %v1802 = vadd.f32 %v1688, %v1801
        %v1803 = vpop.f32.mrb[0].mxu0
        %v1804 = vadd.f32 %v1690, %v1803
        %v1805 = vpop.f32.mrb[0].mxu0
        %v1806 = vadd.f32 %v1692, %v1805
        %1807 = vdwg.mxu0
        %v1808 = vmax.f32 %v1520, %v1757
        %v1809 = vmax.f32 %v1522, %v1759
        %v1810 = vmax.f32 %v1563, %v1800
        %v1811 = vmax.f32 %v1565, %v1802
        %v1812 = vmax.f32 %v1524, %v1761
        %v1813 = vmax.f32 %v1526, %v1763
        %v1814 = vmax.f32 %v1567, %v1804
        %v1815 = vmax.f32 %v1569, %v1806
        %s1816 = scalar_lea.vmem %s1248, 128 [#allocation2]
        %v1817 = vld [vmem:[%s1816] sm:$0xff]
        %v1818 = vld [vmem:[%s1816 + $0x8] sm:$0xff]
        %v1819 = vld [vmem:[%s1816 + $0x20] sm:$0x77]
        %v1820 = vld [vmem:[%s1816 + $0x28] sm:$0x77]
        %s1821 = scalar_lea.vmem %s1255, 32 [#allocation3]
        %v1822 = vld [vmem:[%s1821] sm:$0xff]
        %v1824 = vcombine.high %v1822, %v1822
        %v1826 = vunpack.c.l.s4 1983009808
        %v1827 = vunpack.c.0.s8 %v1826
        %v1828 = vlaneseq
        %v1829 = vshrl.u32 %v1828, 7
        %v1830 = vsub.s32 %v1827, %v1829
        %v1831 = vrot.slane %v1822, %v1830
        %v1833 = vunpack.c.l.s4 1983009808
        %v1834 = vunpack.c.0.s8 %v1833
        %v1835 = vlaneseq
        %v1836 = vshrl.u32 %v1835, 7
        %v1837 = vsub.s32 %v1834, %v1836
        %v1838 = vrot.slane %v1824, %v1837
        %v1839 = vcombine.high %v1831, %v1831
        %v1840 = vcombine.high %v1838, %v1838
        %v1842 = vand.u32 %v1831, %v1345
        %v1845 = vand.u32 %v1839, %v1345
        %v1848 = vand.u32 %v1838, %v1345
        %v1851 = vand.u32 %v1840, %v1345
        %1853 = vmatprep.subr.bf16.mxu0 %v1845
        %1854 = vmatpush1.bf16.msra.mxu0 %v1842
        %1855 = vmatprep.subr.bf16.mxu0 0
        %1856 = vmatpush1.bf16.msra.mxu0 0
        %1857 = vmatprep.subr.bf16.mxu0 0
        %1858 = vmatpush1.bf16.msra.mxu0 0
        %1859 = vmatprep.subr.bf16.mxu0 0
        %1860 = vmatpush1.bf16.msra.mxu0 0
        %1861 = vmatprep.subr.bf16.mxu0 0
        %1862 = vmatpush1.bf16.msra.mxu0 0
        %1863 = vmatprep.subr.bf16.mxu0 0
        %1864 = vmatpush1.bf16.msra.mxu0 0
        %1865 = vmatprep.subr.bf16.mxu0 0
        %1866 = vmatpush1.bf16.msra.mxu0 0
        %1867 = vmatprep.subr.bf16.mxu0 0
        %1868 = vmatpush1.bf16.msra.mxu0 0
        %1869 = vmatprep.subr.bf16.mxu0 0
        %1870 = vmatpush1.bf16.msra.mxu0 0
        %1871 = vmatprep.subr.bf16.mxu0 0
        %1872 = vmatpush1.bf16.msra.mxu0 0
        %1873 = vmatprep.subr.bf16.mxu0 0
        %1874 = vmatpush1.bf16.msra.mxu0 0
        %1875 = vmatprep.subr.bf16.mxu0 0
        %1876 = vmatpush1.bf16.msra.mxu0 0
        %1877 = vmatprep.subr.bf16.mxu0 0
        %1878 = vmatpush1.bf16.msra.mxu0 0
        %1879 = vmatprep.subr.bf16.mxu0 0
        %1880 = vmatpush1.bf16.msra.mxu0 0
        %1881 = vmatprep.subr.bf16.mxu0 0
        %1882 = vmatpush1.bf16.msra.mxu0 0
        %1883 = vmatprep.subr.bf16.mxu0 0
        %1884 = vmatpush1.bf16.msra.mxu0 0
        %1885 = vmatprep.mubr.bf16.mxu0 0
        %1886 = vmatmul.mubr.bf16.gmra.mrb[0].mxu0 %v1340
        %v1887 = vpop.f32.mrb[0].mxu0
        %v1888 = vadd.f32 0.0, %v1887
        %v1889 = vpop.f32.mrb[0].mxu0
        %v1890 = vadd.f32 0.0, %v1889
        %v1891 = vpop.f32.mrb[0].mxu0
        %v1892 = vadd.f32 0.0, %v1891
        %v1893 = vpop.f32.mrb[0].mxu0
        %v1894 = vadd.f32 0.0, %v1893
        %1895 = vdwg.mxu0
        %1896 = vmatprep.subr.bf16.mxu0 %v1851
        %1897 = vmatpush1.bf16.msra.mxu0 %v1848
        %1898 = vmatprep.subr.bf16.mxu0 0
        %1899 = vmatpush1.bf16.msra.mxu0 0
        %1900 = vmatprep.subr.bf16.mxu0 0
        %1901 = vmatpush1.bf16.msra.mxu0 0
        %1902 = vmatprep.subr.bf16.mxu0 0
        %1903 = vmatpush1.bf16.msra.mxu0 0
        %1904 = vmatprep.subr.bf16.mxu0 0
        %1905 = vmatpush1.bf16.msra.mxu0 0
        %1906 = vmatprep.subr.bf16.mxu0 0
        %1907 = vmatpush1.bf16.msra.mxu0 0
        %1908 = vmatprep.subr.bf16.mxu0 0
        %1909 = vmatpush1.bf16.msra.mxu0 0
        %1910 = vmatprep.subr.bf16.mxu0 0
        %1911 = vmatpush1.bf16.msra.mxu0 0
        %1912 = vmatprep.subr.bf16.mxu0 0
        %1913 = vmatpush1.bf16.msra.mxu0 0
        %1914 = vmatprep.subr.bf16.mxu0 0
        %1915 = vmatpush1.bf16.msra.mxu0 0
        %1916 = vmatprep.subr.bf16.mxu0 0
        %1917 = vmatpush1.bf16.msra.mxu0 0
        %1918 = vmatprep.subr.bf16.mxu0 0
        %1919 = vmatpush1.bf16.msra.mxu0 0
        %1920 = vmatprep.subr.bf16.mxu0 0
        %1921 = vmatpush1.bf16.msra.mxu0 0
        %1922 = vmatprep.subr.bf16.mxu0 0
        %1923 = vmatpush1.bf16.msra.mxu0 0
        %1924 = vmatprep.subr.bf16.mxu0 0
        %1925 = vmatpush1.bf16.msra.mxu0 0
        %1926 = vmatprep.subr.bf16.mxu0 0
        %1927 = vmatpush1.bf16.msra.mxu0 0
        %1928 = vmatprep.mubr.bf16.mxu0 0
        %1929 = vmatmul.mubr.bf16.gmra.mrb[0].mxu0 %v1340
        %v1930 = vpop.f32.mrb[0].mxu0
        %v1931 = vadd.f32 0.0, %v1930
        %v1932 = vpop.f32.mrb[0].mxu0
        %v1933 = vadd.f32 0.0, %v1932
        %v1934 = vpop.f32.mrb[0].mxu0
        %v1935 = vadd.f32 0.0, %v1934
        %v1936 = vpop.f32.mrb[0].mxu0
        %v1937 = vadd.f32 0.0, %v1936
        %1938 = vdwg.mxu0
        %v1943 = vunpack.c.l.b16 %v1817
        %v1944 = vunpack.c.h.b16 %v1817
        %v1945 = vunpack.c.l.b16 %v1818
        %v1946 = vunpack.c.h.b16 %v1818
        %v1947 = vunpack.c.l.b16 %v1819
        %v1948 = vunpack.c.h.b16 %v1819
        %v1949 = vunpack.c.l.b16 %v1820
        %v1950 = vunpack.c.h.b16 %v1820
        %v1951 = vpack.c.b16 %v1947, %v1943
        %v1952 = vpack.c.b16 %v1948, %v1944
        %v1953 = vpack.c.b16 %v1949, %v1945
        %v1954 = vpack.c.b16 %v1950, %v1946
        %v1956 = vand.u32 %v1951, %v1472
        %v1959 = vand.u32 %v1952, %v1472
        %v1962 = vand.u32 %v1953, %v1472
        %v1965 = vand.u32 %v1954, %v1472
        %1967 = vmatprep.subr.bf16.mxu0 %v1959
        %1968 = vmatpush1.bf16.msra.mxu0 %v1956
        %1969 = vmatprep.subr.bf16.mxu0 0
        %1970 = vmatpush1.bf16.msra.mxu0 0
        %1971 = vmatprep.subr.bf16.mxu0 0
        %1972 = vmatpush1.bf16.msra.mxu0 0
        %1973 = vmatprep.subr.bf16.mxu0 0
        %1974 = vmatpush1.bf16.msra.mxu0 0
        %1975 = vmatprep.subr.bf16.mxu0 0
        %1976 = vmatpush1.bf16.msra.mxu0 0
        %1977 = vmatprep.subr.bf16.mxu0 0
        %1978 = vmatpush1.bf16.msra.mxu0 0
        %1979 = vmatprep.subr.bf16.mxu0 0
        %1980 = vmatpush1.bf16.msra.mxu0 0
        %1981 = vmatprep.subr.bf16.mxu0 0
        %1982 = vmatpush1.bf16.msra.mxu0 0
        %1983 = vmatprep.subr.bf16.mxu0 0
        %1984 = vmatpush1.bf16.msra.mxu0 0
        %1985 = vmatprep.subr.bf16.mxu0 0
        %1986 = vmatpush1.bf16.msra.mxu0 0
        %1987 = vmatprep.subr.bf16.mxu0 0
        %1988 = vmatpush1.bf16.msra.mxu0 0
        %1989 = vmatprep.subr.bf16.mxu0 0
        %1990 = vmatpush1.bf16.msra.mxu0 0
        %1991 = vmatprep.subr.bf16.mxu0 0
        %1992 = vmatpush1.bf16.msra.mxu0 0
        %1993 = vmatprep.subr.bf16.mxu0 0
        %1994 = vmatpush1.bf16.msra.mxu0 0
        %1995 = vmatprep.subr.bf16.mxu0 0
        %1996 = vmatpush1.bf16.msra.mxu0 0
        %1997 = vmatprep.subr.bf16.mxu0 0
        %1998 = vmatpush1.bf16.msra.mxu0 0
        %1999 = vmatprep.mubr.bf16.mxu0 0
        %2000 = vmatmul.mubr.bf16.gmra.mrb[0].mxu0 %v1467
        %v2001 = vpop.f32.mrb[0].mxu0
        %v2002 = vadd.f32 %v1888, %v2001
        %v2003 = vpop.f32.mrb[0].mxu0
        %v2004 = vadd.f32 %v1890, %v2003
        %v2005 = vpop.f32.mrb[0].mxu0
        %v2006 = vadd.f32 %v1892, %v2005
        %v2007 = vpop.f32.mrb[0].mxu0
        %v2008 = vadd.f32 %v1894, %v2007
        %2009 = vdwg.mxu0
        %2010 = vmatprep.subr.bf16.mxu0 %v1965
        %2011 = vmatpush1.bf16.msra.mxu0 %v1962
        %2012 = vmatprep.subr.bf16.mxu0 0
        %2013 = vmatpush1.bf16.msra.mxu0 0
        %2014 = vmatprep.subr.bf16.mxu0 0
        %2015 = vmatpush1.bf16.msra.mxu0 0
        %2016 = vmatprep.subr.bf16.mxu0 0
        %2017 = vmatpush1.bf16.msra.mxu0 0
        %2018 = vmatprep.subr.bf16.mxu0 0
        %2019 = vmatpush1.bf16.msra.mxu0 0
        %2020 = vmatprep.subr.bf16.mxu0 0
        %2021 = vmatpush1.bf16.msra.mxu0 0
        %2022 = vmatprep.subr.bf16.mxu0 0
        %2023 = vmatpush1.bf16.msra.mxu0 0
        %2024 = vmatprep.subr.bf16.mxu0 0
        %2025 = vmatpush1.bf16.msra.mxu0 0
        %2026 = vmatprep.subr.bf16.mxu0 0
        %2027 = vmatpush1.bf16.msra.mxu0 0
        %2028 = vmatprep.subr.bf16.mxu0 0
        %2029 = vmatpush1.bf16.msra.mxu0 0
        %2030 = vmatprep.subr.bf16.mxu0 0
        %2031 = vmatpush1.bf16.msra.mxu0 0
        %2032 = vmatprep.subr.bf16.mxu0 0
        %2033 = vmatpush1.bf16.msra.mxu0 0
        %2034 = vmatprep.subr.bf16.mxu0 0
        %2035 = vmatpush1.bf16.msra.mxu0 0
        %2036 = vmatprep.subr.bf16.mxu0 0
        %2037 = vmatpush1.bf16.msra.mxu0 0
        %2038 = vmatprep.subr.bf16.mxu0 0
        %2039 = vmatpush1.bf16.msra.mxu0 0
        %2040 = vmatprep.subr.bf16.mxu0 0
        %2041 = vmatpush1.bf16.msra.mxu0 0
        %2042 = vmatprep.mubr.bf16.mxu0 0
        %2043 = vmatmul.mubr.bf16.gmra.mrb[0].mxu0 %v1467
        %v2044 = vpop.f32.mrb[0].mxu0
        %v2045 = vadd.f32 %v1931, %v2044
        %v2046 = vpop.f32.mrb[0].mxu0
        %v2047 = vadd.f32 %v1933, %v2046
        %v2048 = vpop.f32.mrb[0].mxu0
        %v2049 = vadd.f32 %v1935, %v2048
        %v2050 = vpop.f32.mrb[0].mxu0
        %v2051 = vadd.f32 %v1937, %v2050
        %2052 = vdwg.mxu0
        %v2053 = vmax.f32 %v1808, %v2002
        %v2054 = vmax.f32 %v1809, %v2004
        %v2055 = vmax.f32 %v1810, %v2045
        %v2056 = vmax.f32 %v1811, %v2047
        %v2057 = vmax.f32 %v1812, %v2006
        %v2058 = vmax.f32 %v1813, %v2008
        %v2059 = vmax.f32 %v1814, %v2049
        %v2060 = vmax.f32 %v1815, %v2051
        %s2061 = scalar_lea.vmem %s1248, 192 [#allocation2]
        %v2062 = vld [vmem:[%s2061] sm:$0xff]
        %v2063 = vld [vmem:[%s2061 + $0x8] sm:$0xff]
        %v2064 = vld [vmem:[%s2061 + $0x20] sm:$0x77]
        %v2065 = vld [vmem:[%s2061 + $0x28] sm:$0x77]
        %s2066 = scalar_lea.vmem %s1255, 48 [#allocation3]
        %v2067 = vld [vmem:[%s2066] sm:$0xff]
        %v2069 = vcombine.high %v2067, %v2067
        %v2071 = vunpack.c.l.s4 1983009808
        %v2072 = vunpack.c.0.s8 %v2071
        %v2073 = vlaneseq
        %v2074 = vshrl.u32 %v2073, 7
        %v2075 = vsub.s32 %v2072, %v2074
        %v2076 = vrot.slane %v2067, %v2075
        %v2078 = vunpack.c.l.s4 1983009808
        %v2079 = vunpack.c.0.s8 %v2078
        %v2080 = vlaneseq
        %v2081 = vshrl.u32 %v2080, 7
        %v2082 = vsub.s32 %v2079, %v2081
        %v2083 = vrot.slane %v2069, %v2082
        %v2084 = vcombine.high %v2076, %v2076
        %v2085 = vcombine.high %v2083, %v2083
        %v2087 = vand.u32 %v2076, %v1345
        %v2090 = vand.u32 %v2084, %v1345
        %v2093 = vand.u32 %v2083, %v1345
        %v2096 = vand.u32 %v2085, %v1345
        %2098 = vmatprep.subr.bf16.mxu0 %v2090
        %2099 = vmatpush1.bf16.msra.mxu0 %v2087
        %2100 = vmatprep.subr.bf16.mxu0 0
        %2101 = vmatpush1.bf16.msra.mxu0 0
        %2102 = vmatprep.subr.bf16.mxu0 0
        %2103 = vmatpush1.bf16.msra.mxu0 0
        %2104 = vmatprep.subr.bf16.mxu0 0
        %2105 = vmatpush1.bf16.msra.mxu0 0
        %2106 = vmatprep.subr.bf16.mxu0 0
        %2107 = vmatpush1.bf16.msra.mxu0 0
        %2108 = vmatprep.subr.bf16.mxu0 0
        %2109 = vmatpush1.bf16.msra.mxu0 0
        %2110 = vmatprep.subr.bf16.mxu0 0
        %2111 = vmatpush1.bf16.msra.mxu0 0
        %2112 = vmatprep.subr.bf16.mxu0 0
        %2113 = vmatpush1.bf16.msra.mxu0 0
        %2114 = vmatprep.subr.bf16.mxu0 0
        %2115 = vmatpush1.bf16.msra.mxu0 0
        %2116 = vmatprep.subr.bf16.mxu0 0
        %2117 = vmatpush1.bf16.msra.mxu0 0
        %2118 = vmatprep.subr.bf16.mxu0 0
        %2119 = vmatpush1.bf16.msra.mxu0 0
        %2120 = vmatprep.subr.bf16.mxu0 0
        %2121 = vmatpush1.bf16.msra.mxu0 0
        %2122 = vmatprep.subr.bf16.mxu0 0
        %2123 = vmatpush1.bf16.msra.mxu0 0
        %2124 = vmatprep.subr.bf16.mxu0 0
        %2125 = vmatpush1.bf16.msra.mxu0 0
        %2126 = vmatprep.subr.bf16.mxu0 0
        %2127 = vmatpush1.bf16.msra.mxu0 0
        %2128 = vmatprep.subr.bf16.mxu0 0
        %2129 = vmatpush1.bf16.msra.mxu0 0
        %2130 = vmatprep.mubr.bf16.mxu0 0
        %2131 = vmatmul.mubr.bf16.gmra.mrb[0].mxu0 %v1340
        %v2132 = vpop.f32.mrb[0].mxu0
        %v2133 = vadd.f32 0.0, %v2132
        %v2134 = vpop.f32.mrb[0].mxu0
        %v2135 = vadd.f32 0.0, %v2134
        %v2136 = vpop.f32.mrb[0].mxu0
        %v2137 = vadd.f32 0.0, %v2136
        %v2138 = vpop.f32.mrb[0].mxu0
        %v2139 = vadd.f32 0.0, %v2138
        %2140 = vdwg.mxu0
        %2141 = vmatprep.subr.bf16.mxu0 %v2096
        %2142 = vmatpush1.bf16.msra.mxu0 %v2093
        %2143 = vmatprep.subr.bf16.mxu0 0
        %2144 = vmatpush1.bf16.msra.mxu0 0
        %2145 = vmatprep.subr.bf16.mxu0 0
        %2146 = vmatpush1.bf16.msra.mxu0 0
        %2147 = vmatprep.subr.bf16.mxu0 0
        %2148 = vmatpush1.bf16.msra.mxu0 0
        %2149 = vmatprep.subr.bf16.mxu0 0
        %2150 = vmatpush1.bf16.msra.mxu0 0
        %2151 = vmatprep.subr.bf16.mxu0 0
        %2152 = vmatpush1.bf16.msra.mxu0 0
        %2153 = vmatprep.subr.bf16.mxu0 0
        %2154 = vmatpush1.bf16.msra.mxu0 0
        %2155 = vmatprep.subr.bf16.mxu0 0
        %2156 = vmatpush1.bf16.msra.mxu0 0
        %2157 = vmatprep.subr.bf16.mxu0 0
        %2158 = vmatpush1.bf16.msra.mxu0 0
        %2159 = vmatprep.subr.bf16.mxu0 0
        %2160 = vmatpush1.bf16.msra.mxu0 0
        %2161 = vmatprep.subr.bf16.mxu0 0
        %2162 = vmatpush1.bf16.msra.mxu0 0
        %2163 = vmatprep.subr.bf16.mxu0 0
        %2164 = vmatpush1.bf16.msra.mxu0 0
        %2165 = vmatprep.subr.bf16.mxu0 0
        %2166 = vmatpush1.bf16.msra.mxu0 0
        %2167 = vmatprep.subr.bf16.mxu0 0
        %2168 = vmatpush1.bf16.msra.mxu0 0
        %2169 = vmatprep.subr.bf16.mxu0 0
        %2170 = vmatpush1.bf16.msra.mxu0 0
        %2171 = vmatprep.subr.bf16.mxu0 0
        %2172 = vmatpush1.bf16.msra.mxu0 0
        %2173 = vmatprep.mubr.bf16.mxu0 0
        %2174 = vmatmul.mubr.bf16.gmra.mrb[0].mxu0 %v1340
        %v2175 = vpop.f32.mrb[0].mxu0
        %v2176 = vadd.f32 0.0, %v2175
        %v2177 = vpop.f32.mrb[0].mxu0
        %v2178 = vadd.f32 0.0, %v2177
        %v2179 = vpop.f32.mrb[0].mxu0
        %v2180 = vadd.f32 0.0, %v2179
        %v2181 = vpop.f32.mrb[0].mxu0
        %v2182 = vadd.f32 0.0, %v2181
        %2183 = vdwg.mxu0
        %v2188 = vunpack.c.l.b16 %v2062
        %v2189 = vunpack.c.h.b16 %v2062
        %v2190 = vunpack.c.l.b16 %v2063
        %v2191 = vunpack.c.h.b16 %v2063
        %v2192 = vunpack.c.l.b16 %v2064
        %v2193 = vunpack.c.h.b16 %v2064
        %v2194 = vunpack.c.l.b16 %v2065
        %v2195 = vunpack.c.h.b16 %v2065
        %v2196 = vpack.c.b16 %v2192, %v2188
        %v2197 = vpack.c.b16 %v2193, %v2189
        %v2198 = vpack.c.b16 %v2194, %v2190
        %v2199 = vpack.c.b16 %v2195, %v2191
        %v2201 = vand.u32 %v2196, %v1472
        %v2204 = vand.u32 %v2197, %v1472
        %v2207 = vand.u32 %v2198, %v1472
        %v2210 = vand.u32 %v2199, %v1472
        %2212 = vmatprep.subr.bf16.mxu0 %v2204
        %2213 = vmatpush1.bf16.msra.mxu0 %v2201
        %2214 = vmatprep.subr.bf16.mxu0 0
        %2215 = vmatpush1.bf16.msra.mxu0 0
        %2216 = vmatprep.subr.bf16.mxu0 0
        %2217 = vmatpush1.bf16.msra.mxu0 0
        %2218 = vmatprep.subr.bf16.mxu0 0
        %2219 = vmatpush1.bf16.msra.mxu0 0
        %2220 = vmatprep.subr.bf16.mxu0 0
        %2221 = vmatpush1.bf16.msra.mxu0 0
        %2222 = vmatprep.subr.bf16.mxu0 0
        %2223 = vmatpush1.bf16.msra.mxu0 0
        %2224 = vmatprep.subr.bf16.mxu0 0
        %2225 = vmatpush1.bf16.msra.mxu0 0
        %2226 = vmatprep.subr.bf16.mxu0 0
        %2227 = vmatpush1.bf16.msra.mxu0 0
        %2228 = vmatprep.subr.bf16.mxu0 0
        %2229 = vmatpush1.bf16.msra.mxu0 0
        %2230 = vmatprep.subr.bf16.mxu0 0
        %2231 = vmatpush1.bf16.msra.mxu0 0
        %2232 = vmatprep.subr.bf16.mxu0 0
        %2233 = vmatpush1.bf16.msra.mxu0 0
        %2234 = vmatprep.subr.bf16.mxu0 0
        %2235 = vmatpush1.bf16.msra.mxu0 0
        %2236 = vmatprep.subr.bf16.mxu0 0
        %2237 = vmatpush1.bf16.msra.mxu0 0
        %2238 = vmatprep.subr.bf16.mxu0 0
        %2239 = vmatpush1.bf16.msra.mxu0 0
        %2240 = vmatprep.subr.bf16.mxu0 0
        %2241 = vmatpush1.bf16.msra.mxu0 0
        %2242 = vmatprep.subr.bf16.mxu0 0
        %2243 = vmatpush1.bf16.msra.mxu0 0
        %2244 = vmatprep.mubr.bf16.mxu0 0
        %2245 = vmatmul.mubr.bf16.gmra.mrb[0].mxu0 %v1467
        %v2246 = vpop.f32.mrb[0].mxu0
        %v2247 = vadd.f32 %v2133, %v2246
        %v2248 = vpop.f32.mrb[0].mxu0
        %v2249 = vadd.f32 %v2135, %v2248
        %v2250 = vpop.f32.mrb[0].mxu0
        %v2251 = vadd.f32 %v2137, %v2250
        %v2252 = vpop.f32.mrb[0].mxu0
        %v2253 = vadd.f32 %v2139, %v2252
        %2254 = vdwg.mxu0
        %2255 = vmatprep.subr.bf16.mxu0 %v2210
        %2256 = vmatpush1.bf16.msra.mxu0 %v2207
        %2257 = vmatprep.subr.bf16.mxu0 0
        %2258 = vmatpush1.bf16.msra.mxu0 0
        %2259 = vmatprep.subr.bf16.mxu0 0
        %2260 = vmatpush1.bf16.msra.mxu0 0
        %2261 = vmatprep.subr.bf16.mxu0 0
        %2262 = vmatpush1.bf16.msra.mxu0 0
        %2263 = vmatprep.subr.bf16.mxu0 0
        %2264 = vmatpush1.bf16.msra.mxu0 0
        %2265 = vmatprep.subr.bf16.mxu0 0
        %2266 = vmatpush1.bf16.msra.mxu0 0
        %2267 = vmatprep.subr.bf16.mxu0 0
        %2268 = vmatpush1.bf16.msra.mxu0 0
        %2269 = vmatprep.subr.bf16.mxu0 0
        %2270 = vmatpush1.bf16.msra.mxu0 0
        %2271 = vmatprep.subr.bf16.mxu0 0
        %2272 = vmatpush1.bf16.msra.mxu0 0
        %2273 = vmatprep.subr.bf16.mxu0 0
        %2274 = vmatpush1.bf16.msra.mxu0 0
        %2275 = vmatprep.subr.bf16.mxu0 0
        %2276 = vmatpush1.bf16.msra.mxu0 0
        %2277 = vmatprep.subr.bf16.mxu0 0
        %2278 = vmatpush1.bf16.msra.mxu0 0
        %2279 = vmatprep.subr.bf16.mxu0 0
        %2280 = vmatpush1.bf16.msra.mxu0 0
        %2281 = vmatprep.subr.bf16.mxu0 0
        %2282 = vmatpush1.bf16.msra.mxu0 0
        %2283 = vmatprep.subr.bf16.mxu0 0
        %2284 = vmatpush1.bf16.msra.mxu0 0
        %2285 = vmatprep.subr.bf16.mxu0 0
        %2286 = vmatpush1.bf16.msra.mxu0 0
        %2287 = vmatprep.mubr.bf16.mxu0 0
        %2288 = vmatmul.mubr.bf16.gmra.mrb[0].mxu0 %v1467
        %v2289 = vpop.f32.mrb[0].mxu0
        %v2290 = vadd.f32 %v2176, %v2289
        %v2291 = vpop.f32.mrb[0].mxu0
        %v2292 = vadd.f32 %v2178, %v2291
        %v2293 = vpop.f32.mrb[0].mxu0
        %v2294 = vadd.f32 %v2180, %v2293
        %v2295 = vpop.f32.mrb[0].mxu0
        %v2296 = vadd.f32 %v2182, %v2295
        %2297 = vdwg.mxu0
        %v2298 = vmax.f32 %v2053, %v2247
        %v2299 = vmax.f32 %v2054, %v2249
        %v2300 = vmax.f32 %v2055, %v2290
        %v2301 = vmax.f32 %v2056, %v2292
        %v2302 = vmax.f32 %v2057, %v2251
        %v2303 = vmax.f32 %v2058, %v2253
        %v2304 = vmax.f32 %v2059, %v2294
        %v2305 = vmax.f32 %v2060, %v2296
        %s2306 = scalar_lea.vmem %s1248, 256 [#allocation2]
        %v2307 = vld [vmem:[%s2306] sm:$0xff]
        %v2308 = vld [vmem:[%s2306 + $0x8] sm:$0xff]
        %v2309 = vld [vmem:[%s2306 + $0x20] sm:$0x77]
        %v2310 = vld [vmem:[%s2306 + $0x28] sm:$0x77]
        %s2311 = scalar_lea.vmem %s1255, 64 [#allocation3]
        %v2312 = vld [vmem:[%s2311] sm:$0xff]
        %v2314 = vcombine.high %v2312, %v2312
        %v2316 = vunpack.c.l.s4 1983009808
        %v2317 = vunpack.c.0.s8 %v2316
        %v2318 = vlaneseq
        %v2319 = vshrl.u32 %v2318, 7
        %v2320 = vsub.s32 %v2317, %v2319
        %v2321 = vrot.slane %v2312, %v2320
        %v2323 = vunpack.c.l.s4 1983009808
        %v2324 = vunpack.c.0.s8 %v2323
        %v2325 = vlaneseq
        %v2326 = vshrl.u32 %v2325, 7
        %v2327 = vsub.s32 %v2324, %v2326
        %v2328 = vrot.slane %v2314, %v2327
        %v2329 = vcombine.high %v2321, %v2321
        %v2330 = vcombine.high %v2328, %v2328
        %v2332 = vand.u32 %v2321, %v1345
        %v2335 = vand.u32 %v2329, %v1345
        %v2338 = vand.u32 %v2328, %v1345
        %v2341 = vand.u32 %v2330, %v1345
        %2343 = vmatprep.subr.bf16.mxu0 %v2335
        %2344 = vmatpush1.bf16.msra.mxu0 %v2332
        %2345 = vmatprep.subr.bf16.mxu0 0
        %2346 = vmatpush1.bf16.msra.mxu0 0
        %2347 = vmatprep.subr.bf16.mxu0 0
        %2348 = vmatpush1.bf16.msra.mxu0 0
        %2349 = vmatprep.subr.bf16.mxu0 0
        %2350 = vmatpush1.bf16.msra.mxu0 0
        %2351 = vmatprep.subr.bf16.mxu0 0
        %2352 = vmatpush1.bf16.msra.mxu0 0
        %2353 = vmatprep.subr.bf16.mxu0 0
        %2354 = vmatpush1.bf16.msra.mxu0 0
        %2355 = vmatprep.subr.bf16.mxu0 0
        %2356 = vmatpush1.bf16.msra.mxu0 0
        %2357 = vmatprep.subr.bf16.mxu0 0
        %2358 = vmatpush1.bf16.msra.mxu0 0
        %2359 = vmatprep.subr.bf16.mxu0 0
        %2360 = vmatpush1.bf16.msra.mxu0 0
        %2361 = vmatprep.subr.bf16.mxu0 0
        %2362 = vmatpush1.bf16.msra.mxu0 0
        %2363 = vmatprep.subr.bf16.mxu0 0
        %2364 = vmatpush1.bf16.msra.mxu0 0
        %2365 = vmatprep.subr.bf16.mxu0 0
        %2366 = vmatpush1.bf16.msra.mxu0 0
        %2367 = vmatprep.subr.bf16.mxu0 0
        %2368 = vmatpush1.bf16.msra.mxu0 0
        %2369 = vmatprep.subr.bf16.mxu0 0
        %2370 = vmatpush1.bf16.msra.mxu0 0
        %2371 = vmatprep.subr.bf16.mxu0 0
        %2372 = vmatpush1.bf16.msra.mxu0 0
        %2373 = vmatprep.subr.bf16.mxu0 0
        %2374 = vmatpush1.bf16.msra.mxu0 0
        %2375 = vmatprep.mubr.bf16.mxu0 0
        %2376 = vmatmul.mubr.bf16.gmra.mrb[0].mxu0 %v1340
        %v2377 = vpop.f32.mrb[0].mxu0
        %v2378 = vadd.f32 0.0, %v2377
        %v2379 = vpop.f32.mrb[0].mxu0
        %v2380 = vadd.f32 0.0, %v2379
        %v2381 = vpop.f32.mrb[0].mxu0
        %v2382 = vadd.f32 0.0, %v2381
        %v2383 = vpop.f32.mrb[0].mxu0
        %v2384 = vadd.f32 0.0, %v2383
        %2385 = vdwg.mxu0
        %2386 = vmatprep.subr.bf16.mxu0 %v2341
        %2387 = vmatpush1.bf16.msra.mxu0 %v2338
        %2388 = vmatprep.subr.bf16.mxu0 0
        %2389 = vmatpush1.bf16.msra.mxu0 0
        %2390 = vmatprep.subr.bf16.mxu0 0
        %2391 = vmatpush1.bf16.msra.mxu0 0
        %2392 = vmatprep.subr.bf16.mxu0 0
        %2393 = vmatpush1.bf16.msra.mxu0 0
        %2394 = vmatprep.subr.bf16.mxu0 0
        %2395 = vmatpush1.bf16.msra.mxu0 0
        %2396 = vmatprep.subr.bf16.mxu0 0
        %2397 = vmatpush1.bf16.msra.mxu0 0
        %2398 = vmatprep.subr.bf16.mxu0 0
        %2399 = vmatpush1.bf16.msra.mxu0 0
        %2400 = vmatprep.subr.bf16.mxu0 0
        %2401 = vmatpush1.bf16.msra.mxu0 0
        %2402 = vmatprep.subr.bf16.mxu0 0
        %2403 = vmatpush1.bf16.msra.mxu0 0
        %2404 = vmatprep.subr.bf16.mxu0 0
        %2405 = vmatpush1.bf16.msra.mxu0 0
        %2406 = vmatprep.subr.bf16.mxu0 0
        %2407 = vmatpush1.bf16.msra.mxu0 0
        %2408 = vmatprep.subr.bf16.mxu0 0
        %2409 = vmatpush1.bf16.msra.mxu0 0
        %2410 = vmatprep.subr.bf16.mxu0 0
        %2411 = vmatpush1.bf16.msra.mxu0 0
        %2412 = vmatprep.subr.bf16.mxu0 0
        %2413 = vmatpush1.bf16.msra.mxu0 0
        %2414 = vmatprep.subr.bf16.mxu0 0
        %2415 = vmatpush1.bf16.msra.mxu0 0
        %2416 = vmatprep.subr.bf16.mxu0 0
        %2417 = vmatpush1.bf16.msra.mxu0 0
        %2418 = vmatprep.mubr.bf16.mxu0 0
        %2419 = vmatmul.mubr.bf16.gmra.mrb[0].mxu0 %v1340
        %v2420 = vpop.f32.mrb[0].mxu0
        %v2421 = vadd.f32 0.0, %v2420
        %v2422 = vpop.f32.mrb[0].mxu0
        %v2423 = vadd.f32 0.0, %v2422
        %v2424 = vpop.f32.mrb[0].mxu0
        %v2425 = vadd.f32 0.0, %v2424
        %v2426 = vpop.f32.mrb[0].mxu0
        %v2427 = vadd.f32 0.0, %v2426
        %2428 = vdwg.mxu0
        %v2433 = vunpack.c.l.b16 %v2307
        %v2434 = vunpack.c.h.b16 %v2307
        %v2435 = vunpack.c.l.b16 %v2308
        %v2436 = vunpack.c.h.b16 %v2308
        %v2437 = vunpack.c.l.b16 %v2309
        %v2438 = vunpack.c.h.b16 %v2309
        %v2439 = vunpack.c.l.b16 %v2310
        %v2440 = vunpack.c.h.b16 %v2310
        %v2441 = vpack.c.b16 %v2437, %v2433
        %v2442 = vpack.c.b16 %v2438, %v2434
        %v2443 = vpack.c.b16 %v2439, %v2435
        %v2444 = vpack.c.b16 %v2440, %v2436
        %v2446 = vand.u32 %v2441, %v1472
        %v2449 = vand.u32 %v2442, %v1472
        %v2452 = vand.u32 %v2443, %v1472
        %v2455 = vand.u32 %v2444, %v1472
        %2457 = vmatprep.subr.bf16.mxu0 %v2449
        %2458 = vmatpush1.bf16.msra.mxu0 %v2446
        %2459 = vmatprep.subr.bf16.mxu0 0
        %2460 = vmatpush1.bf16.msra.mxu0 0
        %2461 = vmatprep.subr.bf16.mxu0 0
        %2462 = vmatpush1.bf16.msra.mxu0 0
        %2463 = vmatprep.subr.bf16.mxu0 0
        %2464 = vmatpush1.bf16.msra.mxu0 0
        %2465 = vmatprep.subr.bf16.mxu0 0
        %2466 = vmatpush1.bf16.msra.mxu0 0
        %2467 = vmatprep.subr.bf16.mxu0 0
        %2468 = vmatpush1.bf16.msra.mxu0 0
        %2469 = vmatprep.subr.bf16.mxu0 0
        %2470 = vmatpush1.bf16.msra.mxu0 0
        %2471 = vmatprep.subr.bf16.mxu0 0
        %2472 = vmatpush1.bf16.msra.mxu0 0
        %2473 = vmatprep.subr.bf16.mxu0 0
        %2474 = vmatpush1.bf16.msra.mxu0 0
        %2475 = vmatprep.subr.bf16.mxu0 0
        %2476 = vmatpush1.bf16.msra.mxu0 0
        %2477 = vmatprep.subr.bf16.mxu0 0
        %2478 = vmatpush1.bf16.msra.mxu0 0
        %2479 = vmatprep.subr.bf16.mxu0 0
        %2480 = vmatpush1.bf16.msra.mxu0 0
        %2481 = vmatprep.subr.bf16.mxu0 0
        %2482 = vmatpush1.bf16.msra.mxu0 0
        %2483 = vmatprep.subr.bf16.mxu0 0
        %2484 = vmatpush1.bf16.msra.mxu0 0
        %2485 = vmatprep.subr.bf16.mxu0 0
        %2486 = vmatpush1.bf16.msra.mxu0 0
        %2487 = vmatprep.subr.bf16.mxu0 0
        %2488 = vmatpush1.bf16.msra.mxu0 0
        %2489 = vmatprep.mubr.bf16.mxu0 0
        %2490 = vmatmul.mubr.bf16.gmra.mrb[0].mxu0 %v1467
        %v2491 = vpop.f32.mrb[0].mxu0
        %v2492 = vadd.f32 %v2378, %v2491
        %v2493 = vpop.f32.mrb[0].mxu0
        %v2494 = vadd.f32 %v2380, %v2493
        %v2495 = vpop.f32.mrb[0].mxu0
        %v2496 = vadd.f32 %v2382, %v2495
        %v2497 = vpop.f32.mrb[0].mxu0
        %v2498 = vadd.f32 %v2384, %v2497
        %2499 = vdwg.mxu0
        %2500 = vmatprep.subr.bf16.mxu0 %v2455
        %2501 = vmatpush1.bf16.msra.mxu0 %v2452
        %2502 = vmatprep.subr.bf16.mxu0 0
        %2503 = vmatpush1.bf16.msra.mxu0 0
        %2504 = vmatprep.subr.bf16.mxu0 0
        %2505 = vmatpush1.bf16.msra.mxu0 0
        %2506 = vmatprep.subr.bf16.mxu0 0
        %2507 = vmatpush1.bf16.msra.mxu0 0
        %2508 = vmatprep.subr.bf16.mxu0 0
        %2509 = vmatpush1.bf16.msra.mxu0 0
        %2510 = vmatprep.subr.bf16.mxu0 0
        %2511 = vmatpush1.bf16.msra.mxu0 0
        %2512 = vmatprep.subr.bf16.mxu0 0
        %2513 = vmatpush1.bf16.msra.mxu0 0
        %2514 = vmatprep.subr.bf16.mxu0 0
        %2515 = vmatpush1.bf16.msra.mxu0 0
        %2516 = vmatprep.subr.bf16.mxu0 0
        %2517 = vmatpush1.bf16.msra.mxu0 0
        %2518 = vmatprep.subr.bf16.mxu0 0
        %2519 = vmatpush1.bf16.msra.mxu0 0
        %2520 = vmatprep.subr.bf16.mxu0 0
        %2521 = vmatpush1.bf16.msra.mxu0 0
        %2522 = vmatprep.subr.bf16.mxu0 0
        %2523 = vmatpush1.bf16.msra.mxu0 0
        %2524 = vmatprep.subr.bf16.mxu0 0
        %2525 = vmatpush1.bf16.msra.mxu0 0
        %2526 = vmatprep.subr.bf16.mxu0 0
        %2527 = vmatpush1.bf16.msra.mxu0 0
        %2528 = vmatprep.subr.bf16.mxu0 0
        %2529 = vmatpush1.bf16.msra.mxu0 0
        %2530 = vmatprep.subr.bf16.mxu0 0
        %2531 = vmatpush1.bf16.msra.mxu0 0
        %2532 = vmatprep.mubr.bf16.mxu0 0
        %2533 = vmatmul.mubr.bf16.gmra.mrb[0].mxu0 %v1467
        %v2534 = vpop.f32.mrb[0].mxu0
        %v2535 = vadd.f32 %v2421, %v2534
        %v2536 = vpop.f32.mrb[0].mxu0
        %v2537 = vadd.f32 %v2423, %v2536
        %v2538 = vpop.f32.mrb[0].mxu0
        %v2539 = vadd.f32 %v2425, %v2538
        %v2540 = vpop.f32.mrb[0].mxu0
        %v2541 = vadd.f32 %v2427, %v2540
        %2542 = vdwg.mxu0
        %v2543 = vmax.f32 %v2298, %v2492
        %v2544 = vmax.f32 %v2299, %v2494
        %v2545 = vmax.f32 %v2300, %v2535
        %v2546 = vmax.f32 %v2301, %v2537
        %v2547 = vmax.f32 %v2302, %v2496
        %v2548 = vmax.f32 %v2303, %v2498
        %v2549 = vmax.f32 %v2304, %v2539
        %v2550 = vmax.f32 %v2305, %v2541
        %s2551 = scalar_lea.vmem %s1248, 320 [#allocation2]
        %v2552 = vld [vmem:[%s2551] sm:$0xff]
        %v2553 = vld [vmem:[%s2551 + $0x8] sm:$0xff]
        %v2554 = vld [vmem:[%s2551 + $0x20] sm:$0x77]
        %v2555 = vld [vmem:[%s2551 + $0x28] sm:$0x77]
        %s2556 = scalar_lea.vmem %s1255, 80 [#allocation3]
        %v2557 = vld [vmem:[%s2556] sm:$0xff]
        %v2559 = vcombine.high %v2557, %v2557
        %v2561 = vunpack.c.l.s4 1983009808
        %v2562 = vunpack.c.0.s8 %v2561
        %v2563 = vlaneseq
        %v2564 = vshrl.u32 %v2563, 7
        %v2565 = vsub.s32 %v2562, %v2564
        %v2566 = vrot.slane %v2557, %v2565
        %v2568 = vunpack.c.l.s4 1983009808
        %v2569 = vunpack.c.0.s8 %v2568
        %v2570 = vlaneseq
        %v2571 = vshrl.u32 %v2570, 7
        %v2572 = vsub.s32 %v2569, %v2571
        %v2573 = vrot.slane %v2559, %v2572
        %v2574 = vcombine.high %v2566, %v2566
        %v2575 = vcombine.high %v2573, %v2573
        %v2577 = vand.u32 %v2566, %v1345
        %v2580 = vand.u32 %v2574, %v1345
        %v2583 = vand.u32 %v2573, %v1345
        %v2586 = vand.u32 %v2575, %v1345
        %2588 = vmatprep.subr.bf16.mxu0 %v2580
        %2589 = vmatpush1.bf16.msra.mxu0 %v2577
        %2590 = vmatprep.subr.bf16.mxu0 0
        %2591 = vmatpush1.bf16.msra.mxu0 0
        %2592 = vmatprep.subr.bf16.mxu0 0
        %2593 = vmatpush1.bf16.msra.mxu0 0
        %2594 = vmatprep.subr.bf16.mxu0 0
        %2595 = vmatpush1.bf16.msra.mxu0 0
        %2596 = vmatprep.subr.bf16.mxu0 0
        %2597 = vmatpush1.bf16.msra.mxu0 0
        %2598 = vmatprep.subr.bf16.mxu0 0
        %2599 = vmatpush1.bf16.msra.mxu0 0
        %2600 = vmatprep.subr.bf16.mxu0 0
        %2601 = vmatpush1.bf16.msra.mxu0 0
        %2602 = vmatprep.subr.bf16.mxu0 0
        %2603 = vmatpush1.bf16.msra.mxu0 0
        %2604 = vmatprep.subr.bf16.mxu0 0
        %2605 = vmatpush1.bf16.msra.mxu0 0
        %2606 = vmatprep.subr.bf16.mxu0 0
        %2607 = vmatpush1.bf16.msra.mxu0 0
        %2608 = vmatprep.subr.bf16.mxu0 0
        %2609 = vmatpush1.bf16.msra.mxu0 0
        %2610 = vmatprep.subr.bf16.mxu0 0
        %2611 = vmatpush1.bf16.msra.mxu0 0
        %2612 = vmatprep.subr.bf16.mxu0 0
        %2613 = vmatpush1.bf16.msra.mxu0 0
        %2614 = vmatprep.subr.bf16.mxu0 0
        %2615 = vmatpush1.bf16.msra.mxu0 0
        %2616 = vmatprep.subr.bf16.mxu0 0
        %2617 = vmatpush1.bf16.msra.mxu0 0
        %2618 = vmatprep.subr.bf16.mxu0 0
        %2619 = vmatpush1.bf16.msra.mxu0 0
        %2620 = vmatprep.mubr.bf16.mxu0 0
        %2621 = vmatmul.mubr.bf16.gmra.mrb[0].mxu0 %v1340
        %v2622 = vpop.f32.mrb[0].mxu0
        %v2623 = vadd.f32 0.0, %v2622
        %v2624 = vpop.f32.mrb[0].mxu0
        %v2625 = vadd.f32 0.0, %v2624
        %v2626 = vpop.f32.mrb[0].mxu0
        %v2627 = vadd.f32 0.0, %v2626
        %v2628 = vpop.f32.mrb[0].mxu0
        %v2629 = vadd.f32 0.0, %v2628
        %2630 = vdwg.mxu0
        %2631 = vmatprep.subr.bf16.mxu0 %v2586
        %2632 = vmatpush1.bf16.msra.mxu0 %v2583
        %2633 = vmatprep.subr.bf16.mxu0 0
        %2634 = vmatpush1.bf16.msra.mxu0 0
        %2635 = vmatprep.subr.bf16.mxu0 0
        %2636 = vmatpush1.bf16.msra.mxu0 0
        %2637 = vmatprep.subr.bf16.mxu0 0
        %2638 = vmatpush1.bf16.msra.mxu0 0
        %2639 = vmatprep.subr.bf16.mxu0 0
        %2640 = vmatpush1.bf16.msra.mxu0 0
        %2641 = vmatprep.subr.bf16.mxu0 0
        %2642 = vmatpush1.bf16.msra.mxu0 0
        %2643 = vmatprep.subr.bf16.mxu0 0
        %2644 = vmatpush1.bf16.msra.mxu0 0
        %2645 = vmatprep.subr.bf16.mxu0 0
        %2646 = vmatpush1.bf16.msra.mxu0 0
        %2647 = vmatprep.subr.bf16.mxu0 0
        %2648 = vmatpush1.bf16.msra.mxu0 0
        %2649 = vmatprep.subr.bf16.mxu0 0
        %2650 = vmatpush1.bf16.msra.mxu0 0
        %2651 = vmatprep.subr.bf16.mxu0 0
        %2652 = vmatpush1.bf16.msra.mxu0 0
        %2653 = vmatprep.subr.bf16.mxu0 0
        %2654 = vmatpush1.bf16.msra.mxu0 0
        %2655 = vmatprep.subr.bf16.mxu0 0
        %2656 = vmatpush1.bf16.msra.mxu0 0
        %2657 = vmatprep.subr.bf16.mxu0 0
        %2658 = vmatpush1.bf16.msra.mxu0 0
        %2659 = vmatprep.subr.bf16.mxu0 0
        %2660 = vmatpush1.bf16.msra.mxu0 0
        %2661 = vmatprep.subr.bf16.mxu0 0
        %2662 = vmatpush1.bf16.msra.mxu0 0
        %2663 = vmatprep.mubr.bf16.mxu0 0
        %2664 = vmatmul.mubr.bf16.gmra.mrb[0].mxu0 %v1340
        %v2665 = vpop.f32.mrb[0].mxu0
        %v2666 = vadd.f32 0.0, %v2665
        %v2667 = vpop.f32.mrb[0].mxu0
        %v2668 = vadd.f32 0.0, %v2667
        %v2669 = vpop.f32.mrb[0].mxu0
        %v2670 = vadd.f32 0.0, %v2669
        %v2671 = vpop.f32.mrb[0].mxu0
        %v2672 = vadd.f32 0.0, %v2671
        %2673 = vdwg.mxu0
        %v2678 = vunpack.c.l.b16 %v2552
        %v2679 = vunpack.c.h.b16 %v2552
        %v2680 = vunpack.c.l.b16 %v2553
        %v2681 = vunpack.c.h.b16 %v2553
        %v2682 = vunpack.c.l.b16 %v2554
        %v2683 = vunpack.c.h.b16 %v2554
        %v2684 = vunpack.c.l.b16 %v2555
        %v2685 = vunpack.c.h.b16 %v2555
        %v2686 = vpack.c.b16 %v2682, %v2678
        %v2687 = vpack.c.b16 %v2683, %v2679
        %v2688 = vpack.c.b16 %v2684, %v2680
        %v2689 = vpack.c.b16 %v2685, %v2681
        %v2691 = vand.u32 %v2686, %v1472
        %v2694 = vand.u32 %v2687, %v1472
        %v2697 = vand.u32 %v2688, %v1472
        %v2700 = vand.u32 %v2689, %v1472
        %2702 = vmatprep.subr.bf16.mxu0 %v2694
        %2703 = vmatpush1.bf16.msra.mxu0 %v2691
        %2704 = vmatprep.subr.bf16.mxu0 0
        %2705 = vmatpush1.bf16.msra.mxu0 0
        %2706 = vmatprep.subr.bf16.mxu0 0
        %2707 = vmatpush1.bf16.msra.mxu0 0
        %2708 = vmatprep.subr.bf16.mxu0 0
        %2709 = vmatpush1.bf16.msra.mxu0 0
        %2710 = vmatprep.subr.bf16.mxu0 0
        %2711 = vmatpush1.bf16.msra.mxu0 0
        %2712 = vmatprep.subr.bf16.mxu0 0
        %2713 = vmatpush1.bf16.msra.mxu0 0
        %2714 = vmatprep.subr.bf16.mxu0 0
        %2715 = vmatpush1.bf16.msra.mxu0 0
        %2716 = vmatprep.subr.bf16.mxu0 0
        %2717 = vmatpush1.bf16.msra.mxu0 0
        %2718 = vmatprep.subr.bf16.mxu0 0
        %2719 = vmatpush1.bf16.msra.mxu0 0
        %2720 = vmatprep.subr.bf16.mxu0 0
        %2721 = vmatpush1.bf16.msra.mxu0 0
        %2722 = vmatprep.subr.bf16.mxu0 0
        %2723 = vmatpush1.bf16.msra.mxu0 0
        %2724 = vmatprep.subr.bf16.mxu0 0
        %2725 = vmatpush1.bf16.msra.mxu0 0
        %2726 = vmatprep.subr.bf16.mxu0 0
        %2727 = vmatpush1.bf16.msra.mxu0 0
        %2728 = vmatprep.subr.bf16.mxu0 0
        %2729 = vmatpush1.bf16.msra.mxu0 0
        %2730 = vmatprep.subr.bf16.mxu0 0
        %2731 = vmatpush1.bf16.msra.mxu0 0
        %2732 = vmatprep.subr.bf16.mxu0 0
        %2733 = vmatpush1.bf16.msra.mxu0 0
        %2734 = vmatprep.mubr.bf16.mxu0 0
        %2735 = vmatmul.mubr.bf16.gmra.mrb[0].mxu0 %v1467
        %v2736 = vpop.f32.mrb[0].mxu0
        %v2737 = vadd.f32 %v2623, %v2736
        %v2738 = vpop.f32.mrb[0].mxu0
        %v2739 = vadd.f32 %v2625, %v2738
        %v2740 = vpop.f32.mrb[0].mxu0
        %v2741 = vadd.f32 %v2627, %v2740
        %v2742 = vpop.f32.mrb[0].mxu0
        %v2743 = vadd.f32 %v2629, %v2742
        %2744 = vdwg.mxu0
        %2745 = vmatprep.subr.bf16.mxu0 %v2700
        %2746 = vmatpush1.bf16.msra.mxu0 %v2697
        %2747 = vmatprep.subr.bf16.mxu0 0
        %2748 = vmatpush1.bf16.msra.mxu0 0
        %2749 = vmatprep.subr.bf16.mxu0 0
        %2750 = vmatpush1.bf16.msra.mxu0 0
        %2751 = vmatprep.subr.bf16.mxu0 0
        %2752 = vmatpush1.bf16.msra.mxu0 0
        %2753 = vmatprep.subr.bf16.mxu0 0
        %2754 = vmatpush1.bf16.msra.mxu0 0
        %2755 = vmatprep.subr.bf16.mxu0 0
        %2756 = vmatpush1.bf16.msra.mxu0 0
        %2757 = vmatprep.subr.bf16.mxu0 0
        %2758 = vmatpush1.bf16.msra.mxu0 0
        %2759 = vmatprep.subr.bf16.mxu0 0
        %2760 = vmatpush1.bf16.msra.mxu0 0
        %2761 = vmatprep.subr.bf16.mxu0 0
        %2762 = vmatpush1.bf16.msra.mxu0 0
        %2763 = vmatprep.subr.bf16.mxu0 0
        %2764 = vmatpush1.bf16.msra.mxu0 0
        %2765 = vmatprep.subr.bf16.mxu0 0
        %2766 = vmatpush1.bf16.msra.mxu0 0
        %2767 = vmatprep.subr.bf16.mxu0 0
        %2768 = vmatpush1.bf16.msra.mxu0 0
        %2769 = vmatprep.subr.bf16.mxu0 0
        %2770 = vmatpush1.bf16.msra.mxu0 0
        %2771 = vmatprep.subr.bf16.mxu0 0
        %2772 = vmatpush1.bf16.msra.mxu0 0
        %2773 = vmatprep.subr.bf16.mxu0 0
        %2774 = vmatpush1.bf16.msra.mxu0 0
        %2775 = vmatprep.subr.bf16.mxu0 0
        %2776 = vmatpush1.bf16.msra.mxu0 0
        %2777 = vmatprep.mubr.bf16.mxu0 0
        %2778 = vmatmul.mubr.bf16.gmra.mrb[0].mxu0 %v1467
        %v2779 = vpop.f32.mrb[0].mxu0
        %v2780 = vadd.f32 %v2666, %v2779
        %v2781 = vpop.f32.mrb[0].mxu0
        %v2782 = vadd.f32 %v2668, %v2781
        %v2783 = vpop.f32.mrb[0].mxu0
        %v2784 = vadd.f32 %v2670, %v2783
        %v2785 = vpop.f32.mrb[0].mxu0
        %v2786 = vadd.f32 %v2672, %v2785
        %2787 = vdwg.mxu0
        %v2788 = vmax.f32 %v2543, %v2737
        %v2789 = vmax.f32 %v2544, %v2739
        %v2790 = vmax.f32 %v2545, %v2780
        %v2791 = vmax.f32 %v2546, %v2782
        %v2792 = vmax.f32 %v2547, %v2741
        %v2793 = vmax.f32 %v2548, %v2743
        %v2794 = vmax.f32 %v2549, %v2784
        %v2795 = vmax.f32 %v2550, %v2786
        %s2796 = scalar_lea.vmem %s1248, 384 [#allocation2]
        %v2797 = vld [vmem:[%s2796] sm:$0xff]
        %v2798 = vld [vmem:[%s2796 + $0x8] sm:$0xff]
        %v2799 = vld [vmem:[%s2796 + $0x20] sm:$0x77]
        %v2800 = vld [vmem:[%s2796 + $0x28] sm:$0x77]
        %s2801 = scalar_lea.vmem %s1255, 96 [#allocation3]
        %v2802 = vld [vmem:[%s2801] sm:$0xff]
        %v2804 = vcombine.high %v2802, %v2802
        %v2806 = vunpack.c.l.s4 1983009808
        %v2807 = vunpack.c.0.s8 %v2806
        %v2808 = vlaneseq
        %v2809 = vshrl.u32 %v2808, 7
        %v2810 = vsub.s32 %v2807, %v2809
        %v2811 = vrot.slane %v2802, %v2810
        %v2813 = vunpack.c.l.s4 1983009808
        %v2814 = vunpack.c.0.s8 %v2813
        %v2815 = vlaneseq
        %v2816 = vshrl.u32 %v2815, 7
        %v2817 = vsub.s32 %v2814, %v2816
        %v2818 = vrot.slane %v2804, %v2817
        %v2819 = vcombine.high %v2811, %v2811
        %v2820 = vcombine.high %v2818, %v2818
        %v2822 = vand.u32 %v2811, %v1345
        %v2825 = vand.u32 %v2819, %v1345
        %v2828 = vand.u32 %v2818, %v1345
        %v2831 = vand.u32 %v2820, %v1345
        %2833 = vmatprep.subr.bf16.mxu0 %v2825
        %2834 = vmatpush1.bf16.msra.mxu0 %v2822
        %2835 = vmatprep.subr.bf16.mxu0 0
        %2836 = vmatpush1.bf16.msra.mxu0 0
        %2837 = vmatprep.subr.bf16.mxu0 0
        %2838 = vmatpush1.bf16.msra.mxu0 0
        %2839 = vmatprep.subr.bf16.mxu0 0
        %2840 = vmatpush1.bf16.msra.mxu0 0
        %2841 = vmatprep.subr.bf16.mxu0 0
        %2842 = vmatpush1.bf16.msra.mxu0 0
        %2843 = vmatprep.subr.bf16.mxu0 0
        %2844 = vmatpush1.bf16.msra.mxu0 0
        %2845 = vmatprep.subr.bf16.mxu0 0
        %2846 = vmatpush1.bf16.msra.mxu0 0
        %2847 = vmatprep.subr.bf16.mxu0 0
        %2848 = vmatpush1.bf16.msra.mxu0 0
        %2849 = vmatprep.subr.bf16.mxu0 0
        %2850 = vmatpush1.bf16.msra.mxu0 0
        %2851 = vmatprep.subr.bf16.mxu0 0
        %2852 = vmatpush1.bf16.msra.mxu0 0
        %2853 = vmatprep.subr.bf16.mxu0 0
        %2854 = vmatpush1.bf16.msra.mxu0 0
        %2855 = vmatprep.subr.bf16.mxu0 0
        %2856 = vmatpush1.bf16.msra.mxu0 0
        %2857 = vmatprep.subr.bf16.mxu0 0
        %2858 = vmatpush1.bf16.msra.mxu0 0
        %2859 = vmatprep.subr.bf16.mxu0 0
        %2860 = vmatpush1.bf16.msra.mxu0 0
        %2861 = vmatprep.subr.bf16.mxu0 0
        %2862 = vmatpush1.bf16.msra.mxu0 0
        %2863 = vmatprep.subr.bf16.mxu0 0
        %2864 = vmatpush1.bf16.msra.mxu0 0
        %2865 = vmatprep.mubr.bf16.mxu0 0
        %2866 = vmatmul.mubr.bf16.gmra.mrb[0].mxu0 %v1340
        %v2867 = vpop.f32.mrb[0].mxu0
        %v2868 = vadd.f32 0.0, %v2867
        %v2869 = vpop.f32.mrb[0].mxu0
        %v2870 = vadd.f32 0.0, %v2869
        %v2871 = vpop.f32.mrb[0].mxu0
        %v2872 = vadd.f32 0.0, %v2871
        %v2873 = vpop.f32.mrb[0].mxu0
        %v2874 = vadd.f32 0.0, %v2873
        %2875 = vdwg.mxu0
        %2876 = vmatprep.subr.bf16.mxu0 %v2831
        %2877 = vmatpush1.bf16.msra.mxu0 %v2828
        %2878 = vmatprep.subr.bf16.mxu0 0
        %2879 = vmatpush1.bf16.msra.mxu0 0
        %2880 = vmatprep.subr.bf16.mxu0 0
        %2881 = vmatpush1.bf16.msra.mxu0 0
        %2882 = vmatprep.subr.bf16.mxu0 0
        %2883 = vmatpush1.bf16.msra.mxu0 0
        %2884 = vmatprep.subr.bf16.mxu0 0
        %2885 = vmatpush1.bf16.msra.mxu0 0
        %2886 = vmatprep.subr.bf16.mxu0 0
        %2887 = vmatpush1.bf16.msra.mxu0 0
        %2888 = vmatprep.subr.bf16.mxu0 0
        %2889 = vmatpush1.bf16.msra.mxu0 0
        %2890 = vmatprep.subr.bf16.mxu0 0
        %2891 = vmatpush1.bf16.msra.mxu0 0
        %2892 = vmatprep.subr.bf16.mxu0 0
        %2893 = vmatpush1.bf16.msra.mxu0 0
        %2894 = vmatprep.subr.bf16.mxu0 0
        %2895 = vmatpush1.bf16.msra.mxu0 0
        %2896 = vmatprep.subr.bf16.mxu0 0
        %2897 = vmatpush1.bf16.msra.mxu0 0
        %2898 = vmatprep.subr.bf16.mxu0 0
        %2899 = vmatpush1.bf16.msra.mxu0 0
        %2900 = vmatprep.subr.bf16.mxu0 0
        %2901 = vmatpush1.bf16.msra.mxu0 0
        %2902 = vmatprep.subr.bf16.mxu0 0
        %2903 = vmatpush1.bf16.msra.mxu0 0
        %2904 = vmatprep.subr.bf16.mxu0 0
        %2905 = vmatpush1.bf16.msra.mxu0 0
        %2906 = vmatprep.subr.bf16.mxu0 0
        %2907 = vmatpush1.bf16.msra.mxu0 0
        %2908 = vmatprep.mubr.bf16.mxu0 0
        %2909 = vmatmul.mubr.bf16.gmra.mrb[0].mxu0 %v1340
        %v2910 = vpop.f32.mrb[0].mxu0
        %v2911 = vadd.f32 0.0, %v2910
        %v2912 = vpop.f32.mrb[0].mxu0
        %v2913 = vadd.f32 0.0, %v2912
        %v2914 = vpop.f32.mrb[0].mxu0
        %v2915 = vadd.f32 0.0, %v2914
        %v2916 = vpop.f32.mrb[0].mxu0
        %v2917 = vadd.f32 0.0, %v2916
        %2918 = vdwg.mxu0
        %v2923 = vunpack.c.l.b16 %v2797
        %v2924 = vunpack.c.h.b16 %v2797
        %v2925 = vunpack.c.l.b16 %v2798
        %v2926 = vunpack.c.h.b16 %v2798
        %v2927 = vunpack.c.l.b16 %v2799
        %v2928 = vunpack.c.h.b16 %v2799
        %v2929 = vunpack.c.l.b16 %v2800
        %v2930 = vunpack.c.h.b16 %v2800
        %v2931 = vpack.c.b16 %v2927, %v2923
        %v2932 = vpack.c.b16 %v2928, %v2924
        %v2933 = vpack.c.b16 %v2929, %v2925
        %v2934 = vpack.c.b16 %v2930, %v2926
        %v2936 = vand.u32 %v2931, %v1472
        %v2939 = vand.u32 %v2932, %v1472
        %v2942 = vand.u32 %v2933, %v1472
        %v2945 = vand.u32 %v2934, %v1472
        %2947 = vmatprep.subr.bf16.mxu0 %v2939
        %2948 = vmatpush1.bf16.msra.mxu0 %v2936
        %2949 = vmatprep.subr.bf16.mxu0 0
        %2950 = vmatpush1.bf16.msra.mxu0 0
        %2951 = vmatprep.subr.bf16.mxu0 0
        %2952 = vmatpush1.bf16.msra.mxu0 0
        %2953 = vmatprep.subr.bf16.mxu0 0
        %2954 = vmatpush1.bf16.msra.mxu0 0
        %2955 = vmatprep.subr.bf16.mxu0 0
        %2956 = vmatpush1.bf16.msra.mxu0 0
        %2957 = vmatprep.subr.bf16.mxu0 0
        %2958 = vmatpush1.bf16.msra.mxu0 0
        %2959 = vmatprep.subr.bf16.mxu0 0
        %2960 = vmatpush1.bf16.msra.mxu0 0
        %2961 = vmatprep.subr.bf16.mxu0 0
        %2962 = vmatpush1.bf16.msra.mxu0 0
        %2963 = vmatprep.subr.bf16.mxu0 0
        %2964 = vmatpush1.bf16.msra.mxu0 0
        %2965 = vmatprep.subr.bf16.mxu0 0
        %2966 = vmatpush1.bf16.msra.mxu0 0
        %2967 = vmatprep.subr.bf16.mxu0 0
        %2968 = vmatpush1.bf16.msra.mxu0 0
        %2969 = vmatprep.subr.bf16.mxu0 0
        %2970 = vmatpush1.bf16.msra.mxu0 0
        %2971 = vmatprep.subr.bf16.mxu0 0
        %2972 = vmatpush1.bf16.msra.mxu0 0
        %2973 = vmatprep.subr.bf16.mxu0 0
        %2974 = vmatpush1.bf16.msra.mxu0 0
        %2975 = vmatprep.subr.bf16.mxu0 0
        %2976 = vmatpush1.bf16.msra.mxu0 0
        %2977 = vmatprep.subr.bf16.mxu0 0
        %2978 = vmatpush1.bf16.msra.mxu0 0
        %2979 = vmatprep.mubr.bf16.mxu0 0
        %2980 = vmatmul.mubr.bf16.gmra.mrb[0].mxu0 %v1467
        %v2981 = vpop.f32.mrb[0].mxu0
        %v2982 = vadd.f32 %v2868, %v2981
        %v2983 = vpop.f32.mrb[0].mxu0
        %v2984 = vadd.f32 %v2870, %v2983
        %v2985 = vpop.f32.mrb[0].mxu0
        %v2986 = vadd.f32 %v2872, %v2985
        %v2987 = vpop.f32.mrb[0].mxu0
        %v2988 = vadd.f32 %v2874, %v2987
        %2989 = vdwg.mxu0
        %2990 = vmatprep.subr.bf16.mxu0 %v2945
        %2991 = vmatpush1.bf16.msra.mxu0 %v2942
        %2992 = vmatprep.subr.bf16.mxu0 0
        %2993 = vmatpush1.bf16.msra.mxu0 0
        %2994 = vmatprep.subr.bf16.mxu0 0
        %2995 = vmatpush1.bf16.msra.mxu0 0
        %2996 = vmatprep.subr.bf16.mxu0 0
        %2997 = vmatpush1.bf16.msra.mxu0 0
        %2998 = vmatprep.subr.bf16.mxu0 0
        %2999 = vmatpush1.bf16.msra.mxu0 0
        %3000 = vmatprep.subr.bf16.mxu0 0
        %3001 = vmatpush1.bf16.msra.mxu0 0
        %3002 = vmatprep.subr.bf16.mxu0 0
        %3003 = vmatpush1.bf16.msra.mxu0 0
        %3004 = vmatprep.subr.bf16.mxu0 0
        %3005 = vmatpush1.bf16.msra.mxu0 0
        %3006 = vmatprep.subr.bf16.mxu0 0
        %3007 = vmatpush1.bf16.msra.mxu0 0
        %3008 = vmatprep.subr.bf16.mxu0 0
        %3009 = vmatpush1.bf16.msra.mxu0 0
        %3010 = vmatprep.subr.bf16.mxu0 0
        %3011 = vmatpush1.bf16.msra.mxu0 0
        %3012 = vmatprep.subr.bf16.mxu0 0
        %3013 = vmatpush1.bf16.msra.mxu0 0
        %3014 = vmatprep.subr.bf16.mxu0 0
        %3015 = vmatpush1.bf16.msra.mxu0 0
        %3016 = vmatprep.subr.bf16.mxu0 0
        %3017 = vmatpush1.bf16.msra.mxu0 0
        %3018 = vmatprep.subr.bf16.mxu0 0
        %3019 = vmatpush1.bf16.msra.mxu0 0
        %3020 = vmatprep.subr.bf16.mxu0 0
        %3021 = vmatpush1.bf16.msra.mxu0 0
        %3022 = vmatprep.mubr.bf16.mxu0 0
        %3023 = vmatmul.mubr.bf16.gmra.mrb[0].mxu0 %v1467
        %v3024 = vpop.f32.mrb[0].mxu0
        %v3025 = vadd.f32 %v2911, %v3024
        %v3026 = vpop.f32.mrb[0].mxu0
        %v3027 = vadd.f32 %v2913, %v3026
        %v3028 = vpop.f32.mrb[0].mxu0
        %v3029 = vadd.f32 %v2915, %v3028
        %v3030 = vpop.f32.mrb[0].mxu0
        %v3031 = vadd.f32 %v2917, %v3030
        %3032 = vdwg.mxu0
        %v3033 = vmax.f32 %v2788, %v2982
        %v3034 = vmax.f32 %v2789, %v2984
        %v3035 = vmax.f32 %v2790, %v3025
        %v3036 = vmax.f32 %v2791, %v3027
        %v3037 = vmax.f32 %v2792, %v2986
        %v3038 = vmax.f32 %v2793, %v2988
        %v3039 = vmax.f32 %v2794, %v3029
        %v3040 = vmax.f32 %v2795, %v3031
        %s3041 = scalar_lea.vmem %s1248, 448 [#allocation2]
        %v3042 = vld [vmem:[%s3041] sm:$0xff]
        %v3043 = vld [vmem:[%s3041 + $0x8] sm:$0xff]
        %v3044 = vld [vmem:[%s3041 + $0x20] sm:$0x77]
        %v3045 = vld [vmem:[%s3041 + $0x28] sm:$0x77]
        %s3046 = scalar_lea.vmem %s1255, 112 [#allocation3]
        %v3047 = vld [vmem:[%s3046] sm:$0xff]
        %v3049 = vcombine.high %v3047, %v3047
        %v3051 = vunpack.c.l.s4 1983009808
        %v3052 = vunpack.c.0.s8 %v3051
        %v3053 = vlaneseq
        %v3054 = vshrl.u32 %v3053, 7
        %v3055 = vsub.s32 %v3052, %v3054
        %v3056 = vrot.slane %v3047, %v3055
        %v3058 = vunpack.c.l.s4 1983009808
        %v3059 = vunpack.c.0.s8 %v3058
        %v3060 = vlaneseq
        %v3061 = vshrl.u32 %v3060, 7
        %v3062 = vsub.s32 %v3059, %v3061
        %v3063 = vrot.slane %v3049, %v3062
        %v3064 = vcombine.high %v3056, %v3056
        %v3065 = vcombine.high %v3063, %v3063
        %v3067 = vand.u32 %v3056, %v1345
        %v3070 = vand.u32 %v3064, %v1345
        %v3073 = vand.u32 %v3063, %v1345
        %v3076 = vand.u32 %v3065, %v1345
        %3078 = vmatprep.subr.bf16.mxu0 %v3070
        %3079 = vmatpush1.bf16.msra.mxu0 %v3067
        %3080 = vmatprep.subr.bf16.mxu0 0
        %3081 = vmatpush1.bf16.msra.mxu0 0
        %3082 = vmatprep.subr.bf16.mxu0 0
        %3083 = vmatpush1.bf16.msra.mxu0 0
        %3084 = vmatprep.subr.bf16.mxu0 0
        %3085 = vmatpush1.bf16.msra.mxu0 0
        %3086 = vmatprep.subr.bf16.mxu0 0
        %3087 = vmatpush1.bf16.msra.mxu0 0
        %3088 = vmatprep.subr.bf16.mxu0 0
        %3089 = vmatpush1.bf16.msra.mxu0 0
        %3090 = vmatprep.subr.bf16.mxu0 0
        %3091 = vmatpush1.bf16.msra.mxu0 0
        %3092 = vmatprep.subr.bf16.mxu0 0
        %3093 = vmatpush1.bf16.msra.mxu0 0
        %3094 = vmatprep.subr.bf16.mxu0 0
        %3095 = vmatpush1.bf16.msra.mxu0 0
        %3096 = vmatprep.subr.bf16.mxu0 0
        %3097 = vmatpush1.bf16.msra.mxu0 0
        %3098 = vmatprep.subr.bf16.mxu0 0
        %3099 = vmatpush1.bf16.msra.mxu0 0
        %3100 = vmatprep.subr.bf16.mxu0 0
        %3101 = vmatpush1.bf16.msra.mxu0 0
        %3102 = vmatprep.subr.bf16.mxu0 0
        %3103 = vmatpush1.bf16.msra.mxu0 0
        %3104 = vmatprep.subr.bf16.mxu0 0
        %3105 = vmatpush1.bf16.msra.mxu0 0
        %3106 = vmatprep.subr.bf16.mxu0 0
        %3107 = vmatpush1.bf16.msra.mxu0 0
        %3108 = vmatprep.subr.bf16.mxu0 0
        %3109 = vmatpush1.bf16.msra.mxu0 0
        %3110 = vmatprep.mubr.bf16.mxu0 0
        %3111 = vmatmul.mubr.bf16.gmra.mrb[0].mxu0 %v1340
        %v3112 = vpop.f32.mrb[0].mxu0
        %v3113 = vadd.f32 0.0, %v3112
        %v3114 = vpop.f32.mrb[0].mxu0
        %v3115 = vadd.f32 0.0, %v3114
        %v3116 = vpop.f32.mrb[0].mxu0
        %v3117 = vadd.f32 0.0, %v3116
        %v3118 = vpop.f32.mrb[0].mxu0
        %v3119 = vadd.f32 0.0, %v3118
        %3120 = vdwg.mxu0
        %3121 = vmatprep.subr.bf16.mxu0 %v3076
        %3122 = vmatpush1.bf16.msra.mxu0 %v3073
        %3123 = vmatprep.subr.bf16.mxu0 0
        %3124 = vmatpush1.bf16.msra.mxu0 0
        %3125 = vmatprep.subr.bf16.mxu0 0
        %3126 = vmatpush1.bf16.msra.mxu0 0
        %3127 = vmatprep.subr.bf16.mxu0 0
        %3128 = vmatpush1.bf16.msra.mxu0 0
        %3129 = vmatprep.subr.bf16.mxu0 0
        %3130 = vmatpush1.bf16.msra.mxu0 0
        %3131 = vmatprep.subr.bf16.mxu0 0
        %3132 = vmatpush1.bf16.msra.mxu0 0
        %3133 = vmatprep.subr.bf16.mxu0 0
        %3134 = vmatpush1.bf16.msra.mxu0 0
        %3135 = vmatprep.subr.bf16.mxu0 0
        %3136 = vmatpush1.bf16.msra.mxu0 0
        %3137 = vmatprep.subr.bf16.mxu0 0
        %3138 = vmatpush1.bf16.msra.mxu0 0
        %3139 = vmatprep.subr.bf16.mxu0 0
        %3140 = vmatpush1.bf16.msra.mxu0 0
        %3141 = vmatprep.subr.bf16.mxu0 0
        %3142 = vmatpush1.bf16.msra.mxu0 0
        %3143 = vmatprep.subr.bf16.mxu0 0
        %3144 = vmatpush1.bf16.msra.mxu0 0
        %3145 = vmatprep.subr.bf16.mxu0 0
        %3146 = vmatpush1.bf16.msra.mxu0 0
        %3147 = vmatprep.subr.bf16.mxu0 0
        %3148 = vmatpush1.bf16.msra.mxu0 0
        %3149 = vmatprep.subr.bf16.mxu0 0
        %3150 = vmatpush1.bf16.msra.mxu0 0
        %3151 = vmatprep.subr.bf16.mxu0 0
        %3152 = vmatpush1.bf16.msra.mxu0 0
        %3153 = vmatprep.mubr.bf16.mxu0 0
        %3154 = vmatmul.mubr.bf16.gmra.mrb[0].mxu0 %v1340
        %v3155 = vpop.f32.mrb[0].mxu0
        %v3156 = vadd.f32 0.0, %v3155
        %v3157 = vpop.f32.mrb[0].mxu0
        %v3158 = vadd.f32 0.0, %v3157
        %v3159 = vpop.f32.mrb[0].mxu0
        %v3160 = vadd.f32 0.0, %v3159
        %v3161 = vpop.f32.mrb[0].mxu0
        %v3162 = vadd.f32 0.0, %v3161
        %3163 = vdwg.mxu0
        %v3168 = vunpack.c.l.b16 %v3042
        %v3169 = vunpack.c.h.b16 %v3042
        %v3170 = vunpack.c.l.b16 %v3043
        %v3171 = vunpack.c.h.b16 %v3043
        %v3172 = vunpack.c.l.b16 %v3044
        %v3173 = vunpack.c.h.b16 %v3044
        %v3174 = vunpack.c.l.b16 %v3045
        %v3175 = vunpack.c.h.b16 %v3045
        %v3176 = vpack.c.b16 %v3172, %v3168
        %v3177 = vpack.c.b16 %v3173, %v3169
        %v3178 = vpack.c.b16 %v3174, %v3170
        %v3179 = vpack.c.b16 %v3175, %v3171
        %v3181 = vand.u32 %v3176, %v1472
        %v3184 = vand.u32 %v3177, %v1472
        %v3187 = vand.u32 %v3178, %v1472
        %v3190 = vand.u32 %v3179, %v1472
        %3192 = vmatprep.subr.bf16.mxu0 %v3184
        %3193 = vmatpush1.bf16.msra.mxu0 %v3181
        %3194 = vmatprep.subr.bf16.mxu0 0
        %3195 = vmatpush1.bf16.msra.mxu0 0
        %3196 = vmatprep.subr.bf16.mxu0 0
        %3197 = vmatpush1.bf16.msra.mxu0 0
        %3198 = vmatprep.subr.bf16.mxu0 0
        %3199 = vmatpush1.bf16.msra.mxu0 0
        %3200 = vmatprep.subr.bf16.mxu0 0
        %3201 = vmatpush1.bf16.msra.mxu0 0
        %3202 = vmatprep.subr.bf16.mxu0 0
        %3203 = vmatpush1.bf16.msra.mxu0 0
        %3204 = vmatprep.subr.bf16.mxu0 0
        %3205 = vmatpush1.bf16.msra.mxu0 0
        %3206 = vmatprep.subr.bf16.mxu0 0
        %3207 = vmatpush1.bf16.msra.mxu0 0
        %3208 = vmatprep.subr.bf16.mxu0 0
        %3209 = vmatpush1.bf16.msra.mxu0 0
        %3210 = vmatprep.subr.bf16.mxu0 0
        %3211 = vmatpush1.bf16.msra.mxu0 0
        %3212 = vmatprep.subr.bf16.mxu0 0
        %3213 = vmatpush1.bf16.msra.mxu0 0
        %3214 = vmatprep.subr.bf16.mxu0 0
        %3215 = vmatpush1.bf16.msra.mxu0 0
        %3216 = vmatprep.subr.bf16.mxu0 0
        %3217 = vmatpush1.bf16.msra.mxu0 0
        %3218 = vmatprep.subr.bf16.mxu0 0
        %3219 = vmatpush1.bf16.msra.mxu0 0
        %3220 = vmatprep.subr.bf16.mxu0 0
        %3221 = vmatpush1.bf16.msra.mxu0 0
        %3222 = vmatprep.subr.bf16.mxu0 0
        %3223 = vmatpush1.bf16.msra.mxu0 0
        %3224 = vmatprep.mubr.bf16.mxu0 0
        %3225 = vmatmul.mubr.bf16.gmra.mrb[0].mxu0 %v1467
        %v3226 = vpop.f32.mrb[0].mxu0
        %v3227 = vadd.f32 %v3113, %v3226
        %v3228 = vpop.f32.mrb[0].mxu0
        %v3229 = vadd.f32 %v3115, %v3228
        %v3230 = vpop.f32.mrb[0].mxu0
        %v3231 = vadd.f32 %v3117, %v3230
        %v3232 = vpop.f32.mrb[0].mxu0
        %v3233 = vadd.f32 %v3119, %v3232
        %3234 = vdwg.mxu0
        %3235 = vmatprep.subr.bf16.mxu0 %v3190
        %3236 = vmatpush1.bf16.msra.mxu0 %v3187
        %3237 = vmatprep.subr.bf16.mxu0 0
        %3238 = vmatpush1.bf16.msra.mxu0 0
        %3239 = vmatprep.subr.bf16.mxu0 0
        %3240 = vmatpush1.bf16.msra.mxu0 0
        %3241 = vmatprep.subr.bf16.mxu0 0
        %3242 = vmatpush1.bf16.msra.mxu0 0
        %3243 = vmatprep.subr.bf16.mxu0 0
        %3244 = vmatpush1.bf16.msra.mxu0 0
        %3245 = vmatprep.subr.bf16.mxu0 0
        %3246 = vmatpush1.bf16.msra.mxu0 0
        %3247 = vmatprep.subr.bf16.mxu0 0
        %3248 = vmatpush1.bf16.msra.mxu0 0
        %3249 = vmatprep.subr.bf16.mxu0 0
        %3250 = vmatpush1.bf16.msra.mxu0 0
        %3251 = vmatprep.subr.bf16.mxu0 0
        %3252 = vmatpush1.bf16.msra.mxu0 0
        %3253 = vmatprep.subr.bf16.mxu0 0
        %3254 = vmatpush1.bf16.msra.mxu0 0
        %3255 = vmatprep.subr.bf16.mxu0 0
        %3256 = vmatpush1.bf16.msra.mxu0 0
        %3257 = vmatprep.subr.bf16.mxu0 0
        %3258 = vmatpush1.bf16.msra.mxu0 0
        %3259 = vmatprep.subr.bf16.mxu0 0
        %3260 = vmatpush1.bf16.msra.mxu0 0
        %3261 = vmatprep.subr.bf16.mxu0 0
        %3262 = vmatpush1.bf16.msra.mxu0 0
        %3263 = vmatprep.subr.bf16.mxu0 0
        %3264 = vmatpush1.bf16.msra.mxu0 0
        %3265 = vmatprep.subr.bf16.mxu0 0
        %3266 = vmatpush1.bf16.msra.mxu0 0
        %3267 = vmatprep.mubr.bf16.mxu0 0
        %3268 = vmatmul.mubr.bf16.gmra.mrb[0].mxu0 %v1467
        %v3269 = vpop.f32.mrb[0].mxu0
        %v3270 = vadd.f32 %v3156, %v3269
        %v3271 = vpop.f32.mrb[0].mxu0
        %v3272 = vadd.f32 %v3158, %v3271
        %v3273 = vpop.f32.mrb[0].mxu0
        %v3274 = vadd.f32 %v3160, %v3273
        %v3275 = vpop.f32.mrb[0].mxu0
        %v3276 = vadd.f32 %v3162, %v3275
        %3277 = vdwg.mxu0
        %v3278 = vmax.f32 %v3033, %v3227
        %v3279 = vmax.f32 %v3034, %v3229
        %v3280 = vmax.f32 %v3035, %v3270
        %v3281 = vmax.f32 %v3036, %v3272
        %v3282 = vmax.f32 %v3037, %v3231
        %v3283 = vmax.f32 %v3038, %v3233
        %v3284 = vmax.f32 %v3039, %v3274
        %v3285 = vmax.f32 %v3040, %v3276
        %3287 = vset.pattern.permute.xlu0 0
        %3288 = vperm.xlu0 %3287, %v1306
        %v3289 = vpop.permute.xlu0 %3288
        %3292 = vset.pattern.permute.xlu0 0
        %3293 = vperm.xlu0 %3292, %v1307
        %v3294 = vpop.permute.xlu0 %3293
        %v3296 = vmul.f32 %v3278, %v3289
        %v3297 = vmul.f32 %v3279, %v3289
        %v3298 = vmul.f32 %v3280, %v3289
        %v3299 = vmul.f32 %v3281, %v3289
        %v3300 = vmul.f32 %v3282, %v3294
        %v3301 = vmul.f32 %v3283, %v3294
        %v3302 = vmul.f32 %v3284, %v3294
        %v3303 = vmul.f32 %v3285, %v3294
        %3305 = vset.pattern.permute.xlu0 0
        %3306 = vperm.xlu0 %3305, %v1308
        %v3307 = vpop.permute.xlu0 %3306
        %3310 = vset.pattern.permute.xlu0 0
        %3311 = vperm.xlu0 %3310, %v1309
        %v3312 = vpop.permute.xlu0 %3311
        %v3314 = vadd.f32 %v3296, %v3307
        %v3315 = vadd.f32 %v3297, %v3307
        %v3316 = vadd.f32 %v3298, %v3307
        %v3317 = vadd.f32 %v3299, %v3307
        %v3318 = vadd.f32 %v3300, %v3312
        %v3319 = vadd.f32 %v3301, %v3312
        %v3320 = vadd.f32 %v3302, %v3312
        %v3321 = vadd.f32 %v3303, %v3312
        %v3322 = vmax.f32 %v3314, 0.0
        %v3323 = vmax.f32 %v3315, 0.0
        %v3324 = vmax.f32 %v3316, 0.0
        %v3325 = vmax.f32 %v3317, 0.0
        %v3326 = vmax.f32 %v3318, 0.0
        %v3327 = vmax.f32 %v3319, 0.0
        %v3328 = vmax.f32 %v3320, 0.0
        %v3329 = vmax.f32 %v3321, 0.0
        %3330 = vst [vmem:[%s1285] sm:$0xff] %v3322
        %3331 = vst [vmem:[%s1285 + $0x8] sm:$0xff] %v3323
        %3332 = vst [vmem:[%s1285 + $0x10] sm:$0xff] %v3324
        %3333 = vst [vmem:[%s1285 + $0x18] sm:$0xff] %v3325
        %3334 = vst [vmem:[%s1285 + $0x40] sm:$0xff] %v3326
        %3335 = vst [vmem:[%s1285 + $0x48] sm:$0xff] %v3327
        %3336 = vst [vmem:[%s1285 + $0x50] sm:$0xff] %v3328
        %3337 = vst [vmem:[%s1285 + $0x58] sm:$0xff] %v3329
        %v3338 = vld [vmem:[%s1248 + $0x10] sm:$0xff]
        %v3339 = vld [vmem:[%s1248 + $0x18] sm:$0xff]
        %v3340 = vld [vmem:[%s1248 + $0x30] sm:$0x77]
        %v3341 = vld [vmem:[%s1248 + $0x38] sm:$0x77]
        %v3342 = vld [vmem:[%s1255 + $0x8] sm:$0xff]
        %v3344 = vcombine.high %v3342, %v3342
        %v3346 = vunpack.c.l.s4 1983009808
        %v3347 = vunpack.c.0.s8 %v3346
        %v3348 = vlaneseq
        %v3349 = vshrl.u32 %v3348, 7
        %v3350 = vsub.s32 %v3347, %v3349
        %v3351 = vrot.slane %v3342, %v3350
        %v3353 = vunpack.c.l.s4 1983009808
        %v3354 = vunpack.c.0.s8 %v3353
        %v3355 = vlaneseq
        %v3356 = vshrl.u32 %v3355, 7
        %v3357 = vsub.s32 %v3354, %v3356
        %v3358 = vrot.slane %v3344, %v3357
        %v3359 = vcombine.high %v3351, %v3351
        %v3360 = vcombine.high %v3358, %v3358
        %v3362 = vand.u32 %v3351, %v1345
        %v3365 = vand.u32 %v3359, %v1345
        %v3368 = vand.u32 %v3358, %v1345
        %v3371 = vand.u32 %v3360, %v1345
        %3373 = vmatprep.subr.bf16.mxu0 %v3365
        %3374 = vmatpush1.bf16.msra.mxu0 %v3362
        %3375 = vmatprep.subr.bf16.mxu0 0
        %3376 = vmatpush1.bf16.msra.mxu0 0
        %3377 = vmatprep.subr.bf16.mxu0 0
        %3378 = vmatpush1.bf16.msra.mxu0 0
        %3379 = vmatprep.subr.bf16.mxu0 0
        %3380 = vmatpush1.bf16.msra.mxu0 0
        %3381 = vmatprep.subr.bf16.mxu0 0
        %3382 = vmatpush1.bf16.msra.mxu0 0
        %3383 = vmatprep.subr.bf16.mxu0 0
        %3384 = vmatpush1.bf16.msra.mxu0 0
        %3385 = vmatprep.subr.bf16.mxu0 0
        %3386 = vmatpush1.bf16.msra.mxu0 0
        %3387 = vmatprep.subr.bf16.mxu0 0
        %3388 = vmatpush1.bf16.msra.mxu0 0
        %3389 = vmatprep.subr.bf16.mxu0 0
        %3390 = vmatpush1.bf16.msra.mxu0 0
        %3391 = vmatprep.subr.bf16.mxu0 0
        %3392 = vmatpush1.bf16.msra.mxu0 0
        %3393 = vmatprep.subr.bf16.mxu0 0
        %3394 = vmatpush1.bf16.msra.mxu0 0
        %3395 = vmatprep.subr.bf16.mxu0 0
        %3396 = vmatpush1.bf16.msra.mxu0 0
        %3397 = vmatprep.subr.bf16.mxu0 0
        %3398 = vmatpush1.bf16.msra.mxu0 0
        %3399 = vmatprep.subr.bf16.mxu0 0
        %3400 = vmatpush1.bf16.msra.mxu0 0
        %3401 = vmatprep.subr.bf16.mxu0 0
        %3402 = vmatpush1.bf16.msra.mxu0 0
        %3403 = vmatprep.subr.bf16.mxu0 0
        %3404 = vmatpush1.bf16.msra.mxu0 0
        %3405 = vmatprep.mubr.bf16.mxu0 0
        %3406 = vmatmul.mubr.bf16.gmra.mrb[0].mxu0 %v1340
        %v3407 = vpop.f32.mrb[0].mxu0
        %v3408 = vadd.f32 0.0, %v3407
        %v3409 = vpop.f32.mrb[0].mxu0
        %v3410 = vadd.f32 0.0, %v3409
        %v3411 = vpop.f32.mrb[0].mxu0
        %v3412 = vadd.f32 0.0, %v3411
        %v3413 = vpop.f32.mrb[0].mxu0
        %v3414 = vadd.f32 0.0, %v3413
        %3415 = vdwg.mxu0
        %3416 = vmatprep.subr.bf16.mxu0 %v3371
        %3417 = vmatpush1.bf16.msra.mxu0 %v3368
        %3418 = vmatprep.subr.bf16.mxu0 0
        %3419 = vmatpush1.bf16.msra.mxu0 0
        %3420 = vmatprep.subr.bf16.mxu0 0
        %3421 = vmatpush1.bf16.msra.mxu0 0
        %3422 = vmatprep.subr.bf16.mxu0 0
        %3423 = vmatpush1.bf16.msra.mxu0 0
        %3424 = vmatprep.subr.bf16.mxu0 0
        %3425 = vmatpush1.bf16.msra.mxu0 0
        %3426 = vmatprep.subr.bf16.mxu0 0
        %3427 = vmatpush1.bf16.msra.mxu0 0
        %3428 = vmatprep.subr.bf16.mxu0 0
        %3429 = vmatpush1.bf16.msra.mxu0 0
        %3430 = vmatprep.subr.bf16.mxu0 0
        %3431 = vmatpush1.bf16.msra.mxu0 0
        %3432 = vmatprep.subr.bf16.mxu0 0
        %3433 = vmatpush1.bf16.msra.mxu0 0
        %3434 = vmatprep.subr.bf16.mxu0 0
        %3435 = vmatpush1.bf16.msra.mxu0 0
        %3436 = vmatprep.subr.bf16.mxu0 0
        %3437 = vmatpush1.bf16.msra.mxu0 0
        %3438 = vmatprep.subr.bf16.mxu0 0
        %3439 = vmatpush1.bf16.msra.mxu0 0
        %3440 = vmatprep.subr.bf16.mxu0 0
        %3441 = vmatpush1.bf16.msra.mxu0 0
        %3442 = vmatprep.subr.bf16.mxu0 0
        %3443 = vmatpush1.bf16.msra.mxu0 0
        %3444 = vmatprep.subr.bf16.mxu0 0
        %3445 = vmatpush1.bf16.msra.mxu0 0
        %3446 = vmatprep.subr.bf16.mxu0 0
        %3447 = vmatpush1.bf16.msra.mxu0 0
        %3448 = vmatprep.mubr.bf16.mxu0 0
        %3449 = vmatmul.mubr.bf16.gmra.mrb[0].mxu0 %v1340
        %v3450 = vpop.f32.mrb[0].mxu0
        %v3451 = vadd.f32 0.0, %v3450
        %v3452 = vpop.f32.mrb[0].mxu0
        %v3453 = vadd.f32 0.0, %v3452
        %v3454 = vpop.f32.mrb[0].mxu0
        %v3455 = vadd.f32 0.0, %v3454
        %v3456 = vpop.f32.mrb[0].mxu0
        %v3457 = vadd.f32 0.0, %v3456
        %3458 = vdwg.mxu0
        %v3463 = vunpack.c.l.b16 %v3338
        %v3464 = vunpack.c.h.b16 %v3338
        %v3465 = vunpack.c.l.b16 %v3339
        %v3466 = vunpack.c.h.b16 %v3339
        %v3467 = vunpack.c.l.b16 %v3340
        %v3468 = vunpack.c.h.b16 %v3340
        %v3469 = vunpack.c.l.b16 %v3341
        %v3470 = vunpack.c.h.b16 %v3341
        %v3471 = vpack.c.b16 %v3467, %v3463
        %v3472 = vpack.c.b16 %v3468, %v3464
        %v3473 = vpack.c.b16 %v3469, %v3465
        %v3474 = vpack.c.b16 %v3470, %v3466
        %v3476 = vand.u32 %v3471, %v1472
        %v3479 = vand.u32 %v3472, %v1472
        %v3482 = vand.u32 %v3473, %v1472
        %v3485 = vand.u32 %v3474, %v1472
        %3487 = vmatprep.subr.bf16.mxu0 %v3479
        %3488 = vmatpush1.bf16.msra.mxu0 %v3476
        %3489 = vmatprep.subr.bf16.mxu0 0
        %3490 = vmatpush1.bf16.msra.mxu0 0
        %3491 = vmatprep.subr.bf16.mxu0 0
        %3492 = vmatpush1.bf16.msra.mxu0 0
        %3493 = vmatprep.subr.bf16.mxu0 0
        %3494 = vmatpush1.bf16.msra.mxu0 0
        %3495 = vmatprep.subr.bf16.mxu0 0
        %3496 = vmatpush1.bf16.msra.mxu0 0
        %3497 = vmatprep.subr.bf16.mxu0 0
        %3498 = vmatpush1.bf16.msra.mxu0 0
        %3499 = vmatprep.subr.bf16.mxu0 0
        %3500 = vmatpush1.bf16.msra.mxu0 0
        %3501 = vmatprep.subr.bf16.mxu0 0
        %3502 = vmatpush1.bf16.msra.mxu0 0
        %3503 = vmatprep.subr.bf16.mxu0 0
        %3504 = vmatpush1.bf16.msra.mxu0 0
        %3505 = vmatprep.subr.bf16.mxu0 0
        %3506 = vmatpush1.bf16.msra.mxu0 0
        %3507 = vmatprep.subr.bf16.mxu0 0
        %3508 = vmatpush1.bf16.msra.mxu0 0
        %3509 = vmatprep.subr.bf16.mxu0 0
        %3510 = vmatpush1.bf16.msra.mxu0 0
        %3511 = vmatprep.subr.bf16.mxu0 0
        %3512 = vmatpush1.bf16.msra.mxu0 0
        %3513 = vmatprep.subr.bf16.mxu0 0
        %3514 = vmatpush1.bf16.msra.mxu0 0
        %3515 = vmatprep.subr.bf16.mxu0 0
        %3516 = vmatpush1.bf16.msra.mxu0 0
        %3517 = vmatprep.subr.bf16.mxu0 0
        %3518 = vmatpush1.bf16.msra.mxu0 0
        %3519 = vmatprep.mubr.bf16.mxu0 0
        %3520 = vmatmul.mubr.bf16.gmra.mrb[0].mxu0 %v1467
        %v3521 = vpop.f32.mrb[0].mxu0
        %v3522 = vadd.f32 %v3408, %v3521
        %v3523 = vpop.f32.mrb[0].mxu0
        %v3524 = vadd.f32 %v3410, %v3523
        %v3525 = vpop.f32.mrb[0].mxu0
        %v3526 = vadd.f32 %v3412, %v3525
        %v3527 = vpop.f32.mrb[0].mxu0
        %v3528 = vadd.f32 %v3414, %v3527
        %3529 = vdwg.mxu0
        %3530 = vmatprep.subr.bf16.mxu0 %v3485
        %3531 = vmatpush1.bf16.msra.mxu0 %v3482
        %3532 = vmatprep.subr.bf16.mxu0 0
        %3533 = vmatpush1.bf16.msra.mxu0 0
        %3534 = vmatprep.subr.bf16.mxu0 0
        %3535 = vmatpush1.bf16.msra.mxu0 0
        %3536 = vmatprep.subr.bf16.mxu0 0
        %3537 = vmatpush1.bf16.msra.mxu0 0
        %3538 = vmatprep.subr.bf16.mxu0 0
        %3539 = vmatpush1.bf16.msra.mxu0 0
        %3540 = vmatprep.subr.bf16.mxu0 0
        %3541 = vmatpush1.bf16.msra.mxu0 0
        %3542 = vmatprep.subr.bf16.mxu0 0
        %3543 = vmatpush1.bf16.msra.mxu0 0
        %3544 = vmatprep.subr.bf16.mxu0 0
        %3545 = vmatpush1.bf16.msra.mxu0 0
        %3546 = vmatprep.subr.bf16.mxu0 0
        %3547 = vmatpush1.bf16.msra.mxu0 0
        %3548 = vmatprep.subr.bf16.mxu0 0
        %3549 = vmatpush1.bf16.msra.mxu0 0
        %3550 = vmatprep.subr.bf16.mxu0 0
        %3551 = vmatpush1.bf16.msra.mxu0 0
        %3552 = vmatprep.subr.bf16.mxu0 0
        %3553 = vmatpush1.bf16.msra.mxu0 0
        %3554 = vmatprep.subr.bf16.mxu0 0
        %3555 = vmatpush1.bf16.msra.mxu0 0
        %3556 = vmatprep.subr.bf16.mxu0 0
        %3557 = vmatpush1.bf16.msra.mxu0 0
        %3558 = vmatprep.subr.bf16.mxu0 0
        %3559 = vmatpush1.bf16.msra.mxu0 0
        %3560 = vmatprep.subr.bf16.mxu0 0
        %3561 = vmatpush1.bf16.msra.mxu0 0
        %3562 = vmatprep.mubr.bf16.mxu0 0
        %3563 = vmatmul.mubr.bf16.gmra.mrb[0].mxu0 %v1467
        %v3564 = vpop.f32.mrb[0].mxu0
        %v3565 = vadd.f32 %v3451, %v3564
        %v3566 = vpop.f32.mrb[0].mxu0
        %v3567 = vadd.f32 %v3453, %v3566
        %v3568 = vpop.f32.mrb[0].mxu0
        %v3569 = vadd.f32 %v3455, %v3568
        %v3570 = vpop.f32.mrb[0].mxu0
        %v3571 = vadd.f32 %v3457, %v3570
        %3572 = vdwg.mxu0
        %v3573 = vld [vmem:[%s1571 + $0x10] sm:$0xff]
        %v3574 = vld [vmem:[%s1571 + $0x18] sm:$0xff]
        %v3575 = vld [vmem:[%s1571 + $0x30] sm:$0x77]
        %v3576 = vld [vmem:[%s1571 + $0x38] sm:$0x77]
        %v3577 = vld [vmem:[%s1576 + $0x8] sm:$0xff]
        %v3579 = vcombine.high %v3577, %v3577
        %v3581 = vunpack.c.l.s4 1983009808
        %v3582 = vunpack.c.0.s8 %v3581
        %v3583 = vlaneseq
        %v3584 = vshrl.u32 %v3583, 7
        %v3585 = vsub.s32 %v3582, %v3584
        %v3586 = vrot.slane %v3577, %v3585
        %v3588 = vunpack.c.l.s4 1983009808
        %v3589 = vunpack.c.0.s8 %v3588
        %v3590 = vlaneseq
        %v3591 = vshrl.u32 %v3590, 7
        %v3592 = vsub.s32 %v3589, %v3591
        %v3593 = vrot.slane %v3579, %v3592
        %v3594 = vcombine.high %v3586, %v3586
        %v3595 = vcombine.high %v3593, %v3593
        %v3597 = vand.u32 %v3586, %v1345
        %v3600 = vand.u32 %v3594, %v1345
        %v3603 = vand.u32 %v3593, %v1345
        %v3606 = vand.u32 %v3595, %v1345
        %3608 = vmatprep.subr.bf16.mxu0 %v3600
        %3609 = vmatpush1.bf16.msra.mxu0 %v3597
        %3610 = vmatprep.subr.bf16.mxu0 0
        %3611 = vmatpush1.bf16.msra.mxu0 0
        %3612 = vmatprep.subr.bf16.mxu0 0
        %3613 = vmatpush1.bf16.msra.mxu0 0
        %3614 = vmatprep.subr.bf16.mxu0 0
        %3615 = vmatpush1.bf16.msra.mxu0 0
        %3616 = vmatprep.subr.bf16.mxu0 0
        %3617 = vmatpush1.bf16.msra.mxu0 0
        %3618 = vmatprep.subr.bf16.mxu0 0
        %3619 = vmatpush1.bf16.msra.mxu0 0
        %3620 = vmatprep.subr.bf16.mxu0 0
        %3621 = vmatpush1.bf16.msra.mxu0 0
        %3622 = vmatprep.subr.bf16.mxu0 0
        %3623 = vmatpush1.bf16.msra.mxu0 0
        %3624 = vmatprep.subr.bf16.mxu0 0
        %3625 = vmatpush1.bf16.msra.mxu0 0
        %3626 = vmatprep.subr.bf16.mxu0 0
        %3627 = vmatpush1.bf16.msra.mxu0 0
        %3628 = vmatprep.subr.bf16.mxu0 0
        %3629 = vmatpush1.bf16.msra.mxu0 0
        %3630 = vmatprep.subr.bf16.mxu0 0
        %3631 = vmatpush1.bf16.msra.mxu0 0
        %3632 = vmatprep.subr.bf16.mxu0 0
        %3633 = vmatpush1.bf16.msra.mxu0 0
        %3634 = vmatprep.subr.bf16.mxu0 0
        %3635 = vmatpush1.bf16.msra.mxu0 0
        %3636 = vmatprep.subr.bf16.mxu0 0
        %3637 = vmatpush1.bf16.msra.mxu0 0
        %3638 = vmatprep.subr.bf16.mxu0 0
        %3639 = vmatpush1.bf16.msra.mxu0 0
        %3640 = vmatprep.mubr.bf16.mxu0 0
        %3641 = vmatmul.mubr.bf16.gmra.mrb[0].mxu0 %v1340
        %v3642 = vpop.f32.mrb[0].mxu0
        %v3643 = vadd.f32 0.0, %v3642
        %v3644 = vpop.f32.mrb[0].mxu0
        %v3645 = vadd.f32 0.0, %v3644
        %v3646 = vpop.f32.mrb[0].mxu0
        %v3647 = vadd.f32 0.0, %v3646
        %v3648 = vpop.f32.mrb[0].mxu0
        %v3649 = vadd.f32 0.0, %v3648
        %3650 = vdwg.mxu0
        %3651 = vmatprep.subr.bf16.mxu0 %v3606
        %3652 = vmatpush1.bf16.msra.mxu0 %v3603
        %3653 = vmatprep.subr.bf16.mxu0 0
        %3654 = vmatpush1.bf16.msra.mxu0 0
        %3655 = vmatprep.subr.bf16.mxu0 0
        %3656 = vmatpush1.bf16.msra.mxu0 0
        %3657 = vmatprep.subr.bf16.mxu0 0
        %3658 = vmatpush1.bf16.msra.mxu0 0
        %3659 = vmatprep.subr.bf16.mxu0 0
        %3660 = vmatpush1.bf16.msra.mxu0 0
        %3661 = vmatprep.subr.bf16.mxu0 0
        %3662 = vmatpush1.bf16.msra.mxu0 0
        %3663 = vmatprep.subr.bf16.mxu0 0
        %3664 = vmatpush1.bf16.msra.mxu0 0
        %3665 = vmatprep.subr.bf16.mxu0 0
        %3666 = vmatpush1.bf16.msra.mxu0 0
        %3667 = vmatprep.subr.bf16.mxu0 0
        %3668 = vmatpush1.bf16.msra.mxu0 0
        %3669 = vmatprep.subr.bf16.mxu0 0
        %3670 = vmatpush1.bf16.msra.mxu0 0
        %3671 = vmatprep.subr.bf16.mxu0 0
        %3672 = vmatpush1.bf16.msra.mxu0 0
        %3673 = vmatprep.subr.bf16.mxu0 0
        %3674 = vmatpush1.bf16.msra.mxu0 0
        %3675 = vmatprep.subr.bf16.mxu0 0
        %3676 = vmatpush1.bf16.msra.mxu0 0
        %3677 = vmatprep.subr.bf16.mxu0 0
        %3678 = vmatpush1.bf16.msra.mxu0 0
        %3679 = vmatprep.subr.bf16.mxu0 0
        %3680 = vmatpush1.bf16.msra.mxu0 0
        %3681 = vmatprep.subr.bf16.mxu0 0
        %3682 = vmatpush1.bf16.msra.mxu0 0
        %3683 = vmatprep.mubr.bf16.mxu0 0
        %3684 = vmatmul.mubr.bf16.gmra.mrb[0].mxu0 %v1340
        %v3685 = vpop.f32.mrb[0].mxu0
        %v3686 = vadd.f32 0.0, %v3685
        %v3687 = vpop.f32.mrb[0].mxu0
        %v3688 = vadd.f32 0.0, %v3687
        %v3689 = vpop.f32.mrb[0].mxu0
        %v3690 = vadd.f32 0.0, %v3689
        %v3691 = vpop.f32.mrb[0].mxu0
        %v3692 = vadd.f32 0.0, %v3691
        %3693 = vdwg.mxu0
        %v3698 = vunpack.c.l.b16 %v3573
        %v3699 = vunpack.c.h.b16 %v3573
        %v3700 = vunpack.c.l.b16 %v3574
        %v3701 = vunpack.c.h.b16 %v3574
        %v3702 = vunpack.c.l.b16 %v3575
        %v3703 = vunpack.c.h.b16 %v3575
        %v3704 = vunpack.c.l.b16 %v3576
        %v3705 = vunpack.c.h.b16 %v3576
        %v3706 = vpack.c.b16 %v3702, %v3698
        %v3707 = vpack.c.b16 %v3703, %v3699
        %v3708 = vpack.c.b16 %v3704, %v3700
        %v3709 = vpack.c.b16 %v3705, %v3701
        %v3711 = vand.u32 %v3706, %v1472
        %v3714 = vand.u32 %v3707, %v1472
        %v3717 = vand.u32 %v3708, %v1472
        %v3720 = vand.u32 %v3709, %v1472
        %3722 = vmatprep.subr.bf16.mxu0 %v3714
        %3723 = vmatpush1.bf16.msra.mxu0 %v3711
        %3724 = vmatprep.subr.bf16.mxu0 0
        %3725 = vmatpush1.bf16.msra.mxu0 0
        %3726 = vmatprep.subr.bf16.mxu0 0
        %3727 = vmatpush1.bf16.msra.mxu0 0
        %3728 = vmatprep.subr.bf16.mxu0 0
        %3729 = vmatpush1.bf16.msra.mxu0 0
        %3730 = vmatprep.subr.bf16.mxu0 0
        %3731 = vmatpush1.bf16.msra.mxu0 0
        %3732 = vmatprep.subr.bf16.mxu0 0
        %3733 = vmatpush1.bf16.msra.mxu0 0
        %3734 = vmatprep.subr.bf16.mxu0 0
        %3735 = vmatpush1.bf16.msra.mxu0 0
        %3736 = vmatprep.subr.bf16.mxu0 0
        %3737 = vmatpush1.bf16.msra.mxu0 0
        %3738 = vmatprep.subr.bf16.mxu0 0
        %3739 = vmatpush1.bf16.msra.mxu0 0
        %3740 = vmatprep.subr.bf16.mxu0 0
        %3741 = vmatpush1.bf16.msra.mxu0 0
        %3742 = vmatprep.subr.bf16.mxu0 0
        %3743 = vmatpush1.bf16.msra.mxu0 0
        %3744 = vmatprep.subr.bf16.mxu0 0
        %3745 = vmatpush1.bf16.msra.mxu0 0
        %3746 = vmatprep.subr.bf16.mxu0 0
        %3747 = vmatpush1.bf16.msra.mxu0 0
        %3748 = vmatprep.subr.bf16.mxu0 0
        %3749 = vmatpush1.bf16.msra.mxu0 0
        %3750 = vmatprep.subr.bf16.mxu0 0
        %3751 = vmatpush1.bf16.msra.mxu0 0
        %3752 = vmatprep.subr.bf16.mxu0 0
        %3753 = vmatpush1.bf16.msra.mxu0 0
        %3754 = vmatprep.mubr.bf16.mxu0 0
        %3755 = vmatmul.mubr.bf16.gmra.mrb[0].mxu0 %v1467
        %v3756 = vpop.f32.mrb[0].mxu0
        %v3757 = vadd.f32 %v3643, %v3756
        %v3758 = vpop.f32.mrb[0].mxu0
        %v3759 = vadd.f32 %v3645, %v3758
        %v3760 = vpop.f32.mrb[0].mxu0
        %v3761 = vadd.f32 %v3647, %v3760
        %v3762 = vpop.f32.mrb[0].mxu0
        %v3763 = vadd.f32 %v3649, %v3762
        %3764 = vdwg.mxu0
        %3765 = vmatprep.subr.bf16.mxu0 %v3720
        %3766 = vmatpush1.bf16.msra.mxu0 %v3717
        %3767 = vmatprep.subr.bf16.mxu0 0
        %3768 = vmatpush1.bf16.msra.mxu0 0
        %3769 = vmatprep.subr.bf16.mxu0 0
        %3770 = vmatpush1.bf16.msra.mxu0 0
        %3771 = vmatprep.subr.bf16.mxu0 0
        %3772 = vmatpush1.bf16.msra.mxu0 0
        %3773 = vmatprep.subr.bf16.mxu0 0
        %3774 = vmatpush1.bf16.msra.mxu0 0
        %3775 = vmatprep.subr.bf16.mxu0 0
        %3776 = vmatpush1.bf16.msra.mxu0 0
        %3777 = vmatprep.subr.bf16.mxu0 0
        %3778 = vmatpush1.bf16.msra.mxu0 0
        %3779 = vmatprep.subr.bf16.mxu0 0
        %3780 = vmatpush1.bf16.msra.mxu0 0
        %3781 = vmatprep.subr.bf16.mxu0 0
        %3782 = vmatpush1.bf16.msra.mxu0 0
        %3783 = vmatprep.subr.bf16.mxu0 0
        %3784 = vmatpush1.bf16.msra.mxu0 0
        %3785 = vmatprep.subr.bf16.mxu0 0
        %3786 = vmatpush1.bf16.msra.mxu0 0
        %3787 = vmatprep.subr.bf16.mxu0 0
        %3788 = vmatpush1.bf16.msra.mxu0 0
        %3789 = vmatprep.subr.bf16.mxu0 0
        %3790 = vmatpush1.bf16.msra.mxu0 0
        %3791 = vmatprep.subr.bf16.mxu0 0
        %3792 = vmatpush1.bf16.msra.mxu0 0
        %3793 = vmatprep.subr.bf16.mxu0 0
        %3794 = vmatpush1.bf16.msra.mxu0 0
        %3795 = vmatprep.subr.bf16.mxu0 0
        %3796 = vmatpush1.bf16.msra.mxu0 0
        %3797 = vmatprep.mubr.bf16.mxu0 0
        %3798 = vmatmul.mubr.bf16.gmra.mrb[0].mxu0 %v1467
        %v3799 = vpop.f32.mrb[0].mxu0
        %v3800 = vadd.f32 %v3686, %v3799
        %v3801 = vpop.f32.mrb[0].mxu0
        %v3802 = vadd.f32 %v3688, %v3801
        %v3803 = vpop.f32.mrb[0].mxu0
        %v3804 = vadd.f32 %v3690, %v3803
        %v3805 = vpop.f32.mrb[0].mxu0
        %v3806 = vadd.f32 %v3692, %v3805
        %3807 = vdwg.mxu0
        %v3808 = vmax.f32 %v3522, %v3757
        %v3809 = vmax.f32 %v3524, %v3759
        %v3810 = vmax.f32 %v3565, %v3800
        %v3811 = vmax.f32 %v3567, %v3802
        %v3812 = vmax.f32 %v3526, %v3761
        %v3813 = vmax.f32 %v3528, %v3763
        %v3814 = vmax.f32 %v3569, %v3804
        %v3815 = vmax.f32 %v3571, %v3806
        %v3816 = vld [vmem:[%s1816 + $0x10] sm:$0xff]
        %v3817 = vld [vmem:[%s1816 + $0x18] sm:$0xff]
        %v3818 = vld [vmem:[%s1816 + $0x30] sm:$0x77]
        %v3819 = vld [vmem:[%s1816 + $0x38] sm:$0x77]
        %v3820 = vld [vmem:[%s1821 + $0x8] sm:$0xff]
        %v3822 = vcombine.high %v3820, %v3820
        %v3824 = vunpack.c.l.s4 1983009808
        %v3825 = vunpack.c.0.s8 %v3824
        %v3826 = vlaneseq
        %v3827 = vshrl.u32 %v3826, 7
        %v3828 = vsub.s32 %v3825, %v3827
        %v3829 = vrot.slane %v3820, %v3828
        %v3831 = vunpack.c.l.s4 1983009808
        %v3832 = vunpack.c.0.s8 %v3831
        %v3833 = vlaneseq
        %v3834 = vshrl.u32 %v3833, 7
        %v3835 = vsub.s32 %v3832, %v3834
        %v3836 = vrot.slane %v3822, %v3835
        %v3837 = vcombine.high %v3829, %v3829
        %v3838 = vcombine.high %v3836, %v3836
        %v3840 = vand.u32 %v3829, %v1345
        %v3843 = vand.u32 %v3837, %v1345
        %v3846 = vand.u32 %v3836, %v1345
        %v3849 = vand.u32 %v3838, %v1345
        %3851 = vmatprep.subr.bf16.mxu0 %v3843
        %3852 = vmatpush1.bf16.msra.mxu0 %v3840
        %3853 = vmatprep.subr.bf16.mxu0 0
        %3854 = vmatpush1.bf16.msra.mxu0 0
        %3855 = vmatprep.subr.bf16.mxu0 0
        %3856 = vmatpush1.bf16.msra.mxu0 0
        %3857 = vmatprep.subr.bf16.mxu0 0
        %3858 = vmatpush1.bf16.msra.mxu0 0
        %3859 = vmatprep.subr.bf16.mxu0 0
        %3860 = vmatpush1.bf16.msra.mxu0 0
        %3861 = vmatprep.subr.bf16.mxu0 0
        %3862 = vmatpush1.bf16.msra.mxu0 0
        %3863 = vmatprep.subr.bf16.mxu0 0
        %3864 = vmatpush1.bf16.msra.mxu0 0
        %3865 = vmatprep.subr.bf16.mxu0 0
        %3866 = vmatpush1.bf16.msra.mxu0 0
        %3867 = vmatprep.subr.bf16.mxu0 0
        %3868 = vmatpush1.bf16.msra.mxu0 0
        %3869 = vmatprep.subr.bf16.mxu0 0
        %3870 = vmatpush1.bf16.msra.mxu0 0
        %3871 = vmatprep.subr.bf16.mxu0 0
        %3872 = vmatpush1.bf16.msra.mxu0 0
        %3873 = vmatprep.subr.bf16.mxu0 0
        %3874 = vmatpush1.bf16.msra.mxu0 0
        %3875 = vmatprep.subr.bf16.mxu0 0
        %3876 = vmatpush1.bf16.msra.mxu0 0
        %3877 = vmatprep.subr.bf16.mxu0 0
        %3878 = vmatpush1.bf16.msra.mxu0 0
        %3879 = vmatprep.subr.bf16.mxu0 0
        %3880 = vmatpush1.bf16.msra.mxu0 0
        %3881 = vmatprep.subr.bf16.mxu0 0
        %3882 = vmatpush1.bf16.msra.mxu0 0
        %3883 = vmatprep.mubr.bf16.mxu0 0
        %3884 = vmatmul.mubr.bf16.gmra.mrb[0].mxu0 %v1340
        %v3885 = vpop.f32.mrb[0].mxu0
        %v3886 = vadd.f32 0.0, %v3885
        %v3887 = vpop.f32.mrb[0].mxu0
        %v3888 = vadd.f32 0.0, %v3887
        %v3889 = vpop.f32.mrb[0].mxu0
        %v3890 = vadd.f32 0.0, %v3889
        %v3891 = vpop.f32.mrb[0].mxu0
        %v3892 = vadd.f32 0.0, %v3891
        %3893 = vdwg.mxu0
        %3894 = vmatprep.subr.bf16.mxu0 %v3849
        %3895 = vmatpush1.bf16.msra.mxu0 %v3846
        %3896 = vmatprep.subr.bf16.mxu0 0
        %3897 = vmatpush1.bf16.msra.mxu0 0
        %3898 = vmatprep.subr.bf16.mxu0 0
        %3899 = vmatpush1.bf16.msra.mxu0 0
        %3900 = vmatprep.subr.bf16.mxu0 0
        %3901 = vmatpush1.bf16.msra.mxu0 0
        %3902 = vmatprep.subr.bf16.mxu0 0
        %3903 = vmatpush1.bf16.msra.mxu0 0
        %3904 = vmatprep.subr.bf16.mxu0 0
        %3905 = vmatpush1.bf16.msra.mxu0 0
        %3906 = vmatprep.subr.bf16.mxu0 0
        %3907 = vmatpush1.bf16.msra.mxu0 0
        %3908 = vmatprep.subr.bf16.mxu0 0
        %3909 = vmatpush1.bf16.msra.mxu0 0
        %3910 = vmatprep.subr.bf16.mxu0 0
        %3911 = vmatpush1.bf16.msra.mxu0 0
        %3912 = vmatprep.subr.bf16.mxu0 0
        %3913 = vmatpush1.bf16.msra.mxu0 0
        %3914 = vmatprep.subr.bf16.mxu0 0
        %3915 = vmatpush1.bf16.msra.mxu0 0
        %3916 = vmatprep.subr.bf16.mxu0 0
        %3917 = vmatpush1.bf16.msra.mxu0 0
        %3918 = vmatprep.subr.bf16.mxu0 0
        %3919 = vmatpush1.bf16.msra.mxu0 0
        %3920 = vmatprep.subr.bf16.mxu0 0
        %3921 = vmatpush1.bf16.msra.mxu0 0
        %3922 = vmatprep.subr.bf16.mxu0 0
        %3923 = vmatpush1.bf16.msra.mxu0 0
        %3924 = vmatprep.subr.bf16.mxu0 0
        %3925 = vmatpush1.bf16.msra.mxu0 0
        %3926 = vmatprep.mubr.bf16.mxu0 0
        %3927 = vmatmul.mubr.bf16.gmra.mrb[0].mxu0 %v1340
        %v3928 = vpop.f32.mrb[0].mxu0
        %v3929 = vadd.f32 0.0, %v3928
        %v3930 = vpop.f32.mrb[0].mxu0
        %v3931 = vadd.f32 0.0, %v3930
        %v3932 = vpop.f32.mrb[0].mxu0
        %v3933 = vadd.f32 0.0, %v3932
        %v3934 = vpop.f32.mrb[0].mxu0
        %v3935 = vadd.f32 0.0, %v3934
        %3936 = vdwg.mxu0
        %v3941 = vunpack.c.l.b16 %v3816
        %v3942 = vunpack.c.h.b16 %v3816
        %v3943 = vunpack.c.l.b16 %v3817
        %v3944 = vunpack.c.h.b16 %v3817
        %v3945 = vunpack.c.l.b16 %v3818
        %v3946 = vunpack.c.h.b16 %v3818
        %v3947 = vunpack.c.l.b16 %v3819
        %v3948 = vunpack.c.h.b16 %v3819
        %v3949 = vpack.c.b16 %v3945, %v3941
        %v3950 = vpack.c.b16 %v3946, %v3942
        %v3951 = vpack.c.b16 %v3947, %v3943
        %v3952 = vpack.c.b16 %v3948, %v3944
        %v3954 = vand.u32 %v3949, %v1472
        %v3957 = vand.u32 %v3950, %v1472
        %v3960 = vand.u32 %v3951, %v1472
        %v3963 = vand.u32 %v3952, %v1472
        %3965 = vmatprep.subr.bf16.mxu0 %v3957
        %3966 = vmatpush1.bf16.msra.mxu0 %v3954
        %3967 = vmatprep.subr.bf16.mxu0 0
        %3968 = vmatpush1.bf16.msra.mxu0 0
        %3969 = vmatprep.subr.bf16.mxu0 0
        %3970 = vmatpush1.bf16.msra.mxu0 0
        %3971 = vmatprep.subr.bf16.mxu0 0
        %3972 = vmatpush1.bf16.msra.mxu0 0
        %3973 = vmatprep.subr.bf16.mxu0 0
        %3974 = vmatpush1.bf16.msra.mxu0 0
        %3975 = vmatprep.subr.bf16.mxu0 0
        %3976 = vmatpush1.bf16.msra.mxu0 0
        %3977 = vmatprep.subr.bf16.mxu0 0
        %3978 = vmatpush1.bf16.msra.mxu0 0
        %3979 = vmatprep.subr.bf16.mxu0 0
        %3980 = vmatpush1.bf16.msra.mxu0 0
        %3981 = vmatprep.subr.bf16.mxu0 0
        %3982 = vmatpush1.bf16.msra.mxu0 0
        %3983 = vmatprep.subr.bf16.mxu0 0
        %3984 = vmatpush1.bf16.msra.mxu0 0
        %3985 = vmatprep.subr.bf16.mxu0 0
        %3986 = vmatpush1.bf16.msra.mxu0 0
        %3987 = vmatprep.subr.bf16.mxu0 0
        %3988 = vmatpush1.bf16.msra.mxu0 0
        %3989 = vmatprep.subr.bf16.mxu0 0
        %3990 = vmatpush1.bf16.msra.mxu0 0
        %3991 = vmatprep.subr.bf16.mxu0 0
        %3992 = vmatpush1.bf16.msra.mxu0 0
        %3993 = vmatprep.subr.bf16.mxu0 0
        %3994 = vmatpush1.bf16.msra.mxu0 0
        %3995 = vmatprep.subr.bf16.mxu0 0
        %3996 = vmatpush1.bf16.msra.mxu0 0
        %3997 = vmatprep.mubr.bf16.mxu0 0
        %3998 = vmatmul.mubr.bf16.gmra.mrb[0].mxu0 %v1467
        %v3999 = vpop.f32.mrb[0].mxu0
        %v4000 = vadd.f32 %v3886, %v3999
        %v4001 = vpop.f32.mrb[0].mxu0
        %v4002 = vadd.f32 %v3888, %v4001
        %v4003 = vpop.f32.mrb[0].mxu0
        %v4004 = vadd.f32 %v3890, %v4003
        %v4005 = vpop.f32.mrb[0].mxu0
        %v4006 = vadd.f32 %v3892, %v4005
        %4007 = vdwg.mxu0
        %4008 = vmatprep.subr.bf16.mxu0 %v3963
        %4009 = vmatpush1.bf16.msra.mxu0 %v3960
        %4010 = vmatprep.subr.bf16.mxu0 0
        %4011 = vmatpush1.bf16.msra.mxu0 0
        %4012 = vmatprep.subr.bf16.mxu0 0
        %4013 = vmatpush1.bf16.msra.mxu0 0
        %4014 = vmatprep.subr.bf16.mxu0 0
        %4015 = vmatpush1.bf16.msra.mxu0 0
        %4016 = vmatprep.subr.bf16.mxu0 0
        %4017 = vmatpush1.bf16.msra.mxu0 0
        %4018 = vmatprep.subr.bf16.mxu0 0
        %4019 = vmatpush1.bf16.msra.mxu0 0
        %4020 = vmatprep.subr.bf16.mxu0 0
        %4021 = vmatpush1.bf16.msra.mxu0 0
        %4022 = vmatprep.subr.bf16.mxu0 0
        %4023 = vmatpush1.bf16.msra.mxu0 0
        %4024 = vmatprep.subr.bf16.mxu0 0
        %4025 = vmatpush1.bf16.msra.mxu0 0
        %4026 = vmatprep.subr.bf16.mxu0 0
        %4027 = vmatpush1.bf16.msra.mxu0 0
        %4028 = vmatprep.subr.bf16.mxu0 0
        %4029 = vmatpush1.bf16.msra.mxu0 0
        %4030 = vmatprep.subr.bf16.mxu0 0
        %4031 = vmatpush1.bf16.msra.mxu0 0
        %4032 = vmatprep.subr.bf16.mxu0 0
        %4033 = vmatpush1.bf16.msra.mxu0 0
        %4034 = vmatprep.subr.bf16.mxu0 0
        %4035 = vmatpush1.bf16.msra.mxu0 0
        %4036 = vmatprep.subr.bf16.mxu0 0
        %4037 = vmatpush1.bf16.msra.mxu0 0
        %4038 = vmatprep.subr.bf16.mxu0 0
        %4039 = vmatpush1.bf16.msra.mxu0 0
        %4040 = vmatprep.mubr.bf16.mxu0 0
        %4041 = vmatmul.mubr.bf16.gmra.mrb[0].mxu0 %v1467
        %v4042 = vpop.f32.mrb[0].mxu0
        %v4043 = vadd.f32 %v3929, %v4042
        %v4044 = vpop.f32.mrb[0].mxu0
        %v4045 = vadd.f32 %v3931, %v4044
        %v4046 = vpop.f32.mrb[0].mxu0
        %v4047 = vadd.f32 %v3933, %v4046
        %v4048 = vpop.f32.mrb[0].mxu0
        %v4049 = vadd.f32 %v3935, %v4048
        %4050 = vdwg.mxu0
        %v4051 = vmax.f32 %v3808, %v4000
        %v4052 = vmax.f32 %v3809, %v4002
        %v4053 = vmax.f32 %v3810, %v4043
        %v4054 = vmax.f32 %v3811, %v4045
        %v4055 = vmax.f32 %v3812, %v4004
        %v4056 = vmax.f32 %v3813, %v4006
        %v4057 = vmax.f32 %v3814, %v4047
        %v4058 = vmax.f32 %v3815, %v4049
        %v4059 = vld [vmem:[%s2061 + $0x10] sm:$0xff]
        %v4060 = vld [vmem:[%s2061 + $0x18] sm:$0xff]
        %v4061 = vld [vmem:[%s2061 + $0x30] sm:$0x77]
        %v4062 = vld [vmem:[%s2061 + $0x38] sm:$0x77]
        %v4063 = vld [vmem:[%s2066 + $0x8] sm:$0xff]
        %v4065 = vcombine.high %v4063, %v4063
        %v4067 = vunpack.c.l.s4 1983009808
        %v4068 = vunpack.c.0.s8 %v4067
        %v4069 = vlaneseq
        %v4070 = vshrl.u32 %v4069, 7
        %v4071 = vsub.s32 %v4068, %v4070
        %v4072 = vrot.slane %v4063, %v4071
        %v4074 = vunpack.c.l.s4 1983009808
        %v4075 = vunpack.c.0.s8 %v4074
        %v4076 = vlaneseq
        %v4077 = vshrl.u32 %v4076, 7
        %v4078 = vsub.s32 %v4075, %v4077
        %v4079 = vrot.slane %v4065, %v4078
        %v4080 = vcombine.high %v4072, %v4072
        %v4081 = vcombine.high %v4079, %v4079
        %v4083 = vand.u32 %v4072, %v1345
        %v4086 = vand.u32 %v4080, %v1345
        %v4089 = vand.u32 %v4079, %v1345
        %v4092 = vand.u32 %v4081, %v1345
        %4094 = vmatprep.subr.bf16.mxu0 %v4086
        %4095 = vmatpush1.bf16.msra.mxu0 %v4083
        %4096 = vmatprep.subr.bf16.mxu0 0
        %4097 = vmatpush1.bf16.msra.mxu0 0
        %4098 = vmatprep.subr.bf16.mxu0 0
        %4099 = vmatpush1.bf16.msra.mxu0 0
        %4100 = vmatprep.subr.bf16.mxu0 0
        %4101 = vmatpush1.bf16.msra.mxu0 0
        %4102 = vmatprep.subr.bf16.mxu0 0
        %4103 = vmatpush1.bf16.msra.mxu0 0
        %4104 = vmatprep.subr.bf16.mxu0 0
        %4105 = vmatpush1.bf16.msra.mxu0 0
        %4106 = vmatprep.subr.bf16.mxu0 0
        %4107 = vmatpush1.bf16.msra.mxu0 0
        %4108 = vmatprep.subr.bf16.mxu0 0
        %4109 = vmatpush1.bf16.msra.mxu0 0
        %4110 = vmatprep.subr.bf16.mxu0 0
        %4111 = vmatpush1.bf16.msra.mxu0 0
        %4112 = vmatprep.subr.bf16.mxu0 0
        %4113 = vmatpush1.bf16.msra.mxu0 0
        %4114 = vmatprep.subr.bf16.mxu0 0
        %4115 = vmatpush1.bf16.msra.mxu0 0
        %4116 = vmatprep.subr.bf16.mxu0 0
        %4117 = vmatpush1.bf16.msra.mxu0 0
        %4118 = vmatprep.subr.bf16.mxu0 0
        %4119 = vmatpush1.bf16.msra.mxu0 0
        %4120 = vmatprep.subr.bf16.mxu0 0
        %4121 = vmatpush1.bf16.msra.mxu0 0
        %4122 = vmatprep.subr.bf16.mxu0 0
        %4123 = vmatpush1.bf16.msra.mxu0 0
        %4124 = vmatprep.subr.bf16.mxu0 0
        %4125 = vmatpush1.bf16.msra.mxu0 0
        %4126 = vmatprep.mubr.bf16.mxu0 0
        %4127 = vmatmul.mubr.bf16.gmra.mrb[0].mxu0 %v1340
        %v4128 = vpop.f32.mrb[0].mxu0
        %v4129 = vadd.f32 0.0, %v4128
        %v4130 = vpop.f32.mrb[0].mxu0
        %v4131 = vadd.f32 0.0, %v4130
        %v4132 = vpop.f32.mrb[0].mxu0
        %v4133 = vadd.f32 0.0, %v4132
        %v4134 = vpop.f32.mrb[0].mxu0
        %v4135 = vadd.f32 0.0, %v4134
        %4136 = vdwg.mxu0
        %4137 = vmatprep.subr.bf16.mxu0 %v4092
        %4138 = vmatpush1.bf16.msra.mxu0 %v4089
        %4139 = vmatprep.subr.bf16.mxu0 0
        %4140 = vmatpush1.bf16.msra.mxu0 0
        %4141 = vmatprep.subr.bf16.mxu0 0
        %4142 = vmatpush1.bf16.msra.mxu0 0
        %4143 = vmatprep.subr.bf16.mxu0 0
        %4144 = vmatpush1.bf16.msra.mxu0 0
        %4145 = vmatprep.subr.bf16.mxu0 0
        %4146 = vmatpush1.bf16.msra.mxu0 0
        %4147 = vmatprep.subr.bf16.mxu0 0
        %4148 = vmatpush1.bf16.msra.mxu0 0
        %4149 = vmatprep.subr.bf16.mxu0 0
        %4150 = vmatpush1.bf16.msra.mxu0 0
        %4151 = vmatprep.subr.bf16.mxu0 0
        %4152 = vmatpush1.bf16.msra.mxu0 0
        %4153 = vmatprep.subr.bf16.mxu0 0
        %4154 = vmatpush1.bf16.msra.mxu0 0
        %4155 = vmatprep.subr.bf16.mxu0 0
        %4156 = vmatpush1.bf16.msra.mxu0 0
        %4157 = vmatprep.subr.bf16.mxu0 0
        %4158 = vmatpush1.bf16.msra.mxu0 0
        %4159 = vmatprep.subr.bf16.mxu0 0
        %4160 = vmatpush1.bf16.msra.mxu0 0
        %4161 = vmatprep.subr.bf16.mxu0 0
        %4162 = vmatpush1.bf16.msra.mxu0 0
        %4163 = vmatprep.subr.bf16.mxu0 0
        %4164 = vmatpush1.bf16.msra.mxu0 0
        %4165 = vmatprep.subr.bf16.mxu0 0
        %4166 = vmatpush1.bf16.msra.mxu0 0
        %4167 = vmatprep.subr.bf16.mxu0 0
        %4168 = vmatpush1.bf16.msra.mxu0 0
        %4169 = vmatprep.mubr.bf16.mxu0 0
        %4170 = vmatmul.mubr.bf16.gmra.mrb[0].mxu0 %v1340
        %v4171 = vpop.f32.mrb[0].mxu0
        %v4172 = vadd.f32 0.0, %v4171
        %v4173 = vpop.f32.mrb[0].mxu0
        %v4174 = vadd.f32 0.0, %v4173
        %v4175 = vpop.f32.mrb[0].mxu0
        %v4176 = vadd.f32 0.0, %v4175
        %v4177 = vpop.f32.mrb[0].mxu0
        %v4178 = vadd.f32 0.0, %v4177
        %4179 = vdwg.mxu0
        %v4184 = vunpack.c.l.b16 %v4059
        %v4185 = vunpack.c.h.b16 %v4059
        %v4186 = vunpack.c.l.b16 %v4060
        %v4187 = vunpack.c.h.b16 %v4060
        %v4188 = vunpack.c.l.b16 %v4061
        %v4189 = vunpack.c.h.b16 %v4061
        %v4190 = vunpack.c.l.b16 %v4062
        %v4191 = vunpack.c.h.b16 %v4062
        %v4192 = vpack.c.b16 %v4188, %v4184
        %v4193 = vpack.c.b16 %v4189, %v4185
        %v4194 = vpack.c.b16 %v4190, %v4186
        %v4195 = vpack.c.b16 %v4191, %v4187
        %v4197 = vand.u32 %v4192, %v1472
        %v4200 = vand.u32 %v4193, %v1472
        %v4203 = vand.u32 %v4194, %v1472
        %v4206 = vand.u32 %v4195, %v1472
        %4208 = vmatprep.subr.bf16.mxu0 %v4200
        %4209 = vmatpush1.bf16.msra.mxu0 %v4197
        %4210 = vmatprep.subr.bf16.mxu0 0
        %4211 = vmatpush1.bf16.msra.mxu0 0
        %4212 = vmatprep.subr.bf16.mxu0 0
        %4213 = vmatpush1.bf16.msra.mxu0 0
        %4214 = vmatprep.subr.bf16.mxu0 0
        %4215 = vmatpush1.bf16.msra.mxu0 0
        %4216 = vmatprep.subr.bf16.mxu0 0
        %4217 = vmatpush1.bf16.msra.mxu0 0
        %4218 = vmatprep.subr.bf16.mxu0 0
        %4219 = vmatpush1.bf16.msra.mxu0 0
        %4220 = vmatprep.subr.bf16.mxu0 0
        %4221 = vmatpush1.bf16.msra.mxu0 0
        %4222 = vmatprep.subr.bf16.mxu0 0
        %4223 = vmatpush1.bf16.msra.mxu0 0
        %4224 = vmatprep.subr.bf16.mxu0 0
        %4225 = vmatpush1.bf16.msra.mxu0 0
        %4226 = vmatprep.subr.bf16.mxu0 0
        %4227 = vmatpush1.bf16.msra.mxu0 0
        %4228 = vmatprep.subr.bf16.mxu0 0
        %4229 = vmatpush1.bf16.msra.mxu0 0
        %4230 = vmatprep.subr.bf16.mxu0 0
        %4231 = vmatpush1.bf16.msra.mxu0 0
        %4232 = vmatprep.subr.bf16.mxu0 0
        %4233 = vmatpush1.bf16.msra.mxu0 0
        %4234 = vmatprep.subr.bf16.mxu0 0
        %4235 = vmatpush1.bf16.msra.mxu0 0
        %4236 = vmatprep.subr.bf16.mxu0 0
        %4237 = vmatpush1.bf16.msra.mxu0 0
        %4238 = vmatprep.subr.bf16.mxu0 0
        %4239 = vmatpush1.bf16.msra.mxu0 0
        %4240 = vmatprep.mubr.bf16.mxu0 0
        %4241 = vmatmul.mubr.bf16.gmra.mrb[0].mxu0 %v1467
        %v4242 = vpop.f32.mrb[0].mxu0
        %v4243 = vadd.f32 %v4129, %v4242
        %v4244 = vpop.f32.mrb[0].mxu0
        %v4245 = vadd.f32 %v4131, %v4244
        %v4246 = vpop.f32.mrb[0].mxu0
        %v4247 = vadd.f32 %v4133, %v4246
        %v4248 = vpop.f32.mrb[0].mxu0
        %v4249 = vadd.f32 %v4135, %v4248
        %4250 = vdwg.mxu0
        %4251 = vmatprep.subr.bf16.mxu0 %v4206
        %4252 = vmatpush1.bf16.msra.mxu0 %v4203
        %4253 = vmatprep.subr.bf16.mxu0 0
        %4254 = vmatpush1.bf16.msra.mxu0 0
        %4255 = vmatprep.subr.bf16.mxu0 0
        %4256 = vmatpush1.bf16.msra.mxu0 0
        %4257 = vmatprep.subr.bf16.mxu0 0
        %4258 = vmatpush1.bf16.msra.mxu0 0
        %4259 = vmatprep.subr.bf16.mxu0 0
        %4260 = vmatpush1.bf16.msra.mxu0 0
        %4261 = vmatprep.subr.bf16.mxu0 0
        %4262 = vmatpush1.bf16.msra.mxu0 0
        %4263 = vmatprep.subr.bf16.mxu0 0
        %4264 = vmatpush1.bf16.msra.mxu0 0
        %4265 = vmatprep.subr.bf16.mxu0 0
        %4266 = vmatpush1.bf16.msra.mxu0 0
        %4267 = vmatprep.subr.bf16.mxu0 0
        %4268 = vmatpush1.bf16.msra.mxu0 0
        %4269 = vmatprep.subr.bf16.mxu0 0
        %4270 = vmatpush1.bf16.msra.mxu0 0
        %4271 = vmatprep.subr.bf16.mxu0 0
        %4272 = vmatpush1.bf16.msra.mxu0 0
        %4273 = vmatprep.subr.bf16.mxu0 0
        %4274 = vmatpush1.bf16.msra.mxu0 0
        %4275 = vmatprep.subr.bf16.mxu0 0
        %4276 = vmatpush1.bf16.msra.mxu0 0
        %4277 = vmatprep.subr.bf16.mxu0 0
        %4278 = vmatpush1.bf16.msra.mxu0 0
        %4279 = vmatprep.subr.bf16.mxu0 0
        %4280 = vmatpush1.bf16.msra.mxu0 0
        %4281 = vmatprep.subr.bf16.mxu0 0
        %4282 = vmatpush1.bf16.msra.mxu0 0
        %4283 = vmatprep.mubr.bf16.mxu0 0
        %4284 = vmatmul.mubr.bf16.gmra.mrb[0].mxu0 %v1467
        %v4285 = vpop.f32.mrb[0].mxu0
        %v4286 = vadd.f32 %v4172, %v4285
        %v4287 = vpop.f32.mrb[0].mxu0
        %v4288 = vadd.f32 %v4174, %v4287
        %v4289 = vpop.f32.mrb[0].mxu0
        %v4290 = vadd.f32 %v4176, %v4289
        %v4291 = vpop.f32.mrb[0].mxu0
        %v4292 = vadd.f32 %v4178, %v4291
        %4293 = vdwg.mxu0
        %v4294 = vmax.f32 %v4051, %v4243
        %v4295 = vmax.f32 %v4052, %v4245
        %v4296 = vmax.f32 %v4053, %v4286
        %v4297 = vmax.f32 %v4054, %v4288
        %v4298 = vmax.f32 %v4055, %v4247
        %v4299 = vmax.f32 %v4056, %v4249
        %v4300 = vmax.f32 %v4057, %v4290
        %v4301 = vmax.f32 %v4058, %v4292
        %v4302 = vld [vmem:[%s2306 + $0x10] sm:$0xff]
        %v4303 = vld [vmem:[%s2306 + $0x18] sm:$0xff]
        %v4304 = vld [vmem:[%s2306 + $0x30] sm:$0x77]
        %v4305 = vld [vmem:[%s2306 + $0x38] sm:$0x77]
        %v4306 = vld [vmem:[%s2311 + $0x8] sm:$0xff]
        %v4308 = vcombine.high %v4306, %v4306
        %v4310 = vunpack.c.l.s4 1983009808
        %v4311 = vunpack.c.0.s8 %v4310
        %v4312 = vlaneseq
        %v4313 = vshrl.u32 %v4312, 7
        %v4314 = vsub.s32 %v4311, %v4313
        %v4315 = vrot.slane %v4306, %v4314
        %v4317 = vunpack.c.l.s4 1983009808
        %v4318 = vunpack.c.0.s8 %v4317
        %v4319 = vlaneseq
        %v4320 = vshrl.u32 %v4319, 7
        %v4321 = vsub.s32 %v4318, %v4320
        %v4322 = vrot.slane %v4308, %v4321
        %v4323 = vcombine.high %v4315, %v4315
        %v4324 = vcombine.high %v4322, %v4322
        %v4326 = vand.u32 %v4315, %v1345
        %v4329 = vand.u32 %v4323, %v1345
        %v4332 = vand.u32 %v4322, %v1345
        %v4335 = vand.u32 %v4324, %v1345
        %4337 = vmatprep.subr.bf16.mxu0 %v4329
        %4338 = vmatpush1.bf16.msra.mxu0 %v4326
        %4339 = vmatprep.subr.bf16.mxu0 0
        %4340 = vmatpush1.bf16.msra.mxu0 0
        %4341 = vmatprep.subr.bf16.mxu0 0
        %4342 = vmatpush1.bf16.msra.mxu0 0
        %4343 = vmatprep.subr.bf16.mxu0 0
        %4344 = vmatpush1.bf16.msra.mxu0 0
        %4345 = vmatprep.subr.bf16.mxu0 0
        %4346 = vmatpush1.bf16.msra.mxu0 0
        %4347 = vmatprep.subr.bf16.mxu0 0
        %4348 = vmatpush1.bf16.msra.mxu0 0
        %4349 = vmatprep.subr.bf16.mxu0 0
        %4350 = vmatpush1.bf16.msra.mxu0 0
        %4351 = vmatprep.subr.bf16.mxu0 0
        %4352 = vmatpush1.bf16.msra.mxu0 0
        %4353 = vmatprep.subr.bf16.mxu0 0
        %4354 = vmatpush1.bf16.msra.mxu0 0
        %4355 = vmatprep.subr.bf16.mxu0 0
        %4356 = vmatpush1.bf16.msra.mxu0 0
        %4357 = vmatprep.subr.bf16.mxu0 0
        %4358 = vmatpush1.bf16.msra.mxu0 0
        %4359 = vmatprep.subr.bf16.mxu0 0
        %4360 = vmatpush1.bf16.msra.mxu0 0
        %4361 = vmatprep.subr.bf16.mxu0 0
        %4362 = vmatpush1.bf16.msra.mxu0 0
        %4363 = vmatprep.subr.bf16.mxu0 0
        %4364 = vmatpush1.bf16.msra.mxu0 0
        %4365 = vmatprep.subr.bf16.mxu0 0
        %4366 = vmatpush1.bf16.msra.mxu0 0
        %4367 = vmatprep.subr.bf16.mxu0 0
        %4368 = vmatpush1.bf16.msra.mxu0 0
        %4369 = vmatprep.mubr.bf16.mxu0 0
        %4370 = vmatmul.mubr.bf16.gmra.mrb[0].mxu0 %v1340
        %v4371 = vpop.f32.mrb[0].mxu0
        %v4372 = vadd.f32 0.0, %v4371
        %v4373 = vpop.f32.mrb[0].mxu0
        %v4374 = vadd.f32 0.0, %v4373
        %v4375 = vpop.f32.mrb[0].mxu0
        %v4376 = vadd.f32 0.0, %v4375
        %v4377 = vpop.f32.mrb[0].mxu0
        %v4378 = vadd.f32 0.0, %v4377
        %4379 = vdwg.mxu0
        %4380 = vmatprep.subr.bf16.mxu0 %v4335
        %4381 = vmatpush1.bf16.msra.mxu0 %v4332
        %4382 = vmatprep.subr.bf16.mxu0 0
        %4383 = vmatpush1.bf16.msra.mxu0 0
        %4384 = vmatprep.subr.bf16.mxu0 0
        %4385 = vmatpush1.bf16.msra.mxu0 0
        %4386 = vmatprep.subr.bf16.mxu0 0
        %4387 = vmatpush1.bf16.msra.mxu0 0
        %4388 = vmatprep.subr.bf16.mxu0 0
        %4389 = vmatpush1.bf16.msra.mxu0 0
        %4390 = vmatprep.subr.bf16.mxu0 0
        %4391 = vmatpush1.bf16.msra.mxu0 0
        %4392 = vmatprep.subr.bf16.mxu0 0
        %4393 = vmatpush1.bf16.msra.mxu0 0
        %4394 = vmatprep.subr.bf16.mxu0 0
        %4395 = vmatpush1.bf16.msra.mxu0 0
        %4396 = vmatprep.subr.bf16.mxu0 0
        %4397 = vmatpush1.bf16.msra.mxu0 0
        %4398 = vmatprep.subr.bf16.mxu0 0
        %4399 = vmatpush1.bf16.msra.mxu0 0
        %4400 = vmatprep.subr.bf16.mxu0 0
        %4401 = vmatpush1.bf16.msra.mxu0 0
        %4402 = vmatprep.subr.bf16.mxu0 0
        %4403 = vmatpush1.bf16.msra.mxu0 0
        %4404 = vmatprep.subr.bf16.mxu0 0
        %4405 = vmatpush1.bf16.msra.mxu0 0
        %4406 = vmatprep.subr.bf16.mxu0 0
        %4407 = vmatpush1.bf16.msra.mxu0 0
        %4408 = vmatprep.subr.bf16.mxu0 0
        %4409 = vmatpush1.bf16.msra.mxu0 0
        %4410 = vmatprep.subr.bf16.mxu0 0
        %4411 = vmatpush1.bf16.msra.mxu0 0
        %4412 = vmatprep.mubr.bf16.mxu0 0
        %4413 = vmatmul.mubr.bf16.gmra.mrb[0].mxu0 %v1340
        %v4414 = vpop.f32.mrb[0].mxu0
        %v4415 = vadd.f32 0.0, %v4414
        %v4416 = vpop.f32.mrb[0].mxu0
        %v4417 = vadd.f32 0.0, %v4416
        %v4418 = vpop.f32.mrb[0].mxu0
        %v4419 = vadd.f32 0.0, %v4418
        %v4420 = vpop.f32.mrb[0].mxu0
        %v4421 = vadd.f32 0.0, %v4420
        %4422 = vdwg.mxu0
        %v4427 = vunpack.c.l.b16 %v4302
        %v4428 = vunpack.c.h.b16 %v4302
        %v4429 = vunpack.c.l.b16 %v4303
        %v4430 = vunpack.c.h.b16 %v4303
        %v4431 = vunpack.c.l.b16 %v4304
        %v4432 = vunpack.c.h.b16 %v4304
        %v4433 = vunpack.c.l.b16 %v4305
        %v4434 = vunpack.c.h.b16 %v4305
        %v4435 = vpack.c.b16 %v4431, %v4427
        %v4436 = vpack.c.b16 %v4432, %v4428
        %v4437 = vpack.c.b16 %v4433, %v4429
        %v4438 = vpack.c.b16 %v4434, %v4430
        %v4440 = vand.u32 %v4435, %v1472
        %v4443 = vand.u32 %v4436, %v1472
        %v4446 = vand.u32 %v4437, %v1472
        %v4449 = vand.u32 %v4438, %v1472
        %4451 = vmatprep.subr.bf16.mxu0 %v4443
        %4452 = vmatpush1.bf16.msra.mxu0 %v4440
        %4453 = vmatprep.subr.bf16.mxu0 0
        %4454 = vmatpush1.bf16.msra.mxu0 0
        %4455 = vmatprep.subr.bf16.mxu0 0
        %4456 = vmatpush1.bf16.msra.mxu0 0
        %4457 = vmatprep.subr.bf16.mxu0 0
        %4458 = vmatpush1.bf16.msra.mxu0 0
        %4459 = vmatprep.subr.bf16.mxu0 0
        %4460 = vmatpush1.bf16.msra.mxu0 0
        %4461 = vmatprep.subr.bf16.mxu0 0
        %4462 = vmatpush1.bf16.msra.mxu0 0
        %4463 = vmatprep.subr.bf16.mxu0 0
        %4464 = vmatpush1.bf16.msra.mxu0 0
        %4465 = vmatprep.subr.bf16.mxu0 0
        %4466 = vmatpush1.bf16.msra.mxu0 0
        %4467 = vmatprep.subr.bf16.mxu0 0
        %4468 = vmatpush1.bf16.msra.mxu0 0
        %4469 = vmatprep.subr.bf16.mxu0 0
        %4470 = vmatpush1.bf16.msra.mxu0 0
        %4471 = vmatprep.subr.bf16.mxu0 0
        %4472 = vmatpush1.bf16.msra.mxu0 0
        %4473 = vmatprep.subr.bf16.mxu0 0
        %4474 = vmatpush1.bf16.msra.mxu0 0
        %4475 = vmatprep.subr.bf16.mxu0 0
        %4476 = vmatpush1.bf16.msra.mxu0 0
        %4477 = vmatprep.subr.bf16.mxu0 0
        %4478 = vmatpush1.bf16.msra.mxu0 0
        %4479 = vmatprep.subr.bf16.mxu0 0
        %4480 = vmatpush1.bf16.msra.mxu0 0
        %4481 = vmatprep.subr.bf16.mxu0 0
        %4482 = vmatpush1.bf16.msra.mxu0 0
        %4483 = vmatprep.mubr.bf16.mxu0 0
        %4484 = vmatmul.mubr.bf16.gmra.mrb[0].mxu0 %v1467
        %v4485 = vpop.f32.mrb[0].mxu0
        %v4486 = vadd.f32 %v4372, %v4485
        %v4487 = vpop.f32.mrb[0].mxu0
        %v4488 = vadd.f32 %v4374, %v4487
        %v4489 = vpop.f32.mrb[0].mxu0
        %v4490 = vadd.f32 %v4376, %v4489
        %v4491 = vpop.f32.mrb[0].mxu0
        %v4492 = vadd.f32 %v4378, %v4491
        %4493 = vdwg.mxu0
        %4494 = vmatprep.subr.bf16.mxu0 %v4449
        %4495 = vmatpush1.bf16.msra.mxu0 %v4446
        %4496 = vmatprep.subr.bf16.mxu0 0
        %4497 = vmatpush1.bf16.msra.mxu0 0
        %4498 = vmatprep.subr.bf16.mxu0 0
        %4499 = vmatpush1.bf16.msra.mxu0 0
        %4500 = vmatprep.subr.bf16.mxu0 0
        %4501 = vmatpush1.bf16.msra.mxu0 0
        %4502 = vmatprep.subr.bf16.mxu0 0
        %4503 = vmatpush1.bf16.msra.mxu0 0
        %4504 = vmatprep.subr.bf16.mxu0 0
        %4505 = vmatpush1.bf16.msra.mxu0 0
        %4506 = vmatprep.subr.bf16.mxu0 0
        %4507 = vmatpush1.bf16.msra.mxu0 0
        %4508 = vmatprep.subr.bf16.mxu0 0
        %4509 = vmatpush1.bf16.msra.mxu0 0
        %4510 = vmatprep.subr.bf16.mxu0 0
        %4511 = vmatpush1.bf16.msra.mxu0 0
        %4512 = vmatprep.subr.bf16.mxu0 0
        %4513 = vmatpush1.bf16.msra.mxu0 0
        %4514 = vmatprep.subr.bf16.mxu0 0
        %4515 = vmatpush1.bf16.msra.mxu0 0
        %4516 = vmatprep.subr.bf16.mxu0 0
        %4517 = vmatpush1.bf16.msra.mxu0 0
        %4518 = vmatprep.subr.bf16.mxu0 0
        %4519 = vmatpush1.bf16.msra.mxu0 0
        %4520 = vmatprep.subr.bf16.mxu0 0
        %4521 = vmatpush1.bf16.msra.mxu0 0
        %4522 = vmatprep.subr.bf16.mxu0 0
        %4523 = vmatpush1.bf16.msra.mxu0 0
        %4524 = vmatprep.subr.bf16.mxu0 0
        %4525 = vmatpush1.bf16.msra.mxu0 0
        %4526 = vmatprep.mubr.bf16.mxu0 0
        %4527 = vmatmul.mubr.bf16.gmra.mrb[0].mxu0 %v1467
        %v4528 = vpop.f32.mrb[0].mxu0
        %v4529 = vadd.f32 %v4415, %v4528
        %v4530 = vpop.f32.mrb[0].mxu0
        %v4531 = vadd.f32 %v4417, %v4530
        %v4532 = vpop.f32.mrb[0].mxu0
        %v4533 = vadd.f32 %v4419, %v4532
        %v4534 = vpop.f32.mrb[0].mxu0
        %v4535 = vadd.f32 %v4421, %v4534
        %4536 = vdwg.mxu0
        %v4537 = vmax.f32 %v4294, %v4486
        %v4538 = vmax.f32 %v4295, %v4488
        %v4539 = vmax.f32 %v4296, %v4529
        %v4540 = vmax.f32 %v4297, %v4531
        %v4541 = vmax.f32 %v4298, %v4490
        %v4542 = vmax.f32 %v4299, %v4492
        %v4543 = vmax.f32 %v4300, %v4533
        %v4544 = vmax.f32 %v4301, %v4535
        %v4545 = vld [vmem:[%s2551 + $0x10] sm:$0xff]
        %v4546 = vld [vmem:[%s2551 + $0x18] sm:$0xff]
        %v4547 = vld [vmem:[%s2551 + $0x30] sm:$0x77]
        %v4548 = vld [vmem:[%s2551 + $0x38] sm:$0x77]
        %v4549 = vld [vmem:[%s2556 + $0x8] sm:$0xff]
        %v4551 = vcombine.high %v4549, %v4549
        %v4553 = vunpack.c.l.s4 1983009808
        %v4554 = vunpack.c.0.s8 %v4553
        %v4555 = vlaneseq
        %v4556 = vshrl.u32 %v4555, 7
        %v4557 = vsub.s32 %v4554, %v4556
        %v4558 = vrot.slane %v4549, %v4557
        %v4560 = vunpack.c.l.s4 1983009808
        %v4561 = vunpack.c.0.s8 %v4560
        %v4562 = vlaneseq
        %v4563 = vshrl.u32 %v4562, 7
        %v4564 = vsub.s32 %v4561, %v4563
        %v4565 = vrot.slane %v4551, %v4564
        %v4566 = vcombine.high %v4558, %v4558
        %v4567 = vcombine.high %v4565, %v4565
        %v4569 = vand.u32 %v4558, %v1345
        %v4572 = vand.u32 %v4566, %v1345
        %v4575 = vand.u32 %v4565, %v1345
        %v4578 = vand.u32 %v4567, %v1345
        %4580 = vmatprep.subr.bf16.mxu0 %v4572
        %4581 = vmatpush1.bf16.msra.mxu0 %v4569
        %4582 = vmatprep.subr.bf16.mxu0 0
        %4583 = vmatpush1.bf16.msra.mxu0 0
        %4584 = vmatprep.subr.bf16.mxu0 0
        %4585 = vmatpush1.bf16.msra.mxu0 0
        %4586 = vmatprep.subr.bf16.mxu0 0
        %4587 = vmatpush1.bf16.msra.mxu0 0
        %4588 = vmatprep.subr.bf16.mxu0 0
        %4589 = vmatpush1.bf16.msra.mxu0 0
        %4590 = vmatprep.subr.bf16.mxu0 0
        %4591 = vmatpush1.bf16.msra.mxu0 0
        %4592 = vmatprep.subr.bf16.mxu0 0
        %4593 = vmatpush1.bf16.msra.mxu0 0
        %4594 = vmatprep.subr.bf16.mxu0 0
        %4595 = vmatpush1.bf16.msra.mxu0 0
        %4596 = vmatprep.subr.bf16.mxu0 0
        %4597 = vmatpush1.bf16.msra.mxu0 0
        %4598 = vmatprep.subr.bf16.mxu0 0
        %4599 = vmatpush1.bf16.msra.mxu0 0
        %4600 = vmatprep.subr.bf16.mxu0 0
        %4601 = vmatpush1.bf16.msra.mxu0 0
        %4602 = vmatprep.subr.bf16.mxu0 0
        %4603 = vmatpush1.bf16.msra.mxu0 0
        %4604 = vmatprep.subr.bf16.mxu0 0
        %4605 = vmatpush1.bf16.msra.mxu0 0
        %4606 = vmatprep.subr.bf16.mxu0 0
        %4607 = vmatpush1.bf16.msra.mxu0 0
        %4608 = vmatprep.subr.bf16.mxu0 0
        %4609 = vmatpush1.bf16.msra.mxu0 0
        %4610 = vmatprep.subr.bf16.mxu0 0
        %4611 = vmatpush1.bf16.msra.mxu0 0
        %4612 = vmatprep.mubr.bf16.mxu0 0
        %4613 = vmatmul.mubr.bf16.gmra.mrb[0].mxu0 %v1340
        %v4614 = vpop.f32.mrb[0].mxu0
        %v4615 = vadd.f32 0.0, %v4614
        %v4616 = vpop.f32.mrb[0].mxu0
        %v4617 = vadd.f32 0.0, %v4616
        %v4618 = vpop.f32.mrb[0].mxu0
        %v4619 = vadd.f32 0.0, %v4618
        %v4620 = vpop.f32.mrb[0].mxu0
        %v4621 = vadd.f32 0.0, %v4620
        %4622 = vdwg.mxu0
        %4623 = vmatprep.subr.bf16.mxu0 %v4578
        %4624 = vmatpush1.bf16.msra.mxu0 %v4575
        %4625 = vmatprep.subr.bf16.mxu0 0
        %4626 = vmatpush1.bf16.msra.mxu0 0
        %4627 = vmatprep.subr.bf16.mxu0 0
        %4628 = vmatpush1.bf16.msra.mxu0 0
        %4629 = vmatprep.subr.bf16.mxu0 0
        %4630 = vmatpush1.bf16.msra.mxu0 0
        %4631 = vmatprep.subr.bf16.mxu0 0
        %4632 = vmatpush1.bf16.msra.mxu0 0
        %4633 = vmatprep.subr.bf16.mxu0 0
        %4634 = vmatpush1.bf16.msra.mxu0 0
        %4635 = vmatprep.subr.bf16.mxu0 0
        %4636 = vmatpush1.bf16.msra.mxu0 0
        %4637 = vmatprep.subr.bf16.mxu0 0
        %4638 = vmatpush1.bf16.msra.mxu0 0
        %4639 = vmatprep.subr.bf16.mxu0 0
        %4640 = vmatpush1.bf16.msra.mxu0 0
        %4641 = vmatprep.subr.bf16.mxu0 0
        %4642 = vmatpush1.bf16.msra.mxu0 0
        %4643 = vmatprep.subr.bf16.mxu0 0
        %4644 = vmatpush1.bf16.msra.mxu0 0
        %4645 = vmatprep.subr.bf16.mxu0 0
        %4646 = vmatpush1.bf16.msra.mxu0 0
        %4647 = vmatprep.subr.bf16.mxu0 0
        %4648 = vmatpush1.bf16.msra.mxu0 0
        %4649 = vmatprep.subr.bf16.mxu0 0
        %4650 = vmatpush1.bf16.msra.mxu0 0
        %4651 = vmatprep.subr.bf16.mxu0 0
        %4652 = vmatpush1.bf16.msra.mxu0 0
        %4653 = vmatprep.subr.bf16.mxu0 0
        %4654 = vmatpush1.bf16.msra.mxu0 0
        %4655 = vmatprep.mubr.bf16.mxu0 0
        %4656 = vmatmul.mubr.bf16.gmra.mrb[0].mxu0 %v1340
        %v4657 = vpop.f32.mrb[0].mxu0
        %v4658 = vadd.f32 0.0, %v4657
        %v4659 = vpop.f32.mrb[0].mxu0
        %v4660 = vadd.f32 0.0, %v4659
        %v4661 = vpop.f32.mrb[0].mxu0
        %v4662 = vadd.f32 0.0, %v4661
        %v4663 = vpop.f32.mrb[0].mxu0
        %v4664 = vadd.f32 0.0, %v4663
        %4665 = vdwg.mxu0
        %v4670 = vunpack.c.l.b16 %v4545
        %v4671 = vunpack.c.h.b16 %v4545
        %v4672 = vunpack.c.l.b16 %v4546
        %v4673 = vunpack.c.h.b16 %v4546
        %v4674 = vunpack.c.l.b16 %v4547
        %v4675 = vunpack.c.h.b16 %v4547
        %v4676 = vunpack.c.l.b16 %v4548
        %v4677 = vunpack.c.h.b16 %v4548
        %v4678 = vpack.c.b16 %v4674, %v4670
        %v4679 = vpack.c.b16 %v4675, %v4671
        %v4680 = vpack.c.b16 %v4676, %v4672
        %v4681 = vpack.c.b16 %v4677, %v4673
        %v4683 = vand.u32 %v4678, %v1472
        %v4686 = vand.u32 %v4679, %v1472
        %v4689 = vand.u32 %v4680, %v1472
        %v4692 = vand.u32 %v4681, %v1472
        %4694 = vmatprep.subr.bf16.mxu0 %v4686
        %4695 = vmatpush1.bf16.msra.mxu0 %v4683
        %4696 = vmatprep.subr.bf16.mxu0 0
        %4697 = vmatpush1.bf16.msra.mxu0 0
        %4698 = vmatprep.subr.bf16.mxu0 0
        %4699 = vmatpush1.bf16.msra.mxu0 0
        %4700 = vmatprep.subr.bf16.mxu0 0
        %4701 = vmatpush1.bf16.msra.mxu0 0
        %4702 = vmatprep.subr.bf16.mxu0 0
        %4703 = vmatpush1.bf16.msra.mxu0 0
        %4704 = vmatprep.subr.bf16.mxu0 0
        %4705 = vmatpush1.bf16.msra.mxu0 0
        %4706 = vmatprep.subr.bf16.mxu0 0
        %4707 = vmatpush1.bf16.msra.mxu0 0
        %4708 = vmatprep.subr.bf16.mxu0 0
        %4709 = vmatpush1.bf16.msra.mxu0 0
        %4710 = vmatprep.subr.bf16.mxu0 0
        %4711 = vmatpush1.bf16.msra.mxu0 0
        %4712 = vmatprep.subr.bf16.mxu0 0
        %4713 = vmatpush1.bf16.msra.mxu0 0
        %4714 = vmatprep.subr.bf16.mxu0 0
        %4715 = vmatpush1.bf16.msra.mxu0 0
        %4716 = vmatprep.subr.bf16.mxu0 0
        %4717 = vmatpush1.bf16.msra.mxu0 0
        %4718 = vmatprep.subr.bf16.mxu0 0
        %4719 = vmatpush1.bf16.msra.mxu0 0
        %4720 = vmatprep.subr.bf16.mxu0 0
        %4721 = vmatpush1.bf16.msra.mxu0 0
        %4722 = vmatprep.subr.bf16.mxu0 0
        %4723 = vmatpush1.bf16.msra.mxu0 0
        %4724 = vmatprep.subr.bf16.mxu0 0
        %4725 = vmatpush1.bf16.msra.mxu0 0
        %4726 = vmatprep.mubr.bf16.mxu0 0
        %4727 = vmatmul.mubr.bf16.gmra.mrb[0].mxu0 %v1467
        %v4728 = vpop.f32.mrb[0].mxu0
        %v4729 = vadd.f32 %v4615, %v4728
        %v4730 = vpop.f32.mrb[0].mxu0
        %v4731 = vadd.f32 %v4617, %v4730
        %v4732 = vpop.f32.mrb[0].mxu0
        %v4733 = vadd.f32 %v4619, %v4732
        %v4734 = vpop.f32.mrb[0].mxu0
        %v4735 = vadd.f32 %v4621, %v4734
        %4736 = vdwg.mxu0
        %4737 = vmatprep.subr.bf16.mxu0 %v4692
        %4738 = vmatpush1.bf16.msra.mxu0 %v4689
        %4739 = vmatprep.subr.bf16.mxu0 0
        %4740 = vmatpush1.bf16.msra.mxu0 0
        %4741 = vmatprep.subr.bf16.mxu0 0
        %4742 = vmatpush1.bf16.msra.mxu0 0
        %4743 = vmatprep.subr.bf16.mxu0 0
        %4744 = vmatpush1.bf16.msra.mxu0 0
        %4745 = vmatprep.subr.bf16.mxu0 0
        %4746 = vmatpush1.bf16.msra.mxu0 0
        %4747 = vmatprep.subr.bf16.mxu0 0
        %4748 = vmatpush1.bf16.msra.mxu0 0
        %4749 = vmatprep.subr.bf16.mxu0 0
        %4750 = vmatpush1.bf16.msra.mxu0 0
        %4751 = vmatprep.subr.bf16.mxu0 0
        %4752 = vmatpush1.bf16.msra.mxu0 0
        %4753 = vmatprep.subr.bf16.mxu0 0
        %4754 = vmatpush1.bf16.msra.mxu0 0
        %4755 = vmatprep.subr.bf16.mxu0 0
        %4756 = vmatpush1.bf16.msra.mxu0 0
        %4757 = vmatprep.subr.bf16.mxu0 0
        %4758 = vmatpush1.bf16.msra.mxu0 0
        %4759 = vmatprep.subr.bf16.mxu0 0
        %4760 = vmatpush1.bf16.msra.mxu0 0
        %4761 = vmatprep.subr.bf16.mxu0 0
        %4762 = vmatpush1.bf16.msra.mxu0 0
        %4763 = vmatprep.subr.bf16.mxu0 0
        %4764 = vmatpush1.bf16.msra.mxu0 0
        %4765 = vmatprep.subr.bf16.mxu0 0
        %4766 = vmatpush1.bf16.msra.mxu0 0
        %4767 = vmatprep.subr.bf16.mxu0 0
        %4768 = vmatpush1.bf16.msra.mxu0 0
        %4769 = vmatprep.mubr.bf16.mxu0 0
        %4770 = vmatmul.mubr.bf16.gmra.mrb[0].mxu0 %v1467
        %v4771 = vpop.f32.mrb[0].mxu0
        %v4772 = vadd.f32 %v4658, %v4771
        %v4773 = vpop.f32.mrb[0].mxu0
        %v4774 = vadd.f32 %v4660, %v4773
        %v4775 = vpop.f32.mrb[0].mxu0
        %v4776 = vadd.f32 %v4662, %v4775
        %v4777 = vpop.f32.mrb[0].mxu0
        %v4778 = vadd.f32 %v4664, %v4777
        %4779 = vdwg.mxu0
        %v4780 = vmax.f32 %v4537, %v4729
        %v4781 = vmax.f32 %v4538, %v4731
        %v4782 = vmax.f32 %v4539, %v4772
        %v4783 = vmax.f32 %v4540, %v4774
        %v4784 = vmax.f32 %v4541, %v4733
        %v4785 = vmax.f32 %v4542, %v4735
        %v4786 = vmax.f32 %v4543, %v4776
        %v4787 = vmax.f32 %v4544, %v4778
        %v4788 = vld [vmem:[%s2796 + $0x10] sm:$0xff]
        %v4789 = vld [vmem:[%s2796 + $0x18] sm:$0xff]
        %v4790 = vld [vmem:[%s2796 + $0x30] sm:$0x77]
        %v4791 = vld [vmem:[%s2796 + $0x38] sm:$0x77]
        %v4792 = vld [vmem:[%s2801 + $0x8] sm:$0xff]
        %v4794 = vcombine.high %v4792, %v4792
        %v4796 = vunpack.c.l.s4 1983009808
        %v4797 = vunpack.c.0.s8 %v4796
        %v4798 = vlaneseq
        %v4799 = vshrl.u32 %v4798, 7
        %v4800 = vsub.s32 %v4797, %v4799
        %v4801 = vrot.slane %v4792, %v4800
        %v4803 = vunpack.c.l.s4 1983009808
        %v4804 = vunpack.c.0.s8 %v4803
        %v4805 = vlaneseq
        %v4806 = vshrl.u32 %v4805, 7
        %v4807 = vsub.s32 %v4804, %v4806
        %v4808 = vrot.slane %v4794, %v4807
        %v4809 = vcombine.high %v4801, %v4801
        %v4810 = vcombine.high %v4808, %v4808
        %v4812 = vand.u32 %v4801, %v1345
        %v4815 = vand.u32 %v4809, %v1345
        %v4818 = vand.u32 %v4808, %v1345
        %v4821 = vand.u32 %v4810, %v1345
        %4823 = vmatprep.subr.bf16.mxu0 %v4815
        %4824 = vmatpush1.bf16.msra.mxu0 %v4812
        %4825 = vmatprep.subr.bf16.mxu0 0
        %4826 = vmatpush1.bf16.msra.mxu0 0
        %4827 = vmatprep.subr.bf16.mxu0 0
        %4828 = vmatpush1.bf16.msra.mxu0 0
        %4829 = vmatprep.subr.bf16.mxu0 0
        %4830 = vmatpush1.bf16.msra.mxu0 0
        %4831 = vmatprep.subr.bf16.mxu0 0
        %4832 = vmatpush1.bf16.msra.mxu0 0
        %4833 = vmatprep.subr.bf16.mxu0 0
        %4834 = vmatpush1.bf16.msra.mxu0 0
        %4835 = vmatprep.subr.bf16.mxu0 0
        %4836 = vmatpush1.bf16.msra.mxu0 0
        %4837 = vmatprep.subr.bf16.mxu0 0
        %4838 = vmatpush1.bf16.msra.mxu0 0
        %4839 = vmatprep.subr.bf16.mxu0 0
        %4840 = vmatpush1.bf16.msra.mxu0 0
        %4841 = vmatprep.subr.bf16.mxu0 0
        %4842 = vmatpush1.bf16.msra.mxu0 0
        %4843 = vmatprep.subr.bf16.mxu0 0
        %4844 = vmatpush1.bf16.msra.mxu0 0
        %4845 = vmatprep.subr.bf16.mxu0 0
        %4846 = vmatpush1.bf16.msra.mxu0 0
        %4847 = vmatprep.subr.bf16.mxu0 0
        %4848 = vmatpush1.bf16.msra.mxu0 0
        %4849 = vmatprep.subr.bf16.mxu0 0
        %4850 = vmatpush1.bf16.msra.mxu0 0
        %4851 = vmatprep.subr.bf16.mxu0 0
        %4852 = vmatpush1.bf16.msra.mxu0 0
        %4853 = vmatprep.subr.bf16.mxu0 0
        %4854 = vmatpush1.bf16.msra.mxu0 0
        %4855 = vmatprep.mubr.bf16.mxu0 0
        %4856 = vmatmul.mubr.bf16.gmra.mrb[0].mxu0 %v1340
        %v4857 = vpop.f32.mrb[0].mxu0
        %v4858 = vadd.f32 0.0, %v4857
        %v4859 = vpop.f32.mrb[0].mxu0
        %v4860 = vadd.f32 0.0, %v4859
        %v4861 = vpop.f32.mrb[0].mxu0
        %v4862 = vadd.f32 0.0, %v4861
        %v4863 = vpop.f32.mrb[0].mxu0
        %v4864 = vadd.f32 0.0, %v4863
        %4865 = vdwg.mxu0
        %4866 = vmatprep.subr.bf16.mxu0 %v4821
        %4867 = vmatpush1.bf16.msra.mxu0 %v4818
        %4868 = vmatprep.subr.bf16.mxu0 0
        %4869 = vmatpush1.bf16.msra.mxu0 0
        %4870 = vmatprep.subr.bf16.mxu0 0
        %4871 = vmatpush1.bf16.msra.mxu0 0
        %4872 = vmatprep.subr.bf16.mxu0 0
        %4873 = vmatpush1.bf16.msra.mxu0 0
        %4874 = vmatprep.subr.bf16.mxu0 0
        %4875 = vmatpush1.bf16.msra.mxu0 0
        %4876 = vmatprep.subr.bf16.mxu0 0
        %4877 = vmatpush1.bf16.msra.mxu0 0
        %4878 = vmatprep.subr.bf16.mxu0 0
        %4879 = vmatpush1.bf16.msra.mxu0 0
        %4880 = vmatprep.subr.bf16.mxu0 0
        %4881 = vmatpush1.bf16.msra.mxu0 0
        %4882 = vmatprep.subr.bf16.mxu0 0
        %4883 = vmatpush1.bf16.msra.mxu0 0
        %4884 = vmatprep.subr.bf16.mxu0 0
        %4885 = vmatpush1.bf16.msra.mxu0 0
        %4886 = vmatprep.subr.bf16.mxu0 0
        %4887 = vmatpush1.bf16.msra.mxu0 0
        %4888 = vmatprep.subr.bf16.mxu0 0
        %4889 = vmatpush1.bf16.msra.mxu0 0
        %4890 = vmatprep.subr.bf16.mxu0 0
        %4891 = vmatpush1.bf16.msra.mxu0 0
        %4892 = vmatprep.subr.bf16.mxu0 0
        %4893 = vmatpush1.bf16.msra.mxu0 0
        %4894 = vmatprep.subr.bf16.mxu0 0
        %4895 = vmatpush1.bf16.msra.mxu0 0
        %4896 = vmatprep.subr.bf16.mxu0 0
        %4897 = vmatpush1.bf16.msra.mxu0 0
        %4898 = vmatprep.mubr.bf16.mxu0 0
        %4899 = vmatmul.mubr.bf16.gmra.mrb[0].mxu0 %v1340
        %v4900 = vpop.f32.mrb[0].mxu0
        %v4901 = vadd.f32 0.0, %v4900
        %v4902 = vpop.f32.mrb[0].mxu0
        %v4903 = vadd.f32 0.0, %v4902
        %v4904 = vpop.f32.mrb[0].mxu0
        %v4905 = vadd.f32 0.0, %v4904
        %v4906 = vpop.f32.mrb[0].mxu0
        %v4907 = vadd.f32 0.0, %v4906
        %4908 = vdwg.mxu0
        %v4913 = vunpack.c.l.b16 %v4788
        %v4914 = vunpack.c.h.b16 %v4788
        %v4915 = vunpack.c.l.b16 %v4789
        %v4916 = vunpack.c.h.b16 %v4789
        %v4917 = vunpack.c.l.b16 %v4790
        %v4918 = vunpack.c.h.b16 %v4790
        %v4919 = vunpack.c.l.b16 %v4791
        %v4920 = vunpack.c.h.b16 %v4791
        %v4921 = vpack.c.b16 %v4917, %v4913
        %v4922 = vpack.c.b16 %v4918, %v4914
        %v4923 = vpack.c.b16 %v4919, %v4915
        %v4924 = vpack.c.b16 %v4920, %v4916
        %v4926 = vand.u32 %v4921, %v1472
        %v4929 = vand.u32 %v4922, %v1472
        %v4932 = vand.u32 %v4923, %v1472
        %v4935 = vand.u32 %v4924, %v1472
        %4937 = vmatprep.subr.bf16.mxu0 %v4929
        %4938 = vmatpush1.bf16.msra.mxu0 %v4926
        %4939 = vmatprep.subr.bf16.mxu0 0
        %4940 = vmatpush1.bf16.msra.mxu0 0
        %4941 = vmatprep.subr.bf16.mxu0 0
        %4942 = vmatpush1.bf16.msra.mxu0 0
        %4943 = vmatprep.subr.bf16.mxu0 0
        %4944 = vmatpush1.bf16.msra.mxu0 0
        %4945 = vmatprep.subr.bf16.mxu0 0
        %4946 = vmatpush1.bf16.msra.mxu0 0
        %4947 = vmatprep.subr.bf16.mxu0 0
        %4948 = vmatpush1.bf16.msra.mxu0 0
        %4949 = vmatprep.subr.bf16.mxu0 0
        %4950 = vmatpush1.bf16.msra.mxu0 0
        %4951 = vmatprep.subr.bf16.mxu0 0
        %4952 = vmatpush1.bf16.msra.mxu0 0
        %4953 = vmatprep.subr.bf16.mxu0 0
        %4954 = vmatpush1.bf16.msra.mxu0 0
        %4955 = vmatprep.subr.bf16.mxu0 0
        %4956 = vmatpush1.bf16.msra.mxu0 0
        %4957 = vmatprep.subr.bf16.mxu0 0
        %4958 = vmatpush1.bf16.msra.mxu0 0
        %4959 = vmatprep.subr.bf16.mxu0 0
        %4960 = vmatpush1.bf16.msra.mxu0 0
        %4961 = vmatprep.subr.bf16.mxu0 0
        %4962 = vmatpush1.bf16.msra.mxu0 0
        %4963 = vmatprep.subr.bf16.mxu0 0
        %4964 = vmatpush1.bf16.msra.mxu0 0
        %4965 = vmatprep.subr.bf16.mxu0 0
        %4966 = vmatpush1.bf16.msra.mxu0 0
        %4967 = vmatprep.subr.bf16.mxu0 0
        %4968 = vmatpush1.bf16.msra.mxu0 0
        %4969 = vmatprep.mubr.bf16.mxu0 0
        %4970 = vmatmul.mubr.bf16.gmra.mrb[0].mxu0 %v1467
        %v4971 = vpop.f32.mrb[0].mxu0
        %v4972 = vadd.f32 %v4858, %v4971
        %v4973 = vpop.f32.mrb[0].mxu0
        %v4974 = vadd.f32 %v4860, %v4973
        %v4975 = vpop.f32.mrb[0].mxu0
        %v4976 = vadd.f32 %v4862, %v4975
        %v4977 = vpop.f32.mrb[0].mxu0
        %v4978 = vadd.f32 %v4864, %v4977
        %4979 = vdwg.mxu0
        %4980 = vmatprep.subr.bf16.mxu0 %v4935
        %4981 = vmatpush1.bf16.msra.mxu0 %v4932
        %4982 = vmatprep.subr.bf16.mxu0 0
        %4983 = vmatpush1.bf16.msra.mxu0 0
        %4984 = vmatprep.subr.bf16.mxu0 0
        %4985 = vmatpush1.bf16.msra.mxu0 0
        %4986 = vmatprep.subr.bf16.mxu0 0
        %4987 = vmatpush1.bf16.msra.mxu0 0
        %4988 = vmatprep.subr.bf16.mxu0 0
        %4989 = vmatpush1.bf16.msra.mxu0 0
        %4990 = vmatprep.subr.bf16.mxu0 0
        %4991 = vmatpush1.bf16.msra.mxu0 0
        %4992 = vmatprep.subr.bf16.mxu0 0
        %4993 = vmatpush1.bf16.msra.mxu0 0
        %4994 = vmatprep.subr.bf16.mxu0 0
        %4995 = vmatpush1.bf16.msra.mxu0 0
        %4996 = vmatprep.subr.bf16.mxu0 0
        %4997 = vmatpush1.bf16.msra.mxu0 0
        %4998 = vmatprep.subr.bf16.mxu0 0
        %4999 = vmatpush1.bf16.msra.mxu0 0
        %5000 = vmatprep.subr.bf16.mxu0 0
        %5001 = vmatpush1.bf16.msra.mxu0 0
        %5002 = vmatprep.subr.bf16.mxu0 0
        %5003 = vmatpush1.bf16.msra.mxu0 0
        %5004 = vmatprep.subr.bf16.mxu0 0
        %5005 = vmatpush1.bf16.msra.mxu0 0
        %5006 = vmatprep.subr.bf16.mxu0 0
        %5007 = vmatpush1.bf16.msra.mxu0 0
        %5008 = vmatprep.subr.bf16.mxu0 0
        %5009 = vmatpush1.bf16.msra.mxu0 0
        %5010 = vmatprep.subr.bf16.mxu0 0
        %5011 = vmatpush1.bf16.msra.mxu0 0
        %5012 = vmatprep.mubr.bf16.mxu0 0
        %5013 = vmatmul.mubr.bf16.gmra.mrb[0].mxu0 %v1467
        %v5014 = vpop.f32.mrb[0].mxu0
        %v5015 = vadd.f32 %v4901, %v5014
        %v5016 = vpop.f32.mrb[0].mxu0
        %v5017 = vadd.f32 %v4903, %v5016
        %v5018 = vpop.f32.mrb[0].mxu0
        %v5019 = vadd.f32 %v4905, %v5018
        %v5020 = vpop.f32.mrb[0].mxu0
        %v5021 = vadd.f32 %v4907, %v5020
        %5022 = vdwg.mxu0
        %v5023 = vmax.f32 %v4780, %v4972
        %v5024 = vmax.f32 %v4781, %v4974
        %v5025 = vmax.f32 %v4782, %v5015
        %v5026 = vmax.f32 %v4783, %v5017
        %v5027 = vmax.f32 %v4784, %v4976
        %v5028 = vmax.f32 %v4785, %v4978
        %v5029 = vmax.f32 %v4786, %v5019
        %v5030 = vmax.f32 %v4787, %v5021
        %v5031 = vld [vmem:[%s3041 + $0x10] sm:$0xff]
        %v5032 = vld [vmem:[%s3041 + $0x18] sm:$0xff]
        %v5033 = vld [vmem:[%s3041 + $0x30] sm:$0x77]
        %v5034 = vld [vmem:[%s3041 + $0x38] sm:$0x77]
        %v5035 = vld [vmem:[%s3046 + $0x8] sm:$0xff]
        %v5037 = vcombine.high %v5035, %v5035
        %v5039 = vunpack.c.l.s4 1983009808
        %v5040 = vunpack.c.0.s8 %v5039
        %v5041 = vlaneseq
        %v5042 = vshrl.u32 %v5041, 7
        %v5043 = vsub.s32 %v5040, %v5042
        %v5044 = vrot.slane %v5035, %v5043
        %v5046 = vunpack.c.l.s4 1983009808
        %v5047 = vunpack.c.0.s8 %v5046
        %v5048 = vlaneseq
        %v5049 = vshrl.u32 %v5048, 7
        %v5050 = vsub.s32 %v5047, %v5049
        %v5051 = vrot.slane %v5037, %v5050
        %v5052 = vcombine.high %v5044, %v5044
        %v5053 = vcombine.high %v5051, %v5051
        %v5055 = vand.u32 %v5044, %v1345
        %v5058 = vand.u32 %v5052, %v1345
        %v5061 = vand.u32 %v5051, %v1345
        %v5064 = vand.u32 %v5053, %v1345
        %5066 = vmatprep.subr.bf16.mxu0 %v5058
        %5067 = vmatpush1.bf16.msra.mxu0 %v5055
        %5068 = vmatprep.subr.bf16.mxu0 0
        %5069 = vmatpush1.bf16.msra.mxu0 0
        %5070 = vmatprep.subr.bf16.mxu0 0
        %5071 = vmatpush1.bf16.msra.mxu0 0
        %5072 = vmatprep.subr.bf16.mxu0 0
        %5073 = vmatpush1.bf16.msra.mxu0 0
        %5074 = vmatprep.subr.bf16.mxu0 0
        %5075 = vmatpush1.bf16.msra.mxu0 0
        %5076 = vmatprep.subr.bf16.mxu0 0
        %5077 = vmatpush1.bf16.msra.mxu0 0
        %5078 = vmatprep.subr.bf16.mxu0 0
        %5079 = vmatpush1.bf16.msra.mxu0 0
        %5080 = vmatprep.subr.bf16.mxu0 0
        %5081 = vmatpush1.bf16.msra.mxu0 0
        %5082 = vmatprep.subr.bf16.mxu0 0
        %5083 = vmatpush1.bf16.msra.mxu0 0
        %5084 = vmatprep.subr.bf16.mxu0 0
        %5085 = vmatpush1.bf16.msra.mxu0 0
        %5086 = vmatprep.subr.bf16.mxu0 0
        %5087 = vmatpush1.bf16.msra.mxu0 0
        %5088 = vmatprep.subr.bf16.mxu0 0
        %5089 = vmatpush1.bf16.msra.mxu0 0
        %5090 = vmatprep.subr.bf16.mxu0 0
        %5091 = vmatpush1.bf16.msra.mxu0 0
        %5092 = vmatprep.subr.bf16.mxu0 0
        %5093 = vmatpush1.bf16.msra.mxu0 0
        %5094 = vmatprep.subr.bf16.mxu0 0
        %5095 = vmatpush1.bf16.msra.mxu0 0
        %5096 = vmatprep.subr.bf16.mxu0 0
        %5097 = vmatpush1.bf16.msra.mxu0 0
        %5098 = vmatprep.mubr.bf16.mxu0 0
        %5099 = vmatmul.mubr.bf16.gmra.mrb[0].mxu0 %v1340
        %v5100 = vpop.f32.mrb[0].mxu0
        %v5101 = vadd.f32 0.0, %v5100
        %v5102 = vpop.f32.mrb[0].mxu0
        %v5103 = vadd.f32 0.0, %v5102
        %v5104 = vpop.f32.mrb[0].mxu0
        %v5105 = vadd.f32 0.0, %v5104
        %v5106 = vpop.f32.mrb[0].mxu0
        %v5107 = vadd.f32 0.0, %v5106
        %5108 = vdwg.mxu0
        %5109 = vmatprep.subr.bf16.mxu0 %v5064
        %5110 = vmatpush1.bf16.msra.mxu0 %v5061
        %5111 = vmatprep.subr.bf16.mxu0 0
        %5112 = vmatpush1.bf16.msra.mxu0 0
        %5113 = vmatprep.subr.bf16.mxu0 0
        %5114 = vmatpush1.bf16.msra.mxu0 0
        %5115 = vmatprep.subr.bf16.mxu0 0
        %5116 = vmatpush1.bf16.msra.mxu0 0
        %5117 = vmatprep.subr.bf16.mxu0 0
        %5118 = vmatpush1.bf16.msra.mxu0 0
        %5119 = vmatprep.subr.bf16.mxu0 0
        %5120 = vmatpush1.bf16.msra.mxu0 0
        %5121 = vmatprep.subr.bf16.mxu0 0
        %5122 = vmatpush1.bf16.msra.mxu0 0
        %5123 = vmatprep.subr.bf16.mxu0 0
        %5124 = vmatpush1.bf16.msra.mxu0 0
        %5125 = vmatprep.subr.bf16.mxu0 0
        %5126 = vmatpush1.bf16.msra.mxu0 0
        %5127 = vmatprep.subr.bf16.mxu0 0
        %5128 = vmatpush1.bf16.msra.mxu0 0
        %5129 = vmatprep.subr.bf16.mxu0 0
        %5130 = vmatpush1.bf16.msra.mxu0 0
        %5131 = vmatprep.subr.bf16.mxu0 0
        %5132 = vmatpush1.bf16.msra.mxu0 0
        %5133 = vmatprep.subr.bf16.mxu0 0
        %5134 = vmatpush1.bf16.msra.mxu0 0
        %5135 = vmatprep.subr.bf16.mxu0 0
        %5136 = vmatpush1.bf16.msra.mxu0 0
        %5137 = vmatprep.subr.bf16.mxu0 0
        %5138 = vmatpush1.bf16.msra.mxu0 0
        %5139 = vmatprep.subr.bf16.mxu0 0
        %5140 = vmatpush1.bf16.msra.mxu0 0
        %5141 = vmatprep.mubr.bf16.mxu0 0
        %5142 = vmatmul.mubr.bf16.gmra.mrb[0].mxu0 %v1340
        %v5143 = vpop.f32.mrb[0].mxu0
        %v5144 = vadd.f32 0.0, %v5143
        %v5145 = vpop.f32.mrb[0].mxu0
        %v5146 = vadd.f32 0.0, %v5145
        %v5147 = vpop.f32.mrb[0].mxu0
        %v5148 = vadd.f32 0.0, %v5147
        %v5149 = vpop.f32.mrb[0].mxu0
        %v5150 = vadd.f32 0.0, %v5149
        %5151 = vdwg.mxu0
        %v5156 = vunpack.c.l.b16 %v5031
        %v5157 = vunpack.c.h.b16 %v5031
        %v5158 = vunpack.c.l.b16 %v5032
        %v5159 = vunpack.c.h.b16 %v5032
        %v5160 = vunpack.c.l.b16 %v5033
        %v5161 = vunpack.c.h.b16 %v5033
        %v5162 = vunpack.c.l.b16 %v5034
        %v5163 = vunpack.c.h.b16 %v5034
        %v5164 = vpack.c.b16 %v5160, %v5156
        %v5165 = vpack.c.b16 %v5161, %v5157
        %v5166 = vpack.c.b16 %v5162, %v5158
        %v5167 = vpack.c.b16 %v5163, %v5159
        %v5169 = vand.u32 %v5164, %v1472
        %v5172 = vand.u32 %v5165, %v1472
        %v5175 = vand.u32 %v5166, %v1472
        %v5178 = vand.u32 %v5167, %v1472
        %5180 = vmatprep.subr.bf16.mxu0 %v5172
        %5181 = vmatpush1.bf16.msra.mxu0 %v5169
        %5182 = vmatprep.subr.bf16.mxu0 0
        %5183 = vmatpush1.bf16.msra.mxu0 0
        %5184 = vmatprep.subr.bf16.mxu0 0
        %5185 = vmatpush1.bf16.msra.mxu0 0
        %5186 = vmatprep.subr.bf16.mxu0 0
        %5187 = vmatpush1.bf16.msra.mxu0 0
        %5188 = vmatprep.subr.bf16.mxu0 0
        %5189 = vmatpush1.bf16.msra.mxu0 0
        %5190 = vmatprep.subr.bf16.mxu0 0
        %5191 = vmatpush1.bf16.msra.mxu0 0
        %5192 = vmatprep.subr.bf16.mxu0 0
        %5193 = vmatpush1.bf16.msra.mxu0 0
        %5194 = vmatprep.subr.bf16.mxu0 0
        %5195 = vmatpush1.bf16.msra.mxu0 0
        %5196 = vmatprep.subr.bf16.mxu0 0
        %5197 = vmatpush1.bf16.msra.mxu0 0
        %5198 = vmatprep.subr.bf16.mxu0 0
        %5199 = vmatpush1.bf16.msra.mxu0 0
        %5200 = vmatprep.subr.bf16.mxu0 0
        %5201 = vmatpush1.bf16.msra.mxu0 0
        %5202 = vmatprep.subr.bf16.mxu0 0
        %5203 = vmatpush1.bf16.msra.mxu0 0
        %5204 = vmatprep.subr.bf16.mxu0 0
        %5205 = vmatpush1.bf16.msra.mxu0 0
        %5206 = vmatprep.subr.bf16.mxu0 0
        %5207 = vmatpush1.bf16.msra.mxu0 0
        %5208 = vmatprep.subr.bf16.mxu0 0
        %5209 = vmatpush1.bf16.msra.mxu0 0
        %5210 = vmatprep.subr.bf16.mxu0 0
        %5211 = vmatpush1.bf16.msra.mxu0 0
        %5212 = vmatprep.mubr.bf16.mxu0 0
        %5213 = vmatmul.mubr.bf16.gmra.mrb[0].mxu0 %v1467
        %v5214 = vpop.f32.mrb[0].mxu0
        %v5215 = vadd.f32 %v5101, %v5214
        %v5216 = vpop.f32.mrb[0].mxu0
        %v5217 = vadd.f32 %v5103, %v5216
        %v5218 = vpop.f32.mrb[0].mxu0
        %v5219 = vadd.f32 %v5105, %v5218
        %v5220 = vpop.f32.mrb[0].mxu0
        %v5221 = vadd.f32 %v5107, %v5220
        %5222 = vdwg.mxu0
        %5223 = vmatprep.subr.bf16.mxu0 %v5178
        %5224 = vmatpush1.bf16.msra.mxu0 %v5175
        %5225 = vmatprep.subr.bf16.mxu0 0
        %5226 = vmatpush1.bf16.msra.mxu0 0
        %5227 = vmatprep.subr.bf16.mxu0 0
        %5228 = vmatpush1.bf16.msra.mxu0 0
        %5229 = vmatprep.subr.bf16.mxu0 0
        %5230 = vmatpush1.bf16.msra.mxu0 0
        %5231 = vmatprep.subr.bf16.mxu0 0
        %5232 = vmatpush1.bf16.msra.mxu0 0
        %5233 = vmatprep.subr.bf16.mxu0 0
        %5234 = vmatpush1.bf16.msra.mxu0 0
        %5235 = vmatprep.subr.bf16.mxu0 0
        %5236 = vmatpush1.bf16.msra.mxu0 0
        %5237 = vmatprep.subr.bf16.mxu0 0
        %5238 = vmatpush1.bf16.msra.mxu0 0
        %5239 = vmatprep.subr.bf16.mxu0 0
        %5240 = vmatpush1.bf16.msra.mxu0 0
        %5241 = vmatprep.subr.bf16.mxu0 0
        %5242 = vmatpush1.bf16.msra.mxu0 0
        %5243 = vmatprep.subr.bf16.mxu0 0
        %5244 = vmatpush1.bf16.msra.mxu0 0
        %5245 = vmatprep.subr.bf16.mxu0 0
        %5246 = vmatpush1.bf16.msra.mxu0 0
        %5247 = vmatprep.subr.bf16.mxu0 0
        %5248 = vmatpush1.bf16.msra.mxu0 0
        %5249 = vmatprep.subr.bf16.mxu0 0
        %5250 = vmatpush1.bf16.msra.mxu0 0
        %5251 = vmatprep.subr.bf16.mxu0 0
        %5252 = vmatpush1.bf16.msra.mxu0 0
        %5253 = vmatprep.subr.bf16.mxu0 0
        %5254 = vmatpush1.bf16.msra.mxu0 0
        %5255 = vmatprep.mubr.bf16.mxu0 0
        %5256 = vmatmul.mubr.bf16.gmra.mrb[0].mxu0 %v1467
        %v5257 = vpop.f32.mrb[0].mxu0
        %v5258 = vadd.f32 %v5144, %v5257
        %v5259 = vpop.f32.mrb[0].mxu0
        %v5260 = vadd.f32 %v5146, %v5259
        %v5261 = vpop.f32.mrb[0].mxu0
        %v5262 = vadd.f32 %v5148, %v5261
        %v5263 = vpop.f32.mrb[0].mxu0
        %v5264 = vadd.f32 %v5150, %v5263
        %5265 = vdwg.mxu0
        %v5266 = vmax.f32 %v5023, %v5215
        %v5267 = vmax.f32 %v5024, %v5217
        %v5268 = vmax.f32 %v5025, %v5258
        %v5269 = vmax.f32 %v5026, %v5260
        %v5270 = vmax.f32 %v5027, %v5219
        %v5271 = vmax.f32 %v5028, %v5221
        %v5272 = vmax.f32 %v5029, %v5262
        %v5273 = vmax.f32 %v5030, %v5264
        %v5274 = vmul.f32 %v5266, %v3289
        %v5275 = vmul.f32 %v5267, %v3289
        %v5276 = vmul.f32 %v5268, %v3289
        %v5277 = vmul.f32 %v5269, %v3289
        %v5278 = vmul.f32 %v5270, %v3294
        %v5279 = vmul.f32 %v5271, %v3294
        %v5280 = vmul.f32 %v5272, %v3294
        %v5281 = vmul.f32 %v5273, %v3294
        %v5282 = vadd.f32 %v5274, %v3307
        %v5283 = vadd.f32 %v5275, %v3307
        %v5284 = vadd.f32 %v5276, %v3307
        %v5285 = vadd.f32 %v5277, %v3307
        %v5286 = vadd.f32 %v5278, %v3312
        %v5287 = vadd.f32 %v5279, %v3312
        %v5288 = vadd.f32 %v5280, %v3312
        %v5289 = vadd.f32 %v5281, %v3312
        %v5290 = vmax.f32 %v5282, 0.0
        %v5291 = vmax.f32 %v5283, 0.0
        %v5292 = vmax.f32 %v5284, 0.0
        %v5293 = vmax.f32 %v5285, 0.0
        %v5294 = vmax.f32 %v5286, 0.0
        %v5295 = vmax.f32 %v5287, 0.0
        %v5296 = vmax.f32 %v5288, 0.0
        %v5297 = vmax.f32 %v5289, 0.0
        %5298 = vst [vmem:[%s1285 + $0x20] sm:$0xff] %v5290
        %5299 = vst [vmem:[%s1285 + $0x28] sm:$0xff] %v5291
        %5300 = vst [vmem:[%s1285 + $0x30] sm:$0xff] %v5292
        %5301 = vst [vmem:[%s1285 + $0x38] sm:$0xff] %v5293
        %5302 = vst [vmem:[%s1285 + $0x60] sm:$0xff] %v5294
        %5303 = vst [vmem:[%s1285 + $0x68] sm:$0xff] %v5295
        %5304 = vst [vmem:[%s1285 + $0x70] sm:$0xff] %v5296
        %5305 = vst [vmem:[%s1285 + $0x78] sm:$0xff] %v5297
        %s5306 = sand.u32 %s182, 1
        %s5307 = scalar_lea.sflag [#allocation5], %s5306
        %s5308 = sand.u32 %s182, 1
        %s5309 = smul.addr %s5308, 128
        %s5310 = scalar_lea.vmem [#allocation4], %s5309
        // Predicated region
        $region177: #{conv_forward.1} parent=167 // pred_check
          %p5311 = pneg %p192
        $region178: #{conv_forward.1} parent=167 // pred_check_branch
          %5313 = sbr.rel (%p5311) target = $region180
        $region179: #{conv_forward.1} parent=167 // pred_region
          %s5314 = smul.u32 8, %s25
          %s5315 = ssub.s32 10, %s5314
          %p5316 = scmp.lt.s32.totalorder %s5315, 8
          %s5317 = scalar_select %p5316, %s5315, 8
          %s5318 = smul.u32 256, %s5317
          %s5320 = ssub.s32 2048, %s5318
          %5321 = vsyncadd %s5307, %s5320
          %p5322 = scmp.ne.s32.totalorder 0, %s5318
          %s5323 = smul.addr %s24, 20
          %s5324 = sadd.s32 %s5314, %s5323
          %s5325 = smul.addr %s5324, 128
          %s5326 = scalar_lea.hbm %s6, %s5325
          %s5327 = smul.u32 %s5317, 8
          %s5328 = smul.u32 %s5327, 2
          %s5329 = sshll.u32 %s5310, 4
          %s5330 = int_to_ptr.vmem [resolvable:$true] %s5329
          %s5331 = sshll.u32 %s5328, 4
          %5335 = dma.vmem_to_hbm [thread:$0]  (%p5322), %s5330, %s5331, %s5326, %s5307, 1024, 1280, %s5327
        $region180: #{conv_forward.1} parent=167 // pred_fallthru
          _
      $region168: #{conv_forward.1} parent=5 // pred_fallthru
        _
      %p5336 = scmp.le.s32.totalorder 2, %s15
      // Predicated region
      $region181: #{conv_forward.1} parent=5 // pred_check
        %p5337 = pneg %p5336
      $region182: #{conv_forward.1} parent=5 // pred_check_branch
        %5339 = sbr.rel (%p5337) target = $region184
      $region183: #{conv_forward.1} parent=5 // pred_region
        %s5340 = ssub.s32 %s15, 2
        // Predicated region
        $region185: #{conv_forward.1} parent=183 // pred_check
          %p5341 = pneg %p198
        $region186: #{conv_forward.1} parent=183 // pred_check_branch
          %5343 = sbr.rel (%p5341) target = $region188
        $region187: #{conv_forward.1} parent=183 // pred_region
          %s5344 = sand.u32 %s183, 1
          %s5345 = scalar_lea.sflag [#allocation5], %s5344
          %s5346 = sand.u32 %s183, 1
          %s5347 = smul.addr %s5346, 128
          %s5348 = scalar_lea.vmem [#allocation4], %s5347
          %5349 = dma.done %s5345, 2048
        $region188: #{conv_forward.1} parent=183 // pred_fallthru
          _
      $region184: #{conv_forward.1} parent=5 // pred_fallthru
        _
    $region6: #{conv_forward.1} parent=1 // loop_footer
      %s19 = sadd.s32 1, %s15
    $region7: #{conv_forward.1} parent=1 // loop_footer_branch
      %14 = sbr.rel target = $region3
    $region8: #{conv_forward.1} parent=1 // loop_exit
      _
    %5350 = vsyncpa [#allocation5], 1
    %s5351 = scalar_lea.sflag [#allocation5], 1
    %5352 = vsyncpa %s5351, 1

</llo_original>
